<compile_context>
chip_gen: v7x
topology: tpu7x:2x2x1
jax: 0.10.0
libtpu: 0.0.40
codegen_flags: <defaults>
</compile_context>

<pallas_src>
import math
import numpy as np

import jax
import jax.numpy as jnp
from jax import lax
from jax.experimental import pallas as pl
from jax.experimental.pallas import tpu as pltpu

LN_EPS = 1e-5
REVIN_EPS = 1e-5
_INV_SQRT2 = 1.0 / math.sqrt(2.0)


def _round_up(x, m):
    return ((x + m - 1) // m) * m


def _gelu_exact(x):
    # torch.nn.GELU() default (erf-based, approximate='none')
    # TODO(synk): tanh-approx GELU would move the transcendental to the EUP slot.
    return 0.5 * x * (1.0 + lax.erf(x * _INV_SQRT2))


def _sinusoidal_pe(num_pos, d_model):
    pe = np.zeros((num_pos, d_model), np.float32)
    position = np.arange(num_pos, dtype=np.float32)[:, None]
    div_term = np.exp(np.arange(0, d_model, 2, dtype=np.float32)
                      * -(math.log(10000.0) / d_model))
    pe[:, 0::2] = np.sin(position * div_term)
    pe[:, 1::2] = np.cos(position * div_term)
    return pe


# ----------------------------------------------------------------------------
# Fused forward kernel
# ----------------------------------------------------------------------------
def run_fused_forward(x2d, rw2d, rb2d, pos, wemb, gamma, beta,
                      w1, b1, w2, b2, wh, bh,
                      *, K, T, L, stride, PN, D, S, Ppad, TBC):
    """grid = (row_tiles, K).  Rows are flattened (batch, channel) pairs.

    k == 0     : RevIN norm + replication-pad + unfold -> patches / pos / stats scratch
    every k    : value embedding + LayerNorm + TemporalMixing, accumulate into scratch
    k == K - 1 : Flatten_Head linear + RevIN denorm, single lane-dense store
    """
    BCp = x2d.shape[0]
    nI = BCp // TBC
    dsz = D // S
    PNT = PN * TBC          # mixer rows per grid step, ordered (patch_idx, row)

    def kernel(x_ref, rw_ref, rb_ref, pos_ref, wemb_ref, ln_g_ref, ln_b_ref,
               w1_ref, b1_ref, w2_ref, b2_ref, wh_ref, bh_ref,
               out_ref,
               patch_ref, posb_ref, mean_ref, std_ref, acc_ref):
        k = pl.program_id(1)

        # ---------------- prologue: once per row-tile (first scale) ----------------
        @pl.when(k == 0)
        def _prologue():
            # RevIN 'norm': stats over time, per (batch, channel) row.
            x = x_ref[...]                                           # (TBC, T)
            mean = jnp.mean(x, axis=-1, keepdims=True)
            var = jnp.mean((x - mean) ** 2, axis=-1, keepdims=True)  # unbiased=False
            std = jnp.sqrt(var + REVIN_EPS)
            mean_ref[...] = mean
            std_ref[...] = std
            xn = (x - mean) / std * rw_ref[...] + rb_ref[...]

            # ReplicationPad1d((0, stride)) + unfold, done in-kernel.
            last = xn[:, T - 1:T]
            xe = jnp.concatenate([xn] + [last] * stride, axis=-1)    # (TBC, T+stride)

            pos_all = pos_ref[...]                                   # (PN, D)
            for pn in range(PN):                                     # static unroll
                patch_ref[pl.ds(pn * TBC, TBC), :] = xe[:, pn * stride:pn * stride + L]
                posb_ref[pl.ds(pn * TBC, TBC), :] = jnp.broadcast_to(
                    pos_all[pn:pn + 1, :], (TBC, D))
            acc_ref[...] = jnp.zeros_like(acc_ref)

        # ------------- per-scale body: embedding + LayerNorm + TemporalMixing -------------
        # PatchEmbedding: bias-free value embedding + positional embedding.
        xemb = jnp.dot(patch_ref[...], wemb_ref[0],
                       preferred_element_type=jnp.float32) + posb_ref[...]   # (PNT, D)

        # LayerNorm over d_model.
        mu = jnp.mean(xemb, axis=-1, keepdims=True)
        var = jnp.mean((xemb - mu) ** 2, axis=-1, keepdims=True)
        y = (xemb - mu) * lax.rsqrt(var + LN_EPS) * ln_g_ref[0] + ln_b_ref[0]

        # TemporalMixing: per-group MLP on contiguous d_model slices (features permuted
        # at build time so g::S becomes [g*dsz : (g+1)*dsz]).  Compact weights -> real-size
        # matmuls (S x fewer FLOPs than the old zero-padded (D,D) form).
        parts = []
        for g in range(S):                                           # static unroll
            yg = y[:, g * dsz:(g + 1) * dsz]                         # (PNT, dsz)
            h = jnp.dot(yg, w1_ref[0, g],
                        preferred_element_type=jnp.float32) + b1_ref[0, g]
            h = _gelu_exact(h)
            parts.append(jnp.dot(h, w2_ref[0, g],
                                 preferred_element_type=jnp.float32))
        mixed = jnp.concatenate(parts, axis=-1) + b2_ref[0]          # (PNT, D)

        # period_weight is pre-folded into w2/b2 -> plain accumulation over scales.
        acc_ref[...] += mixed

        # ---------------- epilogue: once per row-tile (last scale) ----------------
        @pl.when(k == K - 1)
        def _epilogue():
            # Flatten_Head linear: out = sum_pn combined[:, pn, :] @ W_head[pn] + b_head.
            out_ref[...] = jnp.zeros((TBC, Ppad), jnp.float32) + bh_ref[...]
            for pn in range(PN):                                     # static unroll
                out_ref[...] += jnp.dot(acc_ref[pl.ds(pn * TBC, TBC), :], wh_ref[pn],
                                        preferred_element_type=jnp.float32)
            # RevIN 'denorm'.
            o = (out_ref[...] - rb_ref[...]) / (rw_ref[...] + REVIN_EPS * REVIN_EPS)
            out_ref[...] = o * std_ref[...] + mean_ref[...]

    grid_spec = pltpu.PrefetchScalarGridSpec(
        num_scalar_prefetch=0,
        grid=(nI, K),
        in_specs=[
            pl.BlockSpec((TBC, T), lambda i, k: (i, 0)),              # x rows
            pl.BlockSpec((TBC, 1), lambda i, k: (i, 0)),              # RevIN weight / row
            pl.BlockSpec((TBC, 1), lambda i, k: (i, 0)),              # RevIN bias / row
            pl.BlockSpec((PN, D), lambda i, k: (0, 0)),               # positional emb
            pl.BlockSpec((1, L, D), lambda i, k: (k, 0, 0)),          # value-embedding W
            pl.BlockSpec((1, 1, D), lambda i, k: (k, 0, 0)),          # LN gamma
            pl.BlockSpec((1, 1, D), lambda i, k: (k, 0, 0)),          # LN beta
            pl.BlockSpec((1, S, dsz, D), lambda i, k: (k, 0, 0, 0)),  # fc1 W (compact)
            pl.BlockSpec((1, S, 1, D), lambda i, k: (k, 0, 0, 0)),    # fc1 b
            pl.BlockSpec((1, S, D, dsz), lambda i, k: (k, 0, 0, 0)),  # fc2 W (pw-scaled)
            pl.BlockSpec((1, 1, D), lambda i, k: (k, 0, 0)),          # fc2 b (pw-scaled)
            pl.BlockSpec((PN, D, Ppad), lambda i, k: (0, 0, 0)),      # head W (per-patch)
            pl.BlockSpec((1, Ppad), lambda i, k: (0, 0)),             # head b (lane-padded)
        ],
        out_specs=pl.BlockSpec((TBC, Ppad), lambda i, k: (i, 0)),
        scratch_shapes=[
            pltpu.VMEM((PNT, L), jnp.float32),    # patches (persist across the K scales)
            pltpu.VMEM((PNT, D), jnp.float32),    # broadcast positional embedding
            pltpu.VMEM((TBC, 1), jnp.float32),    # RevIN mean
            pltpu.VMEM((TBC, 1), jnp.float32),    # RevIN std
            pltpu.VMEM((PNT, D), jnp.float32),    # scale-mixer accumulator
        ],
    )

    return pl.pallas_call(
        kernel,
        grid_spec=grid_spec,
        out_shape=jax.ShapeDtypeStruct((BCp, Ppad), jnp.float32),
        compiler_params=pltpu.CompilerParams(
            dimension_semantics=("parallel", "arbitrary")),
    )(x2d, rw2d, rb2d, pos, wemb, gamma, beta, w1, b1, w2, b2, wh, bh)


# ----------------------------------------------------------------------------
# Parameter construction (deterministic, matches PyTorch __init__ shapes)
# ----------------------------------------------------------------------------
def build_model(cfg, rng):
    T, C, D = cfg["seq_len"], cfg["enc_in"], cfg["d_model"]
    K, S = cfg["fft_k"], cfg["sampling"]
    pred = cfg["pred_len"]
    assert S in [1, 2, 3, 4, 6, 8, 12] and D % S == 0
    dsz = D // S

    # ---- FFT_for_Period / select_patch_len (init-time, host-side numpy) ----
    key_probe, key_w = jax.random.split(rng)
    t = np.arange(T, dtype=np.float32)
    base = np.sin(2 * np.pi * 4 * t / T) + 0.8 * np.sin(2 * np.pi * 5 * t / T)
    probe = base[None, :, None] + 0.01 * np.asarray(
        jax.random.normal(key_probe, (1, T, C), jnp.float32))
    xf = np.fft.rfft(probe, axis=1)
    freq_list = np.abs(xf).mean(0).mean(-1)
    freq_list[0] = 0.0
    top_list = np.argsort(-freq_list)[:K]                     # torch.topk indices
    period_list = T // top_list
    period_weight = np.abs(xf).mean(-1)[:, top_list].astype(np.float32).reshape(K)

    cand = [2, 4, 6, 8, 12, 16, 20, 24]
    patch_lens = [min(cand, key=lambda v: abs(v - p)) for p in period_list]
    assert len(set(patch_lens)) == 1, \
        "torch.stack in ScaleMixerBlock requires identical patch shapes across scales"
    L = patch_lens[0]
    stride = L // 2
    PN = int((T - L) / stride + 2)
    nf = D * PN
    Ppad = _round_up(pred, 128)       # lane-dense head output (zero-padded columns)

    # feature permutation: permuted index g*dsz + j  <->  original index j*S + g
    perm = np.array([j * S + g for g in range(S) for j in range(dsz)], np.int64)

    # ---- weights (torch nn.Linear-style uniform init, deterministic) ----
    n_keys = K * (1 + 4 * S) + 2
    keys = jax.random.split(key_w, n_keys)
    kit = iter(range(n_keys))

    def u(shape, fan_in):
        bound = 1.0 / math.sqrt(fan_in)
        return np.asarray(jax.random.uniform(keys[next(kit)], shape, jnp.float32,
                                             -bound, bound))

    # PatchEmbedding value embedding (bias-free); feature axis stored permuted.
    wemb = np.stack([u((L, D), L)[:, perm] for _ in range(K)])        # (K, L, D)
    # LayerNorm affine (init 1/0; a permutation of these is itself).
    gamma = np.ones((K, 1, D), np.float32)
    beta = np.zeros((K, 1, D), np.float32)
    pos = _sinusoidal_pe(PN, D)[:, perm].astype(np.float32)           # (PN, D)

    # TemporalMixing MLPBlock weights, compact form (no zero padding); fc2/bias carry the
    # per-scale period weight so the scale sum becomes a plain accumulation.
    w1 = np.zeros((K, S, dsz, D), np.float32)
    b1 = np.zeros((K, S, 1, D), np.float32)
    w2 = np.zeros((K, S, D, dsz), np.float32)
    b2 = np.zeros((K, 1, D), np.float32)
    for i in range(K):
        for g in range(S):
            w1[i, g] = u((dsz, D), dsz)                 # fc1: Linear(D//S -> D), transposed
            b1[i, g, 0] = u((D,), dsz)
            w2[i, g] = u((D, dsz), D)                   # fc2: Linear(D -> D//S), transposed
            b2[i, 0, g * dsz:(g + 1) * dsz] = u((dsz,), D)
        w2[i] *= period_weight[i]                       # fold (stack * weight).sum(0)
        b2[i] *= period_weight[i]

    # Flatten_Head linear.  Canonical torch flatten order is rows (d_orig*PN + pn); reorder
    # to (pn, d_perm) slabs so the kernel consumes the mixer output without any transpose.
    wh_canon = u((nf, pred), nf)
    bh = u((1, pred), nf)
    wh3 = wh_canon.reshape(D, PN, pred)[perm]           # (D_perm, PN, pred)
    wh = np.ascontiguousarray(np.transpose(wh3, (1, 0, 2)))           # (PN, D_perm, pred)
    wh_pad = np.zeros((PN, D, Ppad), np.float32)
    wh_pad[:, :, :pred] = wh
    bh_pad = np.zeros((1, Ppad), np.float32)
    bh_pad[:, :pred] = bh

    params = dict(
        pos=jnp.asarray(pos),
        wemb=jnp.asarray(wemb), gamma=jnp.asarray(gamma), beta=jnp.asarray(beta),
        w1=jnp.asarray(w1), b1=jnp.asarray(b1), w2=jnp.asarray(w2), b2=jnp.asarray(b2),
        w_head=jnp.asarray(wh_pad), b_head=jnp.asarray(bh_pad),
        revin_w=np.ones((C,), np.float32),              # RevIN affine weight / bias
        revin_b=np.zeros((C,), np.float32),
    )
    dims = dict(K=K, L=L, stride=stride, PN=PN, D=D, S=S, Ppad=Ppad,
                pred_len=pred, enc_in=C, seq_len=T)
    return params, dims


# ----------------------------------------------------------------------------
# Forward pass (Model.forecast)
# ----------------------------------------------------------------------------
def model_forward(x, params, dims):
    """x: (B, seq_len, enc_in)  ->  (B, pred_len, enc_in)"""
    B, T, C = x.shape
    K, L, stride, PN, D, S = (dims["K"], dims["L"], dims["stride"],
                              dims["PN"], dims["D"], dims["S"])
    pred, Ppad = dims["pred_len"], dims["Ppad"]
    x = x.astype(jnp.float32)

    BC = B * C
    MAX_TBC = 64                                  # (b,c) rows / tile -> PN*TBC mixer rows
    TBC = min(_round_up(BC, 8), MAX_TBC)
    BCp = _round_up(BC, TBC)

    # channel-major rows (time on the lane axis); pad rows to the tile multiple
    x2d = jnp.transpose(x, (0, 2, 1)).reshape(BC, T)
    if BCp != BC:
        x2d = jnp.pad(x2d, ((0, BCp - BC), (0, 0)))

    # per-row RevIN affine params (tiny, built host-side)
    rw = np.ones((BCp, 1), np.float32)
    rb = np.zeros((BCp, 1), np.float32)
    rw[:BC, 0] = np.tile(params["revin_w"], B)
    rb[:BC, 0] = np.tile(params["revin_b"], B)

    out = run_fused_forward(
        x2d, jnp.asarray(rw), jnp.asarray(rb), params["pos"],
        params["wemb"], params["gamma"], params["beta"],
        params["w1"], params["b1"], params["w2"], params["b2"],
        params["w_head"], params["b_head"],
        K=K, T=T, L=L, stride=stride, PN=PN, D=D, S=S, Ppad=Ppad, TBC=TBC)

    out = out[:BC, :pred].reshape(B, C, pred)
    return jnp.transpose(out, (0, 2, 1))


# ----------------------------------------------------------------------------
if __name__ == "__main__":
    cfg = dict(seq_len=40, pred_len=16, enc_in=4, d_model=32,
               fft_k=2, e_layers=2, sampling=4, dropout=0.0)

    root = jax.random.PRNGKey(0)
    k_model, k_data = jax.random.split(root)

    params, dims = build_model(cfg, k_model)
    x_input = jax.random.normal(k_data, (2, cfg["seq_len"], cfg["enc_in"]), jnp.float32)

    y = model_forward(x_input, params, dims)
    y = jax.block_until_ready(y)

    assert y.shape == (2, cfg["pred_len"], cfg["enc_in"]), y.shape
    assert bool(jnp.all(jnp.isfinite(y)))
    print("KERNEL_OK")
</pallas_src>

<mosaic_0001>
module attributes {stable_mosaic.version = 11 : i64} {
  func.func @kernel(%arg0: i32, %arg1: i32, %arg2: memref<8x40xf32, #tpu.memory_space<vmem>>, %arg3: memref<8x1xf32, #tpu.memory_space<vmem>>, %arg4: memref<8x1xf32, #tpu.memory_space<vmem>>, %arg5: memref<10x32xf32, #tpu.memory_space<vmem>>, %arg6: memref<1x8x32xf32, #tpu.memory_space<vmem>>, %arg7: memref<1x1x32xf32, #tpu.memory_space<vmem>>, %arg8: memref<1x1x32xf32, #tpu.memory_space<vmem>>, %arg9: memref<1x4x8x32xf32, #tpu.memory_space<vmem>>, %arg10: memref<1x4x1x32xf32, #tpu.memory_space<vmem>>, %arg11: memref<1x4x32x8xf32, #tpu.memory_space<vmem>>, %arg12: memref<1x1x32xf32, #tpu.memory_space<vmem>>, %arg13: memref<10x32x128xf32, #tpu.memory_space<vmem>>, %arg14: memref<1x128xf32, #tpu.memory_space<vmem>>, %arg15: memref<8x128xf32, #tpu.memory_space<vmem>>, %arg16: memref<80x8xf32, #tpu.memory_space<vmem>>, %arg17: memref<80x32xf32, #tpu.memory_space<vmem>>, %arg18: memref<8x1xf32, #tpu.memory_space<vmem>>, %arg19: memref<8x1xf32, #tpu.memory_space<vmem>>, %arg20: memref<80x32xf32, #tpu.memory_space<vmem>>) attributes {dimension_semantics = [#tpu.dimension_semantics<parallel>, #tpu.dimension_semantics<arbitrary>], iteration_bounds = array<i64: 1, 2>, scalar_prefetch = 0 : i64, scratch_operands = 5 : i64, tpu.core_type = #tpu.core_type<tc>, window_params = [{transform_indices = @transform_0, window_bounds = array<i64: 8, 40>}, {transform_indices = @transform_1, window_bounds = array<i64: 8, 1>}, {transform_indices = @transform_2, window_bounds = array<i64: 8, 1>}, {pipeline_mode = #tpu.pipeline_mode<synchronous>, transform_indices = @transform_3, window_bounds = array<i64: 10, 32>}, {transform_indices = @transform_4, window_bounds = array<i64: 1, 8, 32>}, {transform_indices = @transform_5, window_bounds = array<i64: 1, 1, 32>}, {transform_indices = @transform_6, window_bounds = array<i64: 1, 1, 32>}, {transform_indices = @transform_7, window_bounds = array<i64: 1, 4, 8, 32>}, {transform_indices = @transform_8, window_bounds = array<i64: 1, 4, 1, 32>}, {transform_indices = @transform_9, window_bounds = array<i64: 1, 4, 32, 8>}, {transform_indices = @transform_10, window_bounds = array<i64: 1, 1, 32>}, {pipeline_mode = #tpu.pipeline_mode<synchronous>, transform_indices = @transform_11, window_bounds = array<i64: 10, 32, 128>}, {pipeline_mode = #tpu.pipeline_mode<synchronous>, transform_indices = @transform_12, window_bounds = array<i64: 1, 128>}, {transform_indices = @transform_13, window_bounds = array<i64: 8, 128>}]} {
    %c0_i32 = arith.constant 0 : i32
    %0 = arith.cmpi eq, %arg1, %c0_i32 : i32
    %1 = arith.extui %0 : i1 to i32
    %c0_i32_0 = arith.constant 0 : i32
    %2 = arith.cmpi ne, %1, %c0_i32_0 : i32
    scf.if %2 {
      %c0_91 = arith.constant 0 : index
      %c0_92 = arith.constant 0 : index
      %122 = vector.load %arg2[%c0_91, %c0_92] : memref<8x40xf32, #tpu.memory_space<vmem>>, vector<8x40xf32>
      %cst_93 = arith.constant dense<0.000000e+00> : vector<8xf32>
      %123 = vector.multi_reduction <add>, %122, %cst_93 [1] : vector<8x40xf32> to vector<8xf32>
      %124 = vector.shape_cast %123 : vector<8xf32> to vector<8x1xf32>
      %cst_94 = arith.constant 4.000000e+01 : f32
      %125 = vector.broadcast %cst_94 : f32 to vector<8x1xf32>
      %126 = arith.divf %124, %125 : vector<8x1xf32>
      %127 = vector.broadcast %126 : vector<8x1xf32> to vector<8x40xf32>
      %128 = arith.subf %122, %127 : vector<8x40xf32>
      %129 = arith.mulf %128, %128 : vector<8x40xf32>
      %cst_95 = arith.constant dense<0.000000e+00> : vector<8xf32>
      %130 = vector.multi_reduction <add>, %129, %cst_95 [1] : vector<8x40xf32> to vector<8xf32>
      %131 = vector.shape_cast %130 : vector<8xf32> to vector<8x1xf32>
      %cst_96 = arith.constant 4.000000e+01 : f32
      %132 = vector.broadcast %cst_96 : f32 to vector<8x1xf32>
      %133 = arith.divf %131, %132 : vector<8x1xf32>
      %cst_97 = arith.constant 9.99999974E-6 : f32
      %134 = vector.broadcast %cst_97 : f32 to vector<8x1xf32>
      %135 = arith.addf %133, %134 : vector<8x1xf32>
      %136 = math.sqrt %135 : vector<8x1xf32>
      %c0_98 = arith.constant 0 : index
      %c0_99 = arith.constant 0 : index
      %137 = vector.load %arg18[%c0_98, %c0_99] : memref<8x1xf32, #tpu.memory_space<vmem>>, vector<8x1xf32>
      tpu.vector_store %arg18[%c0_98, %c0_99], %126 {strides = array<i32>} : memref<8x1xf32, #tpu.memory_space<vmem>>, vector<8x1xf32>,
      %c0_100 = arith.constant 0 : index
      %c0_101 = arith.constant 0 : index
      %138 = vector.load %arg19[%c0_100, %c0_101] : memref<8x1xf32, #tpu.memory_space<vmem>>, vector<8x1xf32>
      tpu.vector_store %arg19[%c0_100, %c0_101], %136 {strides = array<i32>} : memref<8x1xf32, #tpu.memory_space<vmem>>, vector<8x1xf32>,
      %139 = vector.broadcast %126 : vector<8x1xf32> to vector<8x40xf32>
      %140 = arith.subf %122, %139 : vector<8x40xf32>
      %141 = vector.broadcast %136 : vector<8x1xf32> to vector<8x40xf32>
      %142 = arith.divf %140, %141 : vector<8x40xf32>
      %c0_102 = arith.constant 0 : index
      %c0_103 = arith.constant 0 : index
      %143 = vector.load %arg3[%c0_102, %c0_103] : memref<8x1xf32, #tpu.memory_space<vmem>>, vector<8x1xf32>
      %144 = vector.broadcast %143 : vector<8x1xf32> to vector<8x40xf32>
      %145 = arith.mulf %142, %144 : vector<8x40xf32>
      %c0_104 = arith.constant 0 : index
      %c0_105 = arith.constant 0 : index
      %146 = vector.load %arg4[%c0_104, %c0_105] : memref<8x1xf32, #tpu.memory_space<vmem>>, vector<8x1xf32>
      %147 = vector.broadcast %146 : vector<8x1xf32> to vector<8x40xf32>
      %148 = arith.addf %145, %147 : vector<8x40xf32>
      %149 = vector.extract_strided_slice %148 {offsets = [0, 39], sizes = [8, 1], strides = [1, 1]} : vector<8x40xf32> to vector<8x1xf32>
      %150 = tpu.concatenate %148, %149, %149, %149, %149 in 1 : vector<8x40xf32>, vector<8x1xf32>, vector<8x1xf32>, vector<8x1xf32>, vector<8x1xf32> -> vector<8x44xf32>
      %c0_106 = arith.constant 0 : index
      %c0_107 = arith.constant 0 : index
      %151 = vector.load %arg5[%c0_106, %c0_107] : memref<10x32xf32, #tpu.memory_space<vmem>>, vector<10x32xf32>
      %152 = vector.extract_strided_slice %150 {offsets = [0, 0], sizes = [8, 8], strides = [1, 1]} : vector<8x44xf32> to vector<8x8xf32>
      %c0_108 = arith.constant 0 : index
      %c0_109 = arith.constant 0 : index
      %153 = vector.load %arg16[%c0_108, %c0_109] : memref<80x8xf32, #tpu.memory_space<vmem>>, vector<8x8xf32>
      tpu.vector_store %arg16[%c0_108, %c0_109], %152 {strides = array<i32>} : memref<80x8xf32, #tpu.memory_space<vmem>>, vector<8x8xf32>,
      %154 = vector.extract_strided_slice %151 {offsets = [0, 0], sizes = [1, 32], strides = [1, 1]} : vector<10x32xf32> to vector<1x32xf32>
      %155 = vector.shape_cast %154 : vector<1x32xf32> to vector<1x32xf32>
      %156 = vector.broadcast %155 : vector<1x32xf32> to vector<8x32xf32>
      %c0_110 = arith.constant 0 : index
      %c0_111 = arith.constant 0 : index
      %157 = vector.load %arg17[%c0_110, %c0_111] : memref<80x32xf32, #tpu.memory_space<vmem>>, vector<8x32xf32>
      tpu.vector_store %arg17[%c0_110, %c0_111], %156 {strides = array<i32>} : memref<80x32xf32, #tpu.memory_space<vmem>>, vector<8x32xf32>,
      %158 = vector.extract_strided_slice %150 {offsets = [0, 4], sizes = [8, 8], strides = [1, 1]} : vector<8x44xf32> to vector<8x8xf32>
      %c8 = arith.constant 8 : index
      %c0_112 = arith.constant 0 : index
      %159 = vector.load %arg16[%c8, %c0_112] : memref<80x8xf32, #tpu.memory_space<vmem>>, vector<8x8xf32>
      tpu.vector_store %arg16[%c8, %c0_112], %158 {strides = array<i32>} : memref<80x8xf32, #tpu.memory_space<vmem>>, vector<8x8xf32>,
      %160 = vector.extract_strided_slice %151 {offsets = [1, 0], sizes = [1, 32], strides = [1, 1]} : vector<10x32xf32> to vector<1x32xf32>
      %161 = vector.shape_cast %160 : vector<1x32xf32> to vector<1x32xf32>
      %162 = vector.broadcast %161 : vector<1x32xf32> to vector<8x32xf32>
      %c8_113 = arith.constant 8 : index
      %c0_114 = arith.constant 0 : index
      %163 = vector.load %arg17[%c8_113, %c0_114] : memref<80x32xf32, #tpu.memory_space<vmem>>, vector<8x32xf32>
      tpu.vector_store %arg17[%c8_113, %c0_114], %162 {strides = array<i32>} : memref<80x32xf32, #tpu.memory_space<vmem>>, vector<8x32xf32>,
      %164 = vector.extract_strided_slice %150 {offsets = [0, 8], sizes = [8, 8], strides = [1, 1]} : vector<8x44xf32> to vector<8x8xf32>
      %c16 = arith.constant 16 : index
      %c0_115 = arith.constant 0 : index
      %165 = vector.load %arg16[%c16, %c0_115] : memref<80x8xf32, #tpu.memory_space<vmem>>, vector<8x8xf32>
      tpu.vector_store %arg16[%c16, %c0_115], %164 {strides = array<i32>} : memref<80x8xf32, #tpu.memory_space<vmem>>, vector<8x8xf32>,
      %166 = vector.extract_strided_slice %151 {offsets = [2, 0], sizes = [1, 32], strides = [1, 1]} : vector<10x32xf32> to vector<1x32xf32>
      %167 = vector.shape_cast %166 : vector<1x32xf32> to vector<1x32xf32>
      %168 = vector.broadcast %167 : vector<1x32xf32> to vector<8x32xf32>
      %c16_116 = arith.constant 16 : index
      %c0_117 = arith.constant 0 : index
      %169 = vector.load %arg17[%c16_116, %c0_117] : memref<80x32xf32, #tpu.memory_space<vmem>>, vector<8x32xf32>
      tpu.vector_store %arg17[%c16_116, %c0_117], %168 {strides = array<i32>} : memref<80x32xf32, #tpu.memory_space<vmem>>, vector<8x32xf32>,
      %170 = vector.extract_strided_slice %150 {offsets = [0, 12], sizes = [8, 8], strides = [1, 1]} : vector<8x44xf32> to vector<8x8xf32>
      %c24 = arith.constant 24 : index
      %c0_118 = arith.constant 0 : index
      %171 = vector.load %arg16[%c24, %c0_118] : memref<80x8xf32, #tpu.memory_space<vmem>>, vector<8x8xf32>
      tpu.vector_store %arg16[%c24, %c0_118], %170 {strides = array<i32>} : memref<80x8xf32, #tpu.memory_space<vmem>>, vector<8x8xf32>,
      %172 = vector.extract_strided_slice %151 {offsets = [3, 0], sizes = [1, 32], strides = [1, 1]} : vector<10x32xf32> to vector<1x32xf32>
      %173 = vector.shape_cast %172 : vector<1x32xf32> to vector<1x32xf32>
      %174 = vector.broadcast %173 : vector<1x32xf32> to vector<8x32xf32>
      %c24_119 = arith.constant 24 : index
      %c0_120 = arith.constant 0 : index
      %175 = vector.load %arg17[%c24_119, %c0_120] : memref<80x32xf32, #tpu.memory_space<vmem>>, vector<8x32xf32>
      tpu.vector_store %arg17[%c24_119, %c0_120], %174 {strides = array<i32>} : memref<80x32xf32, #tpu.memory_space<vmem>>, vector<8x32xf32>,
      %176 = vector.extract_strided_slice %150 {offsets = [0, 16], sizes = [8, 8], strides = [1, 1]} : vector<8x44xf32> to vector<8x8xf32>
      %c32 = arith.constant 32 : index
      %c0_121 = arith.constant 0 : index
      %177 = vector.load %arg16[%c32, %c0_121] : memref<80x8xf32, #tpu.memory_space<vmem>>, vector<8x8xf32>
      tpu.vector_store %arg16[%c32, %c0_121], %176 {strides = array<i32>} : memref<80x8xf32, #tpu.memory_space<vmem>>, vector<8x8xf32>,
      %178 = vector.extract_strided_slice %151 {offsets = [4, 0], sizes = [1, 32], strides = [1, 1]} : vector<10x32xf32> to vector<1x32xf32>
      %179 = vector.shape_cast %178 : vector<1x32xf32> to vector<1x32xf32>
      %180 = vector.broadcast %179 : vector<1x32xf32> to vector<8x32xf32>
      %c32_122 = arith.constant 32 : index
      %c0_123 = arith.constant 0 : index
      %181 = vector.load %arg17[%c32_122, %c0_123] : memref<80x32xf32, #tpu.memory_space<vmem>>, vector<8x32xf32>
      tpu.vector_store %arg17[%c32_122, %c0_123], %180 {strides = array<i32>} : memref<80x32xf32, #tpu.memory_space<vmem>>, vector<8x32xf32>,
      %182 = vector.extract_strided_slice %150 {offsets = [0, 20], sizes = [8, 8], strides = [1, 1]} : vector<8x44xf32> to vector<8x8xf32>
      %c40 = arith.constant 40 : index
      %c0_124 = arith.constant 0 : index
      %183 = vector.load %arg16[%c40, %c0_124] : memref<80x8xf32, #tpu.memory_space<vmem>>, vector<8x8xf32>
      tpu.vector_store %arg16[%c40, %c0_124], %182 {strides = array<i32>} : memref<80x8xf32, #tpu.memory_space<vmem>>, vector<8x8xf32>,
      %184 = vector.extract_strided_slice %151 {offsets = [5, 0], sizes = [1, 32], strides = [1, 1]} : vector<10x32xf32> to vector<1x32xf32>
      %185 = vector.shape_cast %184 : vector<1x32xf32> to vector<1x32xf32>
      %186 = vector.broadcast %185 : vector<1x32xf32> to vector<8x32xf32>
      %c40_125 = arith.constant 40 : index
      %c0_126 = arith.constant 0 : index
      %187 = vector.load %arg17[%c40_125, %c0_126] : memref<80x32xf32, #tpu.memory_space<vmem>>, vector<8x32xf32>
      tpu.vector_store %arg17[%c40_125, %c0_126], %186 {strides = array<i32>} : memref<80x32xf32, #tpu.memory_space<vmem>>, vector<8x32xf32>,
      %188 = vector.extract_strided_slice %150 {offsets = [0, 24], sizes = [8, 8], strides = [1, 1]} : vector<8x44xf32> to vector<8x8xf32>
      %c48 = arith.constant 48 : index
      %c0_127 = arith.constant 0 : index
      %189 = vector.load %arg16[%c48, %c0_127] : memref<80x8xf32, #tpu.memory_space<vmem>>, vector<8x8xf32>
      tpu.vector_store %arg16[%c48, %c0_127], %188 {strides = array<i32>} : memref<80x8xf32, #tpu.memory_space<vmem>>, vector<8x8xf32>,
      %190 = vector.extract_strided_slice %151 {offsets = [6, 0], sizes = [1, 32], strides = [1, 1]} : vector<10x32xf32> to vector<1x32xf32>
      %191 = vector.shape_cast %190 : vector<1x32xf32> to vector<1x32xf32>
      %192 = vector.broadcast %191 : vector<1x32xf32> to vector<8x32xf32>
      %c48_128 = arith.constant 48 : index
      %c0_129 = arith.constant 0 : index
      %193 = vector.load %arg17[%c48_128, %c0_129] : memref<80x32xf32, #tpu.memory_space<vmem>>, vector<8x32xf32>
      tpu.vector_store %arg17[%c48_128, %c0_129], %192 {strides = array<i32>} : memref<80x32xf32, #tpu.memory_space<vmem>>, vector<8x32xf32>,
      %194 = vector.extract_strided_slice %150 {offsets = [0, 28], sizes = [8, 8], strides = [1, 1]} : vector<8x44xf32> to vector<8x8xf32>
      %c56 = arith.constant 56 : index
      %c0_130 = arith.constant 0 : index
      %195 = vector.load %arg16[%c56, %c0_130] : memref<80x8xf32, #tpu.memory_space<vmem>>, vector<8x8xf32>
      tpu.vector_store %arg16[%c56, %c0_130], %194 {strides = array<i32>} : memref<80x8xf32, #tpu.memory_space<vmem>>, vector<8x8xf32>,
      %196 = vector.extract_strided_slice %151 {offsets = [7, 0], sizes = [1, 32], strides = [1, 1]} : vector<10x32xf32> to vector<1x32xf32>
      %197 = vector.shape_cast %196 : vector<1x32xf32> to vector<1x32xf32>
      %198 = vector.broadcast %197 : vector<1x32xf32> to vector<8x32xf32>
      %c56_131 = arith.constant 56 : index
      %c0_132 = arith.constant 0 : index
      %199 = vector.load %arg17[%c56_131, %c0_132] : memref<80x32xf32, #tpu.memory_space<vmem>>, vector<8x32xf32>
      tpu.vector_store %arg17[%c56_131, %c0_132], %198 {strides = array<i32>} : memref<80x32xf32, #tpu.memory_space<vmem>>, vector<8x32xf32>,
      %200 = vector.extract_strided_slice %150 {offsets = [0, 32], sizes = [8, 8], strides = [1, 1]} : vector<8x44xf32> to vector<8x8xf32>
      %c64 = arith.constant 64 : index
      %c0_133 = arith.constant 0 : index
      %201 = vector.load %arg16[%c64, %c0_133] : memref<80x8xf32, #tpu.memory_space<vmem>>, vector<8x8xf32>
      tpu.vector_store %arg16[%c64, %c0_133], %200 {strides = array<i32>} : memref<80x8xf32, #tpu.memory_space<vmem>>, vector<8x8xf32>,
      %202 = vector.extract_strided_slice %151 {offsets = [8, 0], sizes = [1, 32], strides = [1, 1]} : vector<10x32xf32> to vector<1x32xf32>
      %203 = vector.shape_cast %202 : vector<1x32xf32> to vector<1x32xf32>
      %204 = vector.broadcast %203 : vector<1x32xf32> to vector<8x32xf32>
      %c64_134 = arith.constant 64 : index
      %c0_135 = arith.constant 0 : index
      %205 = vector.load %arg17[%c64_134, %c0_135] : memref<80x32xf32, #tpu.memory_space<vmem>>, vector<8x32xf32>
      tpu.vector_store %arg17[%c64_134, %c0_135], %204 {strides = array<i32>} : memref<80x32xf32, #tpu.memory_space<vmem>>, vector<8x32xf32>,
      %206 = vector.extract_strided_slice %150 {offsets = [0, 36], sizes = [8, 8], strides = [1, 1]} : vector<8x44xf32> to vector<8x8xf32>
      %c72 = arith.constant 72 : index
      %c0_136 = arith.constant 0 : index
      %207 = vector.load %arg16[%c72, %c0_136] : memref<80x8xf32, #tpu.memory_space<vmem>>, vector<8x8xf32>
      tpu.vector_store %arg16[%c72, %c0_136], %206 {strides = array<i32>} : memref<80x8xf32, #tpu.memory_space<vmem>>, vector<8x8xf32>,
      %208 = vector.extract_strided_slice %151 {offsets = [9, 0], sizes = [1, 32], strides = [1, 1]} : vector<10x32xf32> to vector<1x32xf32>
      %209 = vector.shape_cast %208 : vector<1x32xf32> to vector<1x32xf32>
      %210 = vector.broadcast %209 : vector<1x32xf32> to vector<8x32xf32>
      %c72_137 = arith.constant 72 : index
      %c0_138 = arith.constant 0 : index
      %211 = vector.load %arg17[%c72_137, %c0_138] : memref<80x32xf32, #tpu.memory_space<vmem>>, vector<8x32xf32>
      tpu.vector_store %arg17[%c72_137, %c0_138], %210 {strides = array<i32>} : memref<80x32xf32, #tpu.memory_space<vmem>>, vector<8x32xf32>,
      %cst_139 = arith.constant 0.000000e+00 : f32
      %212 = vector.broadcast %cst_139 : f32 to vector<80x32xf32>
      %c0_140 = arith.constant 0 : index
      %c0_141 = arith.constant 0 : index
      %213 = vector.load %arg20[%c0_140, %c0_141] : memref<80x32xf32, #tpu.memory_space<vmem>>, vector<80x32xf32>
      tpu.vector_store %arg20[%c0_140, %c0_141], %212 {strides = array<i32>} : memref<80x32xf32, #tpu.memory_space<vmem>>, vector<80x32xf32>,
    } else {
    }
    %c0 = arith.constant 0 : index
    %c0_1 = arith.constant 0 : index
    %3 = vector.load %arg16[%c0, %c0_1] : memref<80x8xf32, #tpu.memory_space<vmem>>, vector<80x8xf32>
    %c0_2 = arith.constant 0 : index
    %c0_3 = arith.constant 0 : index
    %c0_4 = arith.constant 0 : index
    %4 = vector.load %arg6[%c0_2, %c0_3, %c0_4] : memref<1x8x32xf32, #tpu.memory_space<vmem>>, vector<1x8x32xf32>
    %5 = vector.shape_cast %4 : vector<1x8x32xf32> to vector<8x32xf32>
    %cst = arith.constant dense<0.000000e+00> : vector<80x32xf32>
    %6 = tpu.matmul %3, %5, %cst {dimension_numbers = #tpu.dot_dimension_numbers<[1], [0], [0], [1], [0, 0, 1, 1], [], []>} : vector<80x8xf32>, vector<8x32xf32>, vector<80x32xf32> -> vector<80x32xf32>
    %c0_5 = arith.constant 0 : index
    %c0_6 = arith.constant 0 : index
    %7 = vector.load %arg17[%c0_5, %c0_6] : memref<80x32xf32, #tpu.memory_space<vmem>>, vector<80x32xf32>
    %8 = arith.addf %6, %7 : vector<80x32xf32>
    %cst_7 = arith.constant dense<0.000000e+00> : vector<80xf32>
    %9 = vector.multi_reduction <add>, %8, %cst_7 [1] : vector<80x32xf32> to vector<80xf32>
    %10 = vector.shape_cast %9 : vector<80xf32> to vector<80x1xf32>
    %cst_8 = arith.constant 3.200000e+01 : f32
    %11 = vector.broadcast %cst_8 : f32 to vector<80x1xf32>
    %12 = arith.divf %10, %11 : vector<80x1xf32>
    %13 = vector.broadcast %12 : vector<80x1xf32> to vector<80x32xf32>
    %14 = arith.subf %8, %13 : vector<80x32xf32>
    %15 = arith.mulf %14, %14 : vector<80x32xf32>
    %cst_9 = arith.constant dense<0.000000e+00> : vector<80xf32>
    %16 = vector.multi_reduction <add>, %15, %cst_9 [1] : vector<80x32xf32> to vector<80xf32>
    %17 = vector.shape_cast %16 : vector<80xf32> to vector<80x1xf32>
    %cst_10 = arith.constant 3.200000e+01 : f32
    %18 = vector.broadcast %cst_10 : f32 to vector<80x1xf32>
    %19 = arith.divf %17, %18 : vector<80x1xf32>
    %20 = vector.broadcast %12 : vector<80x1xf32> to vector<80x32xf32>
    %21 = arith.subf %8, %20 : vector<80x32xf32>
    %cst_11 = arith.constant 9.99999974E-6 : f32
    %22 = vector.broadcast %cst_11 : f32 to vector<80x1xf32>
    %23 = arith.addf %19, %22 : vector<80x1xf32>
    %24 = math.rsqrt %23 : vector<80x1xf32>
    %25 = vector.broadcast %24 : vector<80x1xf32> to vector<80x32xf32>
    %26 = arith.mulf %21, %25 : vector<80x32xf32>
    %c0_12 = arith.constant 0 : index
    %c0_13 = arith.constant 0 : index
    %c0_14 = arith.constant 0 : index
    %27 = vector.load %arg7[%c0_12, %c0_13, %c0_14] : memref<1x1x32xf32, #tpu.memory_space<vmem>>, vector<1x1x32xf32>
    %28 = vector.shape_cast %27 : vector<1x1x32xf32> to vector<1x32xf32>
    %29 = vector.broadcast %28 : vector<1x32xf32> to vector<80x32xf32>
    %30 = arith.mulf %26, %29 : vector<80x32xf32>
    %c0_15 = arith.constant 0 : index
    %c0_16 = arith.constant 0 : index
    %c0_17 = arith.constant 0 : index
    %31 = vector.load %arg8[%c0_15, %c0_16, %c0_17] : memref<1x1x32xf32, #tpu.memory_space<vmem>>, vector<1x1x32xf32>
    %32 = vector.shape_cast %31 : vector<1x1x32xf32> to vector<1x32xf32>
    %33 = vector.broadcast %32 : vector<1x32xf32> to vector<80x32xf32>
    %34 = arith.addf %30, %33 : vector<80x32xf32>
    %35 = vector.extract_strided_slice %34 {offsets = [0, 0], sizes = [80, 8], strides = [1, 1]} : vector<80x32xf32> to vector<80x8xf32>
    %c0_18 = arith.constant 0 : index
    %c0_19 = arith.constant 0 : index
    %c0_20 = arith.constant 0 : index
    %c0_21 = arith.constant 0 : index
    %36 = vector.load %arg9[%c0_18, %c0_19, %c0_20, %c0_21] : memref<1x4x8x32xf32, #tpu.memory_space<vmem>>, vector<1x1x8x32xf32>
    %37 = vector.shape_cast %36 : vector<1x1x8x32xf32> to vector<8x32xf32>
    %cst_22 = arith.constant dense<0.000000e+00> : vector<80x32xf32>
    %38 = tpu.matmul %35, %37, %cst_22 {dimension_numbers = #tpu.dot_dimension_numbers<[1], [0], [0], [1], [0, 0, 1, 1], [], []>} : vector<80x8xf32>, vector<8x32xf32>, vector<80x32xf32> -> vector<80x32xf32>
    %c0_23 = arith.constant 0 : index
    %c0_24 = arith.constant 0 : index
    %c0_25 = arith.constant 0 : index
    %c0_26 = arith.constant 0 : index
    %39 = vector.load %arg10[%c0_23, %c0_24, %c0_25, %c0_26] : memref<1x4x1x32xf32, #tpu.memory_space<vmem>>, vector<1x1x1x32xf32>
    %40 = vector.shape_cast %39 : vector<1x1x1x32xf32> to vector<1x32xf32>
    %41 = vector.broadcast %40 : vector<1x32xf32> to vector<80x32xf32>
    %42 = arith.addf %38, %41 : vector<80x32xf32>
    %cst_27 = arith.constant 5.000000e-01 : f32
    %43 = vector.broadcast %cst_27 : f32 to vector<80x32xf32>
    %44 = arith.mulf %43, %42 : vector<80x32xf32>
    %cst_28 = arith.constant 0.707106769 : f32
    %45 = vector.broadcast %cst_28 : f32 to vector<80x32xf32>
    %46 = arith.mulf %42, %45 : vector<80x32xf32>
    %47 = math.erf %46 : vector<80x32xf32>
    %cst_29 = arith.constant 1.000000e+00 : f32
    %48 = vector.broadcast %cst_29 : f32 to vector<80x32xf32>
    %49 = arith.addf %48, %47 : vector<80x32xf32>
    %50 = arith.mulf %44, %49 : vector<80x32xf32>
    %c0_30 = arith.constant 0 : index
    %c0_31 = arith.constant 0 : index
    %c0_32 = arith.constant 0 : index
    %c0_33 = arith.constant 0 : index
    %51 = vector.load %arg11[%c0_30, %c0_31, %c0_32, %c0_33] : memref<1x4x32x8xf32, #tpu.memory_space<vmem>>, vector<1x1x32x8xf32>
    %52 = vector.shape_cast %51 : vector<1x1x32x8xf32> to vector<32x8xf32>
    %cst_34 = arith.constant dense<0.000000e+00> : vector<80x8xf32>
    %53 = tpu.matmul %50, %52, %cst_34 {dimension_numbers = #tpu.dot_dimension_numbers<[1], [0], [0], [1], [0, 0, 1, 1], [], []>} : vector<80x32xf32>, vector<32x8xf32>, vector<80x8xf32> -> vector<80x8xf32>
    %54 = vector.extract_strided_slice %34 {offsets = [0, 8], sizes = [80, 8], strides = [1, 1]} : vector<80x32xf32> to vector<80x8xf32>
    %c0_35 = arith.constant 0 : index
    %c1 = arith.constant 1 : index
    %c0_36 = arith.constant 0 : index
    %c0_37 = arith.constant 0 : index
    %55 = vector.load %arg9[%c0_35, %c1, %c0_36, %c0_37] : memref<1x4x8x32xf32, #tpu.memory_space<vmem>>, vector<1x1x8x32xf32>
    %56 = vector.shape_cast %55 : vector<1x1x8x32xf32> to vector<8x32xf32>
    %cst_38 = arith.constant dense<0.000000e+00> : vector<80x32xf32>
    %57 = tpu.matmul %54, %56, %cst_38 {dimension_numbers = #tpu.dot_dimension_numbers<[1], [0], [0], [1], [0, 0, 1, 1], [], []>} : vector<80x8xf32>, vector<8x32xf32>, vector<80x32xf32> -> vector<80x32xf32>
    %c0_39 = arith.constant 0 : index
    %c1_40 = arith.constant 1 : index
    %c0_41 = arith.constant 0 : index
    %c0_42 = arith.constant 0 : index
    %58 = vector.load %arg10[%c0_39, %c1_40, %c0_41, %c0_42] : memref<1x4x1x32xf32, #tpu.memory_space<vmem>>, vector<1x1x1x32xf32>
    %59 = vector.shape_cast %58 : vector<1x1x1x32xf32> to vector<1x32xf32>
    %60 = vector.broadcast %59 : vector<1x32xf32> to vector<80x32xf32>
    %61 = arith.addf %57, %60 : vector<80x32xf32>
    %cst_43 = arith.constant 5.000000e-01 : f32
    %62 = vector.broadcast %cst_43 : f32 to vector<80x32xf32>
    %63 = arith.mulf %62, %61 : vector<80x32xf32>
    %cst_44 = arith.constant 0.707106769 : f32
    %64 = vector.broadcast %cst_44 : f32 to vector<80x32xf32>
    %65 = arith.mulf %61, %64 : vector<80x32xf32>
    %66 = math.erf %65 : vector<80x32xf32>
    %cst_45 = arith.constant 1.000000e+00 : f32
    %67 = vector.broadcast %cst_45 : f32 to vector<80x32xf32>
    %68 = arith.addf %67, %66 : vector<80x32xf32>
    %69 = arith.mulf %63, %68 : vector<80x32xf32>
    %c0_46 = arith.constant 0 : index
    %c1_47 = arith.constant 1 : index
    %c0_48 = arith.constant 0 : index
    %c0_49 = arith.constant 0 : index
    %70 = vector.load %arg11[%c0_46, %c1_47, %c0_48, %c0_49] : memref<1x4x32x8xf32, #tpu.memory_space<vmem>>, vector<1x1x32x8xf32>
    %71 = vector.shape_cast %70 : vector<1x1x32x8xf32> to vector<32x8xf32>
    %cst_50 = arith.constant dense<0.000000e+00> : vector<80x8xf32>
    %72 = tpu.matmul %69, %71, %cst_50 {dimension_numbers = #tpu.dot_dimension_numbers<[1], [0], [0], [1], [0, 0, 1, 1], [], []>} : vector<80x32xf32>, vector<32x8xf32>, vector<80x8xf32> -> vector<80x8xf32>
    %73 = vector.extract_strided_slice %34 {offsets = [0, 16], sizes = [80, 8], strides = [1, 1]} : vector<80x32xf32> to vector<80x8xf32>
    %c0_51 = arith.constant 0 : index
    %c2 = arith.constant 2 : index
    %c0_52 = arith.constant 0 : index
    %c0_53 = arith.constant 0 : index
    %74 = vector.load %arg9[%c0_51, %c2, %c0_52, %c0_53] : memref<1x4x8x32xf32, #tpu.memory_space<vmem>>, vector<1x1x8x32xf32>
    %75 = vector.shape_cast %74 : vector<1x1x8x32xf32> to vector<8x32xf32>
    %cst_54 = arith.constant dense<0.000000e+00> : vector<80x32xf32>
    %76 = tpu.matmul %73, %75, %cst_54 {dimension_numbers = #tpu.dot_dimension_numbers<[1], [0], [0], [1], [0, 0, 1, 1], [], []>} : vector<80x8xf32>, vector<8x32xf32>, vector<80x32xf32> -> vector<80x32xf32>
    %c0_55 = arith.constant 0 : index
    %c2_56 = arith.constant 2 : index
    %c0_57 = arith.constant 0 : index
    %c0_58 = arith.constant 0 : index
    %77 = vector.load %arg10[%c0_55, %c2_56, %c0_57, %c0_58] : memref<1x4x1x32xf32, #tpu.memory_space<vmem>>, vector<1x1x1x32xf32>
    %78 = vector.shape_cast %77 : vector<1x1x1x32xf32> to vector<1x32xf32>
    %79 = vector.broadcast %78 : vector<1x32xf32> to vector<80x32xf32>
    %80 = arith.addf %76, %79 : vector<80x32xf32>
    %cst_59 = arith.constant 5.000000e-01 : f32
    %81 = vector.broadcast %cst_59 : f32 to vector<80x32xf32>
    %82 = arith.mulf %81, %80 : vector<80x32xf32>
    %cst_60 = arith.constant 0.707106769 : f32
    %83 = vector.broadcast %cst_60 : f32 to vector<80x32xf32>
    %84 = arith.mulf %80, %83 : vector<80x32xf32>
    %85 = math.erf %84 : vector<80x32xf32>
    %cst_61 = arith.constant 1.000000e+00 : f32
    %86 = vector.broadcast %cst_61 : f32 to vector<80x32xf32>
    %87 = arith.addf %86, %85 : vector<80x32xf32>
    %88 = arith.mulf %82, %87 : vector<80x32xf32>
    %c0_62 = arith.constant 0 : index
    %c2_63 = arith.constant 2 : index
    %c0_64 = arith.constant 0 : index
    %c0_65 = arith.constant 0 : index
    %89 = vector.load %arg11[%c0_62, %c2_63, %c0_64, %c0_65] : memref<1x4x32x8xf32, #tpu.memory_space<vmem>>, vector<1x1x32x8xf32>
    %90 = vector.shape_cast %89 : vector<1x1x32x8xf32> to vector<32x8xf32>
    %cst_66 = arith.constant dense<0.000000e+00> : vector<80x8xf32>
    %91 = tpu.matmul %88, %90, %cst_66 {dimension_numbers = #tpu.dot_dimension_numbers<[1], [0], [0], [1], [0, 0, 1, 1], [], []>} : vector<80x32xf32>, vector<32x8xf32>, vector<80x8xf32> -> vector<80x8xf32>
    %92 = vector.extract_strided_slice %34 {offsets = [0, 24], sizes = [80, 8], strides = [1, 1]} : vector<80x32xf32> to vector<80x8xf32>
    %c0_67 = arith.constant 0 : index
    %c3 = arith.constant 3 : index
    %c0_68 = arith.constant 0 : index
    %c0_69 = arith.constant 0 : index
    %93 = vector.load %arg9[%c0_67, %c3, %c0_68, %c0_69] : memref<1x4x8x32xf32, #tpu.memory_space<vmem>>, vector<1x1x8x32xf32>
    %94 = vector.shape_cast %93 : vector<1x1x8x32xf32> to vector<8x32xf32>
    %cst_70 = arith.constant dense<0.000000e+00> : vector<80x32xf32>
    %95 = tpu.matmul %92, %94, %cst_70 {dimension_numbers = #tpu.dot_dimension_numbers<[1], [0], [0], [1], [0, 0, 1, 1], [], []>} : vector<80x8xf32>, vector<8x32xf32>, vector<80x32xf32> -> vector<80x32xf32>
    %c0_71 = arith.constant 0 : index
    %c3_72 = arith.constant 3 : index
    %c0_73 = arith.constant 0 : index
    %c0_74 = arith.constant 0 : index
    %96 = vector.load %arg10[%c0_71, %c3_72, %c0_73, %c0_74] : memref<1x4x1x32xf32, #tpu.memory_space<vmem>>, vector<1x1x1x32xf32>
    %97 = vector.shape_cast %96 : vector<1x1x1x32xf32> to vector<1x32xf32>
    %98 = vector.broadcast %97 : vector<1x32xf32> to vector<80x32xf32>
    %99 = arith.addf %95, %98 : vector<80x32xf32>
    %cst_75 = arith.constant 5.000000e-01 : f32
    %100 = vector.broadcast %cst_75 : f32 to vector<80x32xf32>
    %101 = arith.mulf %100, %99 : vector<80x32xf32>
    %cst_76 = arith.constant 0.707106769 : f32
    %102 = vector.broadcast %cst_76 : f32 to vector<80x32xf32>
    %103 = arith.mulf %99, %102 : vector<80x32xf32>
    %104 = math.erf %103 : vector<80x32xf32>
    %cst_77 = arith.constant 1.000000e+00 : f32
    %105 = vector.broadcast %cst_77 : f32 to vector<80x32xf32>
    %106 = arith.addf %105, %104 : vector<80x32xf32>
    %107 = arith.mulf %101, %106 : vector<80x32xf32>
    %c0_78 = arith.constant 0 : index
    %c3_79 = arith.constant 3 : index
    %c0_80 = arith.constant 0 : index
    %c0_81 = arith.constant 0 : index
    %108 = vector.load %arg11[%c0_78, %c3_79, %c0_80, %c0_81] : memref<1x4x32x8xf32, #tpu.memory_space<vmem>>, vector<1x1x32x8xf32>
    %109 = vector.shape_cast %108 : vector<1x1x32x8xf32> to vector<32x8xf32>
    %cst_82 = arith.constant dense<0.000000e+00> : vector<80x8xf32>
    %110 = tpu.matmul %107, %109, %cst_82 {dimension_numbers = #tpu.dot_dimension_numbers<[1], [0], [0], [1], [0, 0, 1, 1], [], []>} : vector<80x32xf32>, vector<32x8xf32>, vector<80x8xf32> -> vector<80x8xf32>
    %111 = tpu.concatenate %53, %72, %91, %110 in 1 : vector<80x8xf32>, vector<80x8xf32>, vector<80x8xf32>, vector<80x8xf32> -> vector<80x32xf32>
    %c0_83 = arith.constant 0 : index
    %c0_84 = arith.constant 0 : index
    %c0_85 = arith.constant 0 : index
    %112 = vector.load %arg12[%c0_83, %c0_84, %c0_85] : memref<1x1x32xf32, #tpu.memory_space<vmem>>, vector<1x1x32xf32>
    %113 = vector.shape_cast %112 : vector<1x1x32xf32> to vector<1x32xf32>
    %114 = vector.broadcast %113 : vector<1x32xf32> to vector<80x32xf32>
    %115 = arith.addf %111, %114 : vector<80x32xf32>
    %c0_86 = arith.constant 0 : index
    %c0_87 = arith.constant 0 : index
    %116 = vector.load %arg20[%c0_86, %c0_87] : memref<80x32xf32, #tpu.memory_space<vmem>>, vector<80x32xf32>
    %117 = arith.addf %116, %115 : vector<80x32xf32>
    %c0_88 = arith.constant 0 : index
    %c0_89 = arith.constant 0 : index
    %118 = vector.load %arg20[%c0_88, %c0_89] : memref<80x32xf32, #tpu.memory_space<vmem>>, vector<80x32xf32>
    tpu.vector_store %arg20[%c0_88, %c0_89], %117 {strides = array<i32>} : memref<80x32xf32, #tpu.memory_space<vmem>>, vector<80x32xf32>,
    %c1_i32 = arith.constant 1 : i32
    %119 = arith.cmpi eq, %arg1, %c1_i32 : i32
    %120 = arith.extui %119 : i1 to i32
    %c0_i32_90 = arith.constant 0 : i32
    %121 = arith.cmpi ne, %120, %c0_i32_90 : i32
    scf.if %121 {
      %cst_91 = arith.constant 0.000000e+00 : f32
      %122 = vector.broadcast %cst_91 : f32 to vector<8x128xf32>
      %c0_92 = arith.constant 0 : index
      %c0_93 = arith.constant 0 : index
      %123 = vector.load %arg14[%c0_92, %c0_93] : memref<1x128xf32, #tpu.memory_space<vmem>>, vector<1x128xf32>
      %124 = vector.broadcast %123 : vector<1x128xf32> to vector<8x128xf32>
      %125 = arith.addf %122, %124 : vector<8x128xf32>
      %c0_94 = arith.constant 0 : index
      %c0_95 = arith.constant 0 : index
      %126 = vector.load %arg15[%c0_94, %c0_95] : memref<8x128xf32, #tpu.memory_space<vmem>>, vector<8x128xf32>
      tpu.vector_store %arg15[%c0_94, %c0_95], %125 {strides = array<i32>} : memref<8x128xf32, #tpu.memory_space<vmem>>, vector<8x128xf32>,
      %c0_96 = arith.constant 0 : index
      %c0_97 = arith.constant 0 : index
      %127 = vector.load %arg15[%c0_96, %c0_97] : memref<8x128xf32, #tpu.memory_space<vmem>>, vector<8x128xf32>
      %c0_98 = arith.constant 0 : index
      %c0_99 = arith.constant 0 : index
      %128 = vector.load %arg20[%c0_98, %c0_99] : memref<80x32xf32, #tpu.memory_space<vmem>>, vector<8x32xf32>
      %c0_100 = arith.constant 0 : index
      %c0_101 = arith.constant 0 : index
      %c0_102 = arith.constant 0 : index
      %129 = vector.load %arg13[%c0_100, %c0_101, %c0_102] : memref<10x32x128xf32, #tpu.memory_space<vmem>>, vector<1x32x128xf32>
      %130 = vector.shape_cast %129 : vector<1x32x128xf32> to vector<32x128xf32>
      %cst_103 = arith.constant dense<0.000000e+00> : vector<8x128xf32>
      %131 = tpu.matmul %128, %130, %cst_103 {dimension_numbers = #tpu.dot_dimension_numbers<[1], [0], [0], [1], [0, 0, 1, 1], [], []>} : vector<8x32xf32>, vector<32x128xf32>, vector<8x128xf32> -> vector<8x128xf32>
      %132 = arith.addf %127, %131 : vector<8x128xf32>
      %c0_104 = arith.constant 0 : index
      %c0_105 = arith.constant 0 : index
      %133 = vector.load %arg15[%c0_104, %c0_105] : memref<8x128xf32, #tpu.memory_space<vmem>>, vector<8x128xf32>
      tpu.vector_store %arg15[%c0_104, %c0_105], %132 {strides = array<i32>} : memref<8x128xf32, #tpu.memory_space<vmem>>, vector<8x128xf32>,
      %c0_106 = arith.constant 0 : index
      %c0_107 = arith.constant 0 : index
      %134 = vector.load %arg15[%c0_106, %c0_107] : memref<8x128xf32, #tpu.memory_space<vmem>>, vector<8x128xf32>
      %c8 = arith.constant 8 : index
      %c0_108 = arith.constant 0 : index
      %135 = vector.load %arg20[%c8, %c0_108] : memref<80x32xf32, #tpu.memory_space<vmem>>, vector<8x32xf32>
      %c1_109 = arith.constant 1 : index
      %c0_110 = arith.constant 0 : index
      %c0_111 = arith.constant 0 : index
      %136 = vector.load %arg13[%c1_109, %c0_110, %c0_111] : memref<10x32x128xf32, #tpu.memory_space<vmem>>, vector<1x32x128xf32>
      %137 = vector.shape_cast %136 : vector<1x32x128xf32> to vector<32x128xf32>
      %cst_112 = arith.constant dense<0.000000e+00> : vector<8x128xf32>
      %138 = tpu.matmul %135, %137, %cst_112 {dimension_numbers = #tpu.dot_dimension_numbers<[1], [0], [0], [1], [0, 0, 1, 1], [], []>} : vector<8x32xf32>, vector<32x128xf32>, vector<8x128xf32> -> vector<8x128xf32>
      %139 = arith.addf %134, %138 : vector<8x128xf32>
      %c0_113 = arith.constant 0 : index
      %c0_114 = arith.constant 0 : index
      %140 = vector.load %arg15[%c0_113, %c0_114] : memref<8x128xf32, #tpu.memory_space<vmem>>, vector<8x128xf32>
      tpu.vector_store %arg15[%c0_113, %c0_114], %139 {strides = array<i32>} : memref<8x128xf32, #tpu.memory_space<vmem>>, vector<8x128xf32>,
      %c0_115 = arith.constant 0 : index
      %c0_116 = arith.constant 0 : index
      %141 = vector.load %arg15[%c0_115, %c0_116] : memref<8x128xf32, #tpu.memory_space<vmem>>, vector<8x128xf32>
      %c16 = arith.constant 16 : index
      %c0_117 = arith.constant 0 : index
      %142 = vector.load %arg20[%c16, %c0_117] : memref<80x32xf32, #tpu.memory_space<vmem>>, vector<8x32xf32>
      %c2_118 = arith.constant 2 : index
      %c0_119 = arith.constant 0 : index
      %c0_120 = arith.constant 0 : index
      %143 = vector.load %arg13[%c2_118, %c0_119, %c0_120] : memref<10x32x128xf32, #tpu.memory_space<vmem>>, vector<1x32x128xf32>
      %144 = vector.shape_cast %143 : vector<1x32x128xf32> to vector<32x128xf32>
      %cst_121 = arith.constant dense<0.000000e+00> : vector<8x128xf32>
      %145 = tpu.matmul %142, %144, %cst_121 {dimension_numbers = #tpu.dot_dimension_numbers<[1], [0], [0], [1], [0, 0, 1, 1], [], []>} : vector<8x32xf32>, vector<32x128xf32>, vector<8x128xf32> -> vector<8x128xf32>
      %146 = arith.addf %141, %145 : vector<8x128xf32>
      %c0_122 = arith.constant 0 : index
      %c0_123 = arith.constant 0 : index
      %147 = vector.load %arg15[%c0_122, %c0_123] : memref<8x128xf32, #tpu.memory_space<vmem>>, vector<8x128xf32>
      tpu.vector_store %arg15[%c0_122, %c0_123], %146 {strides = array<i32>} : memref<8x128xf32, #tpu.memory_space<vmem>>, vector<8x128xf32>,
      %c0_124 = arith.constant 0 : index
      %c0_125 = arith.constant 0 : index
      %148 = vector.load %arg15[%c0_124, %c0_125] : memref<8x128xf32, #tpu.memory_space<vmem>>, vector<8x128xf32>
      %c24 = arith.constant 24 : index
      %c0_126 = arith.constant 0 : index
      %149 = vector.load %arg20[%c24, %c0_126] : memref<80x32xf32, #tpu.memory_space<vmem>>, vector<8x32xf32>
      %c3_127 = arith.constant 3 : index
      %c0_128 = arith.constant 0 : index
      %c0_129 = arith.constant 0 : index
      %150 = vector.load %arg13[%c3_127, %c0_128, %c0_129] : memref<10x32x128xf32, #tpu.memory_space<vmem>>, vector<1x32x128xf32>
      %151 = vector.shape_cast %150 : vector<1x32x128xf32> to vector<32x128xf32>
      %cst_130 = arith.constant dense<0.000000e+00> : vector<8x128xf32>
      %152 = tpu.matmul %149, %151, %cst_130 {dimension_numbers = #tpu.dot_dimension_numbers<[1], [0], [0], [1], [0, 0, 1, 1], [], []>} : vector<8x32xf32>, vector<32x128xf32>, vector<8x128xf32> -> vector<8x128xf32>
      %153 = arith.addf %148, %152 : vector<8x128xf32>
      %c0_131 = arith.constant 0 : index
      %c0_132 = arith.constant 0 : index
      %154 = vector.load %arg15[%c0_131, %c0_132] : memref<8x128xf32, #tpu.memory_space<vmem>>, vector<8x128xf32>
      tpu.vector_store %arg15[%c0_131, %c0_132], %153 {strides = array<i32>} : memref<8x128xf32, #tpu.memory_space<vmem>>, vector<8x128xf32>,
      %c0_133 = arith.constant 0 : index
      %c0_134 = arith.constant 0 : index
      %155 = vector.load %arg15[%c0_133, %c0_134] : memref<8x128xf32, #tpu.memory_space<vmem>>, vector<8x128xf32>
      %c32 = arith.constant 32 : index
      %c0_135 = arith.constant 0 : index
      %156 = vector.load %arg20[%c32, %c0_135] : memref<80x32xf32, #tpu.memory_space<vmem>>, vector<8x32xf32>
      %c4 = arith.constant 4 : index
      %c0_136 = arith.constant 0 : index
      %c0_137 = arith.constant 0 : index
      %157 = vector.load %arg13[%c4, %c0_136, %c0_137] : memref<10x32x128xf32, #tpu.memory_space<vmem>>, vector<1x32x128xf32>
      %158 = vector.shape_cast %157 : vector<1x32x128xf32> to vector<32x128xf32>
      %cst_138 = arith.constant dense<0.000000e+00> : vector<8x128xf32>
      %159 = tpu.matmul %156, %158, %cst_138 {dimension_numbers = #tpu.dot_dimension_numbers<[1], [0], [0], [1], [0, 0, 1, 1], [], []>} : vector<8x32xf32>, vector<32x128xf32>, vector<8x128xf32> -> vector<8x128xf32>
      %160 = arith.addf %155, %159 : vector<8x128xf32>
      %c0_139 = arith.constant 0 : index
      %c0_140 = arith.constant 0 : index
      %161 = vector.load %arg15[%c0_139, %c0_140] : memref<8x128xf32, #tpu.memory_space<vmem>>, vector<8x128xf32>
      tpu.vector_store %arg15[%c0_139, %c0_140], %160 {strides = array<i32>} : memref<8x128xf32, #tpu.memory_space<vmem>>, vector<8x128xf32>,
      %c0_141 = arith.constant 0 : index
      %c0_142 = arith.constant 0 : index
      %162 = vector.load %arg15[%c0_141, %c0_142] : memref<8x128xf32, #tpu.memory_space<vmem>>, vector<8x128xf32>
      %c40 = arith.constant 40 : index
      %c0_143 = arith.constant 0 : index
      %163 = vector.load %arg20[%c40, %c0_143] : memref<80x32xf32, #tpu.memory_space<vmem>>, vector<8x32xf32>
      %c5 = arith.constant 5 : index
      %c0_144 = arith.constant 0 : index
      %c0_145 = arith.constant 0 : index
      %164 = vector.load %arg13[%c5, %c0_144, %c0_145] : memref<10x32x128xf32, #tpu.memory_space<vmem>>, vector<1x32x128xf32>
      %165 = vector.shape_cast %164 : vector<1x32x128xf32> to vector<32x128xf32>
      %cst_146 = arith.constant dense<0.000000e+00> : vector<8x128xf32>
      %166 = tpu.matmul %163, %165, %cst_146 {dimension_numbers = #tpu.dot_dimension_numbers<[1], [0], [0], [1], [0, 0, 1, 1], [], []>} : vector<8x32xf32>, vector<32x128xf32>, vector<8x128xf32> -> vector<8x128xf32>
      %167 = arith.addf %162, %166 : vector<8x128xf32>
      %c0_147 = arith.constant 0 : index
      %c0_148 = arith.constant 0 : index
      %168 = vector.load %arg15[%c0_147, %c0_148] : memref<8x128xf32, #tpu.memory_space<vmem>>, vector<8x128xf32>
      tpu.vector_store %arg15[%c0_147, %c0_148], %167 {strides = array<i32>} : memref<8x128xf32, #tpu.memory_space<vmem>>, vector<8x128xf32>,
      %c0_149 = arith.constant 0 : index
      %c0_150 = arith.constant 0 : index
      %169 = vector.load %arg15[%c0_149, %c0_150] : memref<8x128xf32, #tpu.memory_space<vmem>>, vector<8x128xf32>
      %c48 = arith.constant 48 : index
      %c0_151 = arith.constant 0 : index
      %170 = vector.load %arg20[%c48, %c0_151] : memref<80x32xf32, #tpu.memory_space<vmem>>, vector<8x32xf32>
      %c6 = arith.constant 6 : index
      %c0_152 = arith.constant 0 : index
      %c0_153 = arith.constant 0 : index
      %171 = vector.load %arg13[%c6, %c0_152, %c0_153] : memref<10x32x128xf32, #tpu.memory_space<vmem>>, vector<1x32x128xf32>
      %172 = vector.shape_cast %171 : vector<1x32x128xf32> to vector<32x128xf32>
      %cst_154 = arith.constant dense<0.000000e+00> : vector<8x128xf32>
      %173 = tpu.matmul %170, %172, %cst_154 {dimension_numbers = #tpu.dot_dimension_numbers<[1], [0], [0], [1], [0, 0, 1, 1], [], []>} : vector<8x32xf32>, vector<32x128xf32>, vector<8x128xf32> -> vector<8x128xf32>
      %174 = arith.addf %169, %173 : vector<8x128xf32>
      %c0_155 = arith.constant 0 : index
      %c0_156 = arith.constant 0 : index
      %175 = vector.load %arg15[%c0_155, %c0_156] : memref<8x128xf32, #tpu.memory_space<vmem>>, vector<8x128xf32>
      tpu.vector_store %arg15[%c0_155, %c0_156], %174 {strides = array<i32>} : memref<8x128xf32, #tpu.memory_space<vmem>>, vector<8x128xf32>,
      %c0_157 = arith.constant 0 : index
      %c0_158 = arith.constant 0 : index
      %176 = vector.load %arg15[%c0_157, %c0_158] : memref<8x128xf32, #tpu.memory_space<vmem>>, vector<8x128xf32>
      %c56 = arith.constant 56 : index
      %c0_159 = arith.constant 0 : index
      %177 = vector.load %arg20[%c56, %c0_159] : memref<80x32xf32, #tpu.memory_space<vmem>>, vector<8x32xf32>
      %c7 = arith.constant 7 : index
      %c0_160 = arith.constant 0 : index
      %c0_161 = arith.constant 0 : index
      %178 = vector.load %arg13[%c7, %c0_160, %c0_161] : memref<10x32x128xf32, #tpu.memory_space<vmem>>, vector<1x32x128xf32>
      %179 = vector.shape_cast %178 : vector<1x32x128xf32> to vector<32x128xf32>
      %cst_162 = arith.constant dense<0.000000e+00> : vector<8x128xf32>
      %180 = tpu.matmul %177, %179, %cst_162 {dimension_numbers = #tpu.dot_dimension_numbers<[1], [0], [0], [1], [0, 0, 1, 1], [], []>} : vector<8x32xf32>, vector<32x128xf32>, vector<8x128xf32> -> vector<8x128xf32>
      %181 = arith.addf %176, %180 : vector<8x128xf32>
      %c0_163 = arith.constant 0 : index
      %c0_164 = arith.constant 0 : index
      %182 = vector.load %arg15[%c0_163, %c0_164] : memref<8x128xf32, #tpu.memory_space<vmem>>, vector<8x128xf32>
      tpu.vector_store %arg15[%c0_163, %c0_164], %181 {strides = array<i32>} : memref<8x128xf32, #tpu.memory_space<vmem>>, vector<8x128xf32>,
      %c0_165 = arith.constant 0 : index
      %c0_166 = arith.constant 0 : index
      %183 = vector.load %arg15[%c0_165, %c0_166] : memref<8x128xf32, #tpu.memory_space<vmem>>, vector<8x128xf32>
      %c64 = arith.constant 64 : index
      %c0_167 = arith.constant 0 : index
      %184 = vector.load %arg20[%c64, %c0_167] : memref<80x32xf32, #tpu.memory_space<vmem>>, vector<8x32xf32>
      %c8_168 = arith.constant 8 : index
      %c0_169 = arith.constant 0 : index
      %c0_170 = arith.constant 0 : index
      %185 = vector.load %arg13[%c8_168, %c0_169, %c0_170] : memref<10x32x128xf32, #tpu.memory_space<vmem>>, vector<1x32x128xf32>
      %186 = vector.shape_cast %185 : vector<1x32x128xf32> to vector<32x128xf32>
      %cst_171 = arith.constant dense<0.000000e+00> : vector<8x128xf32>
      %187 = tpu.matmul %184, %186, %cst_171 {dimension_numbers = #tpu.dot_dimension_numbers<[1], [0], [0], [1], [0, 0, 1, 1], [], []>} : vector<8x32xf32>, vector<32x128xf32>, vector<8x128xf32> -> vector<8x128xf32>
      %188 = arith.addf %183, %187 : vector<8x128xf32>
      %c0_172 = arith.constant 0 : index
      %c0_173 = arith.constant 0 : index
      %189 = vector.load %arg15[%c0_172, %c0_173] : memref<8x128xf32, #tpu.memory_space<vmem>>, vector<8x128xf32>
      tpu.vector_store %arg15[%c0_172, %c0_173], %188 {strides = array<i32>} : memref<8x128xf32, #tpu.memory_space<vmem>>, vector<8x128xf32>,
      %c0_174 = arith.constant 0 : index
      %c0_175 = arith.constant 0 : index
      %190 = vector.load %arg15[%c0_174, %c0_175] : memref<8x128xf32, #tpu.memory_space<vmem>>, vector<8x128xf32>
      %c72 = arith.constant 72 : index
      %c0_176 = arith.constant 0 : index
      %191 = vector.load %arg20[%c72, %c0_176] : memref<80x32xf32, #tpu.memory_space<vmem>>, vector<8x32xf32>
      %c9 = arith.constant 9 : index
      %c0_177 = arith.constant 0 : index
      %c0_178 = arith.constant 0 : index
      %192 = vector.load %arg13[%c9, %c0_177, %c0_178] : memref<10x32x128xf32, #tpu.memory_space<vmem>>, vector<1x32x128xf32>
      %193 = vector.shape_cast %192 : vector<1x32x128xf32> to vector<32x128xf32>
      %cst_179 = arith.constant dense<0.000000e+00> : vector<8x128xf32>
      %194 = tpu.matmul %191, %193, %cst_179 {dimension_numbers = #tpu.dot_dimension_numbers<[1], [0], [0], [1], [0, 0, 1, 1], [], []>} : vector<8x32xf32>, vector<32x128xf32>, vector<8x128xf32> -> vector<8x128xf32>
      %195 = arith.addf %190, %194 : vector<8x128xf32>
      %c0_180 = arith.constant 0 : index
      %c0_181 = arith.constant 0 : index
      %196 = vector.load %arg15[%c0_180, %c0_181] : memref<8x128xf32, #tpu.memory_space<vmem>>, vector<8x128xf32>
      tpu.vector_store %arg15[%c0_180, %c0_181], %195 {strides = array<i32>} : memref<8x128xf32, #tpu.memory_space<vmem>>, vector<8x128xf32>,
      %c0_182 = arith.constant 0 : index
      %c0_183 = arith.constant 0 : index
      %197 = vector.load %arg15[%c0_182, %c0_183] : memref<8x128xf32, #tpu.memory_space<vmem>>, vector<8x128xf32>
      %c0_184 = arith.constant 0 : index
      %c0_185 = arith.constant 0 : index
      %198 = vector.load %arg4[%c0_184, %c0_185] : memref<8x1xf32, #tpu.memory_space<vmem>>, vector<8x1xf32>
      %199 = vector.broadcast %198 : vector<8x1xf32> to vector<8x128xf32>
      %200 = arith.subf %197, %199 : vector<8x128xf32>
      %c0_186 = arith.constant 0 : index
      %c0_187 = arith.constant 0 : index
      %201 = vector.load %arg3[%c0_186, %c0_187] : memref<8x1xf32, #tpu.memory_space<vmem>>, vector<8x1xf32>
      %cst_188 = arith.constant 1.000000e-10 : f32
      %202 = vector.broadcast %cst_188 : f32 to vector<8x1xf32>
      %203 = arith.addf %201, %202 : vector<8x1xf32>
      %204 = vector.broadcast %203 : vector<8x1xf32> to vector<8x128xf32>
      %205 = arith.divf %200, %204 : vector<8x128xf32>
      %c0_189 = arith.constant 0 : index
      %c0_190 = arith.constant 0 : index
      %206 = vector.load %arg19[%c0_189, %c0_190] : memref<8x1xf32, #tpu.memory_space<vmem>>, vector<8x1xf32>
      %207 = vector.broadcast %206 : vector<8x1xf32> to vector<8x128xf32>
      %208 = arith.mulf %205, %207 : vector<8x128xf32>
      %c0_191 = arith.constant 0 : index
      %c0_192 = arith.constant 0 : index
      %209 = vector.load %arg18[%c0_191, %c0_192] : memref<8x1xf32, #tpu.memory_space<vmem>>, vector<8x1xf32>
      %210 = vector.broadcast %209 : vector<8x1xf32> to vector<8x128xf32>
      %211 = arith.addf %208, %210 : vector<8x128xf32>
      %c0_193 = arith.constant 0 : index
      %c0_194 = arith.constant 0 : index
      %212 = vector.load %arg15[%c0_193, %c0_194] : memref<8x128xf32, #tpu.memory_space<vmem>>, vector<8x128xf32>
      tpu.vector_store %arg15[%c0_193, %c0_194], %211 {strides = array<i32>} : memref<8x128xf32, #tpu.memory_space<vmem>>, vector<8x128xf32>,
    } else {
    }
    return
  }
  func.func @transform_0(%arg0: i32, %arg1: i32) -> (i32, i32) {
    %c0_i32 = arith.constant 0 : i32
    %c0_i32_0 = arith.constant 0 : i32
    return %arg0, %c0_i32 : i32, i32
  }
  func.func @transform_1(%arg0: i32, %arg1: i32) -> (i32, i32) {
    %c0_i32 = arith.constant 0 : i32
    %c0_i32_0 = arith.constant 0 : i32
    return %arg0, %c0_i32 : i32, i32
  }
  func.func @transform_2(%arg0: i32, %arg1: i32) -> (i32, i32) {
    %c0_i32 = arith.constant 0 : i32
    %c0_i32_0 = arith.constant 0 : i32
    return %arg0, %c0_i32 : i32, i32
  }
  func.func @transform_3(%arg0: i32, %arg1: i32) -> (i32, i32) {
    %c0_i32 = arith.constant 0 : i32
    %c0_i32_0 = arith.constant 0 : i32
    %c0_i32_1 = arith.constant 0 : i32
    return %c0_i32, %c0_i32_0 : i32, i32
  }
  func.func @transform_4(%arg0: i32, %arg1: i32) -> (i32, i32, i32) {
    %c0_i32 = arith.constant 0 : i32
    %c0_i32_0 = arith.constant 0 : i32
    %c0_i32_1 = arith.constant 0 : i32
    return %arg1, %c0_i32, %c0_i32_0 : i32, i32, i32
  }
  func.func @transform_5(%arg0: i32, %arg1: i32) -> (i32, i32, i32) {
    %c0_i32 = arith.constant 0 : i32
    %c0_i32_0 = arith.constant 0 : i32
    %c0_i32_1 = arith.constant 0 : i32
    return %arg1, %c0_i32, %c0_i32_0 : i32, i32, i32
  }
  func.func @transform_6(%arg0: i32, %arg1: i32) -> (i32, i32, i32) {
    %c0_i32 = arith.constant 0 : i32
    %c0_i32_0 = arith.constant 0 : i32
    %c0_i32_1 = arith.constant 0 : i32
    return %arg1, %c0_i32, %c0_i32_0 : i32, i32, i32
  }
  func.func @transform_7(%arg0: i32, %arg1: i32) -> (i32, i32, i32, i32) {
    %c0_i32 = arith.constant 0 : i32
    %c0_i32_0 = arith.constant 0 : i32
    %c0_i32_1 = arith.constant 0 : i32
    %c0_i32_2 = arith.constant 0 : i32
    return %arg1, %c0_i32, %c0_i32_0, %c0_i32_1 : i32, i32, i32, i32
  }
  func.func @transform_8(%arg0: i32, %arg1: i32) -> (i32, i32, i32, i32) {
    %c0_i32 = arith.constant 0 : i32
    %c0_i32_0 = arith.constant 0 : i32
    %c0_i32_1 = arith.constant 0 : i32
    %c0_i32_2 = arith.constant 0 : i32
    return %arg1, %c0_i32, %c0_i32_0, %c0_i32_1 : i32, i32, i32, i32
  }
  func.func @transform_9(%arg0: i32, %arg1: i32) -> (i32, i32, i32, i32) {
    %c0_i32 = arith.constant 0 : i32
    %c0_i32_0 = arith.constant 0 : i32
    %c0_i32_1 = arith.constant 0 : i32
    %c0_i32_2 = arith.constant 0 : i32
    return %arg1, %c0_i32, %c0_i32_0, %c0_i32_1 : i32, i32, i32, i32
  }
  func.func @transform_10(%arg0: i32, %arg1: i32) -> (i32, i32, i32) {
    %c0_i32 = arith.constant 0 : i32
    %c0_i32_0 = arith.constant 0 : i32
    %c0_i32_1 = arith.constant 0 : i32
    return %arg1, %c0_i32, %c0_i32_0 : i32, i32, i32
  }
  func.func @transform_11(%arg0: i32, %arg1: i32) -> (i32, i32, i32) {
    %c0_i32 = arith.constant 0 : i32
    %c0_i32_0 = arith.constant 0 : i32
    %c0_i32_1 = arith.constant 0 : i32
    %c0_i32_2 = arith.constant 0 : i32
    return %c0_i32, %c0_i32_0, %c0_i32_1 : i32, i32, i32
  }
  func.func @transform_12(%arg0: i32, %arg1: i32) -> (i32, i32) {
    %c0_i32 = arith.constant 0 : i32
    %c0_i32_0 = arith.constant 0 : i32
    %c0_i32_1 = arith.constant 0 : i32
    return %c0_i32, %c0_i32_0 : i32, i32
  }
  func.func @transform_13(%arg0: i32, %arg1: i32) -> (i32, i32) {
    %c0_i32 = arith.constant 0 : i32
    %c0_i32_0 = arith.constant 0 : i32
    return %arg0, %c0_i32 : i32, i32
  }
}

</mosaic_0001>

<llo_original>
// kernel: tpu_custom_call.1
$region0: #{tpu_custom_call.1}
  #allocation0 [shape = 'u32[]', space=smem, size = 0x4, offset = 0x4, fixed_abs, tag = 'smem constant byte address 0x4 - core index']
  #allocation1 [shape = 'u32[144,128]{1,0:T(1,128)}', space=vmem, size = 0x12000, scoped, tag = 'internal scratch']
  #allocation2 [shape = 'f32[80,8]{1,0:T(8,128)}', space=vmem, size = 0xa000, scoped, tag = 'scratch operand']
  #allocation3 [shape = 'f32[80,32]{1,0:T(8,128)}', space=vmem, size = 0xa000, scoped, tag = 'scratch operand']
  #allocation4 [shape = 'f32[8,1]{1,0:T(8,128)}', space=vmem, size = 0x1000, scoped, tag = 'scratch operand']
  #allocation5 [shape = 'f32[8,1]{1,0:T(8,128)}', space=vmem, size = 0x1000, scoped, tag = 'scratch operand']
  #allocation6 [shape = 'f32[80,32]{1,0:T(8,128)}', space=vmem, size = 0xa000, scoped, tag = 'scratch operand']
  %s0 = inlined_call_operand.vmem [shape: f32[8,40], index: 0, kind: input, shape index: {}]
  %s1 = inlined_call_operand.vmem [shape: f32[8,1], index: 1, kind: input, shape index: {}]
  %s2 = inlined_call_operand.vmem [shape: f32[8,1], index: 2, kind: input, shape index: {}]
  %s3 = inlined_call_operand.vmem [shape: f32[10,32], index: 3, kind: input, shape index: {}]
  %s4 = inlined_call_operand.vmem [shape: f32[2,8,32], index: 4, kind: input, shape index: {}]
  %s5 = inlined_call_operand.vmem [shape: f32[2,1,32], index: 5, kind: input, shape index: {}]
  %s6 = inlined_call_operand.vmem [shape: f32[2,1,32], index: 6, kind: input, shape index: {}]
  %s7 = inlined_call_operand.hbm [shape: f32[2,4,8,32], index: 7, kind: input, shape index: {}]
  %s8 = inlined_call_operand.vmem [shape: f32[2,4,1,32], index: 8, kind: input, shape index: {}]
  %s9 = inlined_call_operand.vmem [shape: f32[2,4,32,8], index: 9, kind: input, shape index: {}]
  %s10 = inlined_call_operand.vmem [shape: f32[2,1,32], index: 10, kind: input, shape index: {}]
  %s11 = inlined_call_operand.vmem [shape: f32[10,32,128], index: 11, kind: input, shape index: {}]
  %s12 = inlined_call_operand.vmem [shape: f32[1,128], index: 12, kind: input, shape index: {}]
  %s13 = inlined_call_operand.hbm [shape: f32[8,128], index: 13, kind: output, shape index: {}]
  %s14 = sld [smem:[#allocation0]]
  $region97: #{tpu_custom_call.1} parent=0
    _
  %s16 = ssub.s32 1, %s14
  %s17 = scalar_select 0, %s16, %s14
  $region1: #{tpu_custom_call.1} parent=0
    #allocation7 [shape = 'u8[32768]{0}', space=vmem, size = 0x8000, scoped, tag = 'input window, operand 7']
    #allocation8 [shape = 's32[2]{0}', space=sflag, size = 0x8, scoped, tag = 'scoped memory for tpu_custom_call.1']
    #allocation9 [shape = 's32[2]{0}', space=sflag, size = 0x8, scoped, tag = 'scoped memory for tpu_custom_call.1']
    #allocation10 [shape = 'u8[4096]{0}', space=vmem, size = 0x1000, scoped, tag = 'output window, operand 0, single buffered']
    %18 = vsyncpa [#allocation8], 0
    %s19 = scalar_lea.sflag [#allocation8], 1
    %20 = vsyncpa %s19, 0
    %21 = vsyncpa [#allocation9], 0
    loop: start=0, step=1, limit=4
    $region2: #{tpu_custom_call.1} parent=1 // loop_pre_header
      _
    $region3: #{tpu_custom_call.1} parent=1 // loop_header
      %s23 = sphi 0, %s27
      %p24 = scmp.ge.s32.totalorder %s23, 4
      %s30 = sphi 0, %s42
      %s31 = sphi 0, %s38
      %s32 = sphi 0, %s30
      %s33 = sphi 0, %s31
      %s34 = sphi 0, %s32
      %s35 = sphi 0, %s33
      %s45 = sphi 0, %s47
      %s48 = sphi 0, %s45
      %s49 = sphi 0, %s48
      %s65 = sphi 0, %s49
      %s71 = sphi 0, %s73
      %s74 = sphi 0, %s71
      %s75 = sphi 0, %s74
      %s91 = sphi 0, %s75
      %s97 = sphi 0, %s99
      %s100 = sphi 0, %s97
      %s101 = sphi 0, %s100
      %s117 = sphi 0, %s101
      %s121 = sphi 0, %s121
      %s123 = sphi 0, %s121
      %s124 = sphi 0, %s123
      %s138 = sphi 0, %s124
      %s144 = sphi 0, %s146
      %s147 = sphi 0, %s144
      %s148 = sphi 0, %s147
      %s164 = sphi 0, %s148
      %s170 = sphi 0, %s172
      %s173 = sphi 0, %s170
      %s174 = sphi 0, %s173
      %s190 = sphi 0, %s174
      %s196 = sphi 0, %s198
      %s199 = sphi 0, %s196
      %s200 = sphi 0, %s199
      %s216 = sphi 0, %s200
      %s222 = sphi 0, %s224
      %s225 = sphi 0, %s222
      %s226 = sphi 0, %s225
      %s242 = sphi 0, %s226
      %s248 = sphi 0, %s250
      %s251 = sphi 0, %s248
      %s252 = sphi 0, %s251
      %s268 = sphi 0, %s252
      %s274 = sphi 0, %s276
      %s277 = sphi 0, %s274
      %s278 = sphi 0, %s277
      %s294 = sphi 0, %s278
      %s300 = sphi 0, %s302
      %s303 = sphi 0, %s300
      %s304 = sphi 0, %s303
      %s320 = sphi 0, %s304
      %s324 = sphi 0, %s324
      %s326 = sphi 0, %s324
      %s327 = sphi 0, %s326
      %s341 = sphi 0, %s327
      %s345 = sphi 0, %s345
      %s347 = sphi 0, %s345
      %s348 = sphi 0, %s347
      %s362 = sphi 0, %s348
      %s368 = sphi 0, %s370
      %s371 = sphi 0, %s368
      %s372 = sphi 0, %s371
      %s388 = sphi 0, %s372
    $region4: #{tpu_custom_call.1} parent=1 // loop_header_branch
      %26 = sbr.rel (%p24) target = $region8
    $region5: #{tpu_custom_call.1} parent=1 // loop_body
      %s28 = ssub.s32 %s23, 1
      %s29 = ssub.s32 %s23, 2
      %s36 = sadd.s32 1, %s31
      %p37 = scmp.ge.s32.totalorder %s36, 2
      %s38 = scalar_select %p37, 0, %s36
      %s39 = sadd.s32 1, %s30
      %s40 = scalar_select %p37, %s39, %s30
      %p41 = scmp.ge.s32.totalorder %s40, 1
      %s42 = scalar_select %p41, 0, %s40
      %s43 = ssub.s32 %s30, %s42
      %p44 = scmp.eq.s32.totalorder %s43, 0
      %s46 = sadd.s32 %s45, 1
      %s47 = scalar_select %p44, %s45, %s46
      %p50 = pneg %p44
      %p51 = scmp.eq.s32.totalorder %s23, 1
      %p52 = por %p50, %p51
      %p53 = scmp.ne.s32.totalorder %s45, %s48
      %p54 = scmp.eq.s32.totalorder %s23, 0
      %p55 = por %p53, %p54
      %p56 = scmp.ne.s32.totalorder %s45, %s48
      %p57 = scmp.eq.s32.totalorder %s28, 1
      %p58 = por %p56, %p57
      %p59 = scmp.ne.s32.totalorder %s48, %s49
      %p60 = scmp.eq.s32.totalorder %s28, 0
      %p61 = por %p59, %p60
      %p62 = scmp.ne.s32.totalorder %s48, %s49
      %p63 = scmp.eq.s32.totalorder %s29, 1
      %p64 = por %p62, %p63
      %p66 = scmp.ne.s32.totalorder %s49, %s65
      %p67 = scmp.eq.s32.totalorder %s29, 0
      %p68 = por %p66, %p67
      %s69 = ssub.s32 %s30, %s42
      %p70 = scmp.eq.s32.totalorder %s69, 0
      %s72 = sadd.s32 %s71, 1
      %s73 = scalar_select %p70, %s71, %s72
      %p76 = pneg %p70
      %p77 = scmp.eq.s32.totalorder %s23, 1
      %p78 = por %p76, %p77
      %p79 = scmp.ne.s32.totalorder %s71, %s74
      %p80 = scmp.eq.s32.totalorder %s23, 0
      %p81 = por %p79, %p80
      %p82 = scmp.ne.s32.totalorder %s71, %s74
      %p83 = scmp.eq.s32.totalorder %s28, 1
      %p84 = por %p82, %p83
      %p85 = scmp.ne.s32.totalorder %s74, %s75
      %p86 = scmp.eq.s32.totalorder %s28, 0
      %p87 = por %p85, %p86
      %p88 = scmp.ne.s32.totalorder %s74, %s75
      %p89 = scmp.eq.s32.totalorder %s29, 1
      %p90 = por %p88, %p89
      %p92 = scmp.ne.s32.totalorder %s75, %s91
      %p93 = scmp.eq.s32.totalorder %s29, 0
      %p94 = por %p92, %p93
      %s95 = ssub.s32 %s30, %s42
      %p96 = scmp.eq.s32.totalorder %s95, 0
      %s98 = sadd.s32 %s97, 1
      %s99 = scalar_select %p96, %s97, %s98
      %p102 = pneg %p96
      %p103 = scmp.eq.s32.totalorder %s23, 1
      %p104 = por %p102, %p103
      %p105 = scmp.ne.s32.totalorder %s97, %s100
      %p106 = scmp.eq.s32.totalorder %s23, 0
      %p107 = por %p105, %p106
      %p108 = scmp.ne.s32.totalorder %s97, %s100
      %p109 = scmp.eq.s32.totalorder %s28, 1
      %p110 = por %p108, %p109
      %p111 = scmp.ne.s32.totalorder %s100, %s101
      %p112 = scmp.eq.s32.totalorder %s28, 0
      %p113 = por %p111, %p112
      %p114 = scmp.ne.s32.totalorder %s100, %s101
      %p115 = scmp.eq.s32.totalorder %s29, 1
      %p116 = por %p114, %p115
      %p118 = scmp.ne.s32.totalorder %s101, %s117
      %p119 = scmp.eq.s32.totalorder %s29, 0
      %p120 = por %p118, %p119
      %s122 = sadd.s32 %s121, 1
      %p125 = scmp.eq.s32.totalorder %s23, 1
      %p126 = scmp.ne.s32.totalorder %s121, %s123
      %p127 = scmp.eq.s32.totalorder %s23, 0
      %p128 = por %p126, %p127
      %p129 = scmp.ne.s32.totalorder %s121, %s123
      %p130 = scmp.eq.s32.totalorder %s28, 1
      %p131 = por %p129, %p130
      %p132 = scmp.ne.s32.totalorder %s123, %s124
      %p133 = scmp.eq.s32.totalorder %s28, 0
      %p134 = por %p132, %p133
      %p135 = scmp.ne.s32.totalorder %s123, %s124
      %p136 = scmp.eq.s32.totalorder %s29, 1
      %p137 = por %p135, %p136
      %p139 = scmp.ne.s32.totalorder %s124, %s138
      %p140 = scmp.eq.s32.totalorder %s29, 0
      %p141 = por %p139, %p140
      %s142 = ssub.s32 %s31, %s38
      %p143 = scmp.eq.s32.totalorder %s142, 0
      %s145 = sadd.s32 %s144, 1
      %s146 = scalar_select %p143, %s144, %s145
      %p149 = pneg %p143
      %p150 = scmp.eq.s32.totalorder %s23, 1
      %p151 = por %p149, %p150
      %p152 = scmp.ne.s32.totalorder %s144, %s147
      %p153 = scmp.eq.s32.totalorder %s23, 0
      %p154 = por %p152, %p153
      %p155 = scmp.ne.s32.totalorder %s144, %s147
      %p156 = scmp.eq.s32.totalorder %s28, 1
      %p157 = por %p155, %p156
      %p158 = scmp.ne.s32.totalorder %s147, %s148
      %p159 = scmp.eq.s32.totalorder %s28, 0
      %p160 = por %p158, %p159
      %p161 = scmp.ne.s32.totalorder %s147, %s148
      %p162 = scmp.eq.s32.totalorder %s29, 1
      %p163 = por %p161, %p162
      %p165 = scmp.ne.s32.totalorder %s148, %s164
      %p166 = scmp.eq.s32.totalorder %s29, 0
      %p167 = por %p165, %p166
      %s168 = ssub.s32 %s31, %s38
      %p169 = scmp.eq.s32.totalorder %s168, 0
      %s171 = sadd.s32 %s170, 1
      %s172 = scalar_select %p169, %s170, %s171
      %p175 = pneg %p169
      %p176 = scmp.eq.s32.totalorder %s23, 1
      %p177 = por %p175, %p176
      %p178 = scmp.ne.s32.totalorder %s170, %s173
      %p179 = scmp.eq.s32.totalorder %s23, 0
      %p180 = por %p178, %p179
      %p181 = scmp.ne.s32.totalorder %s170, %s173
      %p182 = scmp.eq.s32.totalorder %s28, 1
      %p183 = por %p181, %p182
      %p184 = scmp.ne.s32.totalorder %s173, %s174
      %p185 = scmp.eq.s32.totalorder %s28, 0
      %p186 = por %p184, %p185
      %p187 = scmp.ne.s32.totalorder %s173, %s174
      %p188 = scmp.eq.s32.totalorder %s29, 1
      %p189 = por %p187, %p188
      %p191 = scmp.ne.s32.totalorder %s174, %s190
      %p192 = scmp.eq.s32.totalorder %s29, 0
      %p193 = por %p191, %p192
      %s194 = ssub.s32 %s31, %s38
      %p195 = scmp.eq.s32.totalorder %s194, 0
      %s197 = sadd.s32 %s196, 1
      %s198 = scalar_select %p195, %s196, %s197
      %p201 = pneg %p195
      %p202 = scmp.eq.s32.totalorder %s23, 1
      %p203 = por %p201, %p202
      %p204 = scmp.ne.s32.totalorder %s196, %s199
      %p205 = scmp.eq.s32.totalorder %s23, 0
      %p206 = por %p204, %p205
      %p207 = scmp.ne.s32.totalorder %s196, %s199
      %p208 = scmp.eq.s32.totalorder %s28, 1
      %p209 = por %p207, %p208
      %p210 = scmp.ne.s32.totalorder %s199, %s200
      %p211 = scmp.eq.s32.totalorder %s28, 0
      %p212 = por %p210, %p211
      %p213 = scmp.ne.s32.totalorder %s199, %s200
      %p214 = scmp.eq.s32.totalorder %s29, 1
      %p215 = por %p213, %p214
      %p217 = scmp.ne.s32.totalorder %s200, %s216
      %p218 = scmp.eq.s32.totalorder %s29, 0
      %p219 = por %p217, %p218
      %s220 = ssub.s32 %s31, %s38
      %p221 = scmp.eq.s32.totalorder %s220, 0
      %s223 = sadd.s32 %s222, 1
      %s224 = scalar_select %p221, %s222, %s223
      %p227 = pneg %p221
      %p228 = scmp.eq.s32.totalorder %s23, 1
      %p229 = por %p227, %p228
      %p230 = scmp.ne.s32.totalorder %s222, %s225
      %p231 = scmp.eq.s32.totalorder %s23, 0
      %p232 = por %p230, %p231
      %p233 = scmp.ne.s32.totalorder %s222, %s225
      %p234 = scmp.eq.s32.totalorder %s28, 1
      %p235 = por %p233, %p234
      %p236 = scmp.ne.s32.totalorder %s225, %s226
      %p237 = scmp.eq.s32.totalorder %s28, 0
      %p238 = por %p236, %p237
      %p239 = scmp.ne.s32.totalorder %s225, %s226
      %p240 = scmp.eq.s32.totalorder %s29, 1
      %p241 = por %p239, %p240
      %p243 = scmp.ne.s32.totalorder %s226, %s242
      %p244 = scmp.eq.s32.totalorder %s29, 0
      %p245 = por %p243, %p244
      %s246 = ssub.s32 %s31, %s38
      %p247 = scmp.eq.s32.totalorder %s246, 0
      %s249 = sadd.s32 %s248, 1
      %s250 = scalar_select %p247, %s248, %s249
      %p253 = pneg %p247
      %p254 = scmp.eq.s32.totalorder %s23, 1
      %p255 = por %p253, %p254
      %p256 = scmp.ne.s32.totalorder %s248, %s251
      %p257 = scmp.eq.s32.totalorder %s23, 0
      %p258 = por %p256, %p257
      %p259 = scmp.ne.s32.totalorder %s248, %s251
      %p260 = scmp.eq.s32.totalorder %s28, 1
      %p261 = por %p259, %p260
      %p262 = scmp.ne.s32.totalorder %s251, %s252
      %p263 = scmp.eq.s32.totalorder %s28, 0
      %p264 = por %p262, %p263
      %p265 = scmp.ne.s32.totalorder %s251, %s252
      %p266 = scmp.eq.s32.totalorder %s29, 1
      %p267 = por %p265, %p266
      %p269 = scmp.ne.s32.totalorder %s252, %s268
      %p270 = scmp.eq.s32.totalorder %s29, 0
      %p271 = por %p269, %p270
      %s272 = ssub.s32 %s31, %s38
      %p273 = scmp.eq.s32.totalorder %s272, 0
      %s275 = sadd.s32 %s274, 1
      %s276 = scalar_select %p273, %s274, %s275
      %p279 = pneg %p273
      %p280 = scmp.eq.s32.totalorder %s23, 1
      %p281 = por %p279, %p280
      %p282 = scmp.ne.s32.totalorder %s274, %s277
      %p283 = scmp.eq.s32.totalorder %s23, 0
      %p284 = por %p282, %p283
      %p285 = scmp.ne.s32.totalorder %s274, %s277
      %p286 = scmp.eq.s32.totalorder %s28, 1
      %p287 = por %p285, %p286
      %p288 = scmp.ne.s32.totalorder %s277, %s278
      %p289 = scmp.eq.s32.totalorder %s28, 0
      %p290 = por %p288, %p289
      %p291 = scmp.ne.s32.totalorder %s277, %s278
      %p292 = scmp.eq.s32.totalorder %s29, 1
      %p293 = por %p291, %p292
      %p295 = scmp.ne.s32.totalorder %s278, %s294
      %p296 = scmp.eq.s32.totalorder %s29, 0
      %p297 = por %p295, %p296
      %s298 = ssub.s32 %s31, %s38
      %p299 = scmp.eq.s32.totalorder %s298, 0
      %s301 = sadd.s32 %s300, 1
      %s302 = scalar_select %p299, %s300, %s301
      %p305 = pneg %p299
      %p306 = scmp.eq.s32.totalorder %s23, 1
      %p307 = por %p305, %p306
      %p308 = scmp.ne.s32.totalorder %s300, %s303
      %p309 = scmp.eq.s32.totalorder %s23, 0
      %p310 = por %p308, %p309
      %p311 = scmp.ne.s32.totalorder %s300, %s303
      %p312 = scmp.eq.s32.totalorder %s28, 1
      %p313 = por %p311, %p312
      %p314 = scmp.ne.s32.totalorder %s303, %s304
      %p315 = scmp.eq.s32.totalorder %s28, 0
      %p316 = por %p314, %p315
      %p317 = scmp.ne.s32.totalorder %s303, %s304
      %p318 = scmp.eq.s32.totalorder %s29, 1
      %p319 = por %p317, %p318
      %p321 = scmp.ne.s32.totalorder %s304, %s320
      %p322 = scmp.eq.s32.totalorder %s29, 0
      %p323 = por %p321, %p322
      %s325 = sadd.s32 %s324, 1
      %p328 = scmp.eq.s32.totalorder %s23, 1
      %p329 = scmp.ne.s32.totalorder %s324, %s326
      %p330 = scmp.eq.s32.totalorder %s23, 0
      %p331 = por %p329, %p330
      %p332 = scmp.ne.s32.totalorder %s324, %s326
      %p333 = scmp.eq.s32.totalorder %s28, 1
      %p334 = por %p332, %p333
      %p335 = scmp.ne.s32.totalorder %s326, %s327
      %p336 = scmp.eq.s32.totalorder %s28, 0
      %p337 = por %p335, %p336
      %p338 = scmp.ne.s32.totalorder %s326, %s327
      %p339 = scmp.eq.s32.totalorder %s29, 1
      %p340 = por %p338, %p339
      %p342 = scmp.ne.s32.totalorder %s327, %s341
      %p343 = scmp.eq.s32.totalorder %s29, 0
      %p344 = por %p342, %p343
      %s346 = sadd.s32 %s345, 1
      %p349 = scmp.eq.s32.totalorder %s23, 1
      %p350 = scmp.ne.s32.totalorder %s345, %s347
      %p351 = scmp.eq.s32.totalorder %s23, 0
      %p352 = por %p350, %p351
      %p353 = scmp.ne.s32.totalorder %s345, %s347
      %p354 = scmp.eq.s32.totalorder %s28, 1
      %p355 = por %p353, %p354
      %p356 = scmp.ne.s32.totalorder %s347, %s348
      %p357 = scmp.eq.s32.totalorder %s28, 0
      %p358 = por %p356, %p357
      %p359 = scmp.ne.s32.totalorder %s347, %s348
      %p360 = scmp.eq.s32.totalorder %s29, 1
      %p361 = por %p359, %p360
      %p363 = scmp.ne.s32.totalorder %s348, %s362
      %p364 = scmp.eq.s32.totalorder %s29, 0
      %p365 = por %p363, %p364
      %s366 = ssub.s32 %s30, %s42
      %p367 = scmp.eq.s32.totalorder %s366, 0
      %s369 = sadd.s32 %s368, 1
      %s370 = scalar_select %p367, %s368, %s369
      %p373 = pneg %p367
      %p374 = scmp.eq.s32.totalorder %s23, 1
      %p375 = por %p373, %p374
      %p376 = scmp.ne.s32.totalorder %s368, %s371
      %p377 = scmp.eq.s32.totalorder %s23, 0
      %p378 = por %p376, %p377
      %p379 = scmp.ne.s32.totalorder %s368, %s371
      %p380 = scmp.eq.s32.totalorder %s28, 1
      %p381 = por %p379, %p380
      %p382 = scmp.ne.s32.totalorder %s371, %s372
      %p383 = scmp.eq.s32.totalorder %s28, 0
      %p384 = por %p382, %p383
      %p385 = scmp.ne.s32.totalorder %s371, %s372
      %p386 = scmp.eq.s32.totalorder %s29, 1
      %p387 = por %p385, %p386
      %p389 = scmp.ne.s32.totalorder %s372, %s388
      %p390 = scmp.eq.s32.totalorder %s29, 0
      %p391 = por %p389, %p390
      %p392 = scmp.le.s32.totalorder 1, %s23
      %p393 = scmp.lt.s32.totalorder %s23, 3
      %p394 = pnand %p392, %p393
      %p395 = pneg %p394
      // Predicated region
      $region9: #{tpu_custom_call.1} parent=5 // pred_check
        _
      $region10: #{tpu_custom_call.1} parent=5 // pred_check_branch
        %397 = sbr.rel (%p394) target = $region12
      $region11: #{tpu_custom_call.1} parent=5 // pred_region
        %s398 = ssub.s32 %s23, 1
        // Predicated region
        $region13: #{tpu_custom_call.1} parent=11 // pred_check
          %p399 = pneg %p61
        $region14: #{tpu_custom_call.1} parent=11 // pred_check_branch
          %401 = sbr.rel (%p399) target = $region16
        $region15: #{tpu_custom_call.1} parent=11 // pred_region
          %p402 = scmp.lt.s32.totalorder %s32, 0
          %s403 = scalar_select %p402, %s32, 0
          %s404 = smul.addr %s403, 8
          %s405 = scalar_lea.vmem %s0, %s404
        $region16: #{tpu_custom_call.1} parent=11 // pred_fallthru
          _
        // Predicated region
        $region17: #{tpu_custom_call.1} parent=11 // pred_check
          %p406 = pneg %p87
        $region18: #{tpu_custom_call.1} parent=11 // pred_check_branch
          %408 = sbr.rel (%p406) target = $region20
        $region19: #{tpu_custom_call.1} parent=11 // pred_region
          %p409 = scmp.lt.s32.totalorder %s32, 0
          %s410 = scalar_select %p409, %s32, 0
          %s411 = smul.addr %s410, 8
          %s412 = scalar_lea.vmem %s1, %s411
        $region20: #{tpu_custom_call.1} parent=11 // pred_fallthru
          _
        // Predicated region
        $region21: #{tpu_custom_call.1} parent=11 // pred_check
          %p413 = pneg %p113
        $region22: #{tpu_custom_call.1} parent=11 // pred_check_branch
          %415 = sbr.rel (%p413) target = $region24
        $region23: #{tpu_custom_call.1} parent=11 // pred_region
          %p416 = scmp.lt.s32.totalorder %s32, 0
          %s417 = scalar_select %p416, %s32, 0
          %s418 = smul.addr %s417, 8
          %s419 = scalar_lea.vmem %s2, %s418
        $region24: #{tpu_custom_call.1} parent=11 // pred_fallthru
          _
        // Predicated region
        $region25: #{tpu_custom_call.1} parent=11 // pred_check
          %p420 = pneg %p134
        $region26: #{tpu_custom_call.1} parent=11 // pred_check_branch
          %422 = sbr.rel (%p420) target = $region28
        $region27: #{tpu_custom_call.1} parent=11 // pred_region
          _
        $region28: #{tpu_custom_call.1} parent=11 // pred_fallthru
          _
        // Predicated region
        $region29: #{tpu_custom_call.1} parent=11 // pred_check
          %p423 = pneg %p337
        $region30: #{tpu_custom_call.1} parent=11 // pred_check_branch
          %425 = sbr.rel (%p423) target = $region32
        $region31: #{tpu_custom_call.1} parent=11 // pred_region
          _
        $region32: #{tpu_custom_call.1} parent=11 // pred_fallthru
          _
        // Predicated region
        $region33: #{tpu_custom_call.1} parent=11 // pred_check
          %p426 = pneg %p358
        $region34: #{tpu_custom_call.1} parent=11 // pred_check_branch
          %428 = sbr.rel (%p426) target = $region36
        $region35: #{tpu_custom_call.1} parent=11 // pred_region
          _
        $region36: #{tpu_custom_call.1} parent=11 // pred_fallthru
          _
      $region12: #{tpu_custom_call.1} parent=5 // pred_fallthru
        _
      %p429 = scmp.lt.s32.totalorder %s23, 2
      // Predicated region
      $region37: #{tpu_custom_call.1} parent=5 // pred_check
        %p430 = pneg %p429
      $region38: #{tpu_custom_call.1} parent=5 // pred_check_branch
        %432 = sbr.rel (%p430) target = $region40
      $region39: #{tpu_custom_call.1} parent=5 // pred_region
        // Predicated region
        $region41: #{tpu_custom_call.1} parent=39 // pred_check
          %p433 = pneg %p154
        $region42: #{tpu_custom_call.1} parent=39 // pred_check_branch
          %435 = sbr.rel (%p433) target = $region44
        $region43: #{tpu_custom_call.1} parent=39 // pred_region
          %p436 = scmp.lt.s32.totalorder %s31, 1
          %s437 = scalar_select %p436, %s31, 1
          %s438 = smul.addr %s437, 8
          %s439 = scalar_lea.vmem %s4, %s438
        $region44: #{tpu_custom_call.1} parent=39 // pred_fallthru
          _
        // Predicated region
        $region45: #{tpu_custom_call.1} parent=39 // pred_check
          %p440 = pneg %p180
        $region46: #{tpu_custom_call.1} parent=39 // pred_check_branch
          %442 = sbr.rel (%p440) target = $region48
        $region47: #{tpu_custom_call.1} parent=39 // pred_region
          %p443 = scmp.lt.s32.totalorder %s31, 1
          %s444 = scalar_select %p443, %s31, 1
          %s445 = scalar_lea.vmem %s5, %s444
        $region48: #{tpu_custom_call.1} parent=39 // pred_fallthru
          _
        // Predicated region
        $region49: #{tpu_custom_call.1} parent=39 // pred_check
          %p446 = pneg %p206
        $region50: #{tpu_custom_call.1} parent=39 // pred_check_branch
          %448 = sbr.rel (%p446) target = $region52
        $region51: #{tpu_custom_call.1} parent=39 // pred_region
          %p449 = scmp.lt.s32.totalorder %s31, 1
          %s450 = scalar_select %p449, %s31, 1
          %s451 = scalar_lea.vmem %s6, %s450
        $region52: #{tpu_custom_call.1} parent=39 // pred_fallthru
          _
        // Predicated region
        $region53: #{tpu_custom_call.1} parent=39 // pred_check
          %p452 = pneg %p232
        $region54: #{tpu_custom_call.1} parent=39 // pred_check_branch
          %454 = sbr.rel (%p452) target = $region56
        $region55: #{tpu_custom_call.1} parent=39 // pred_region
          %s455 = sand.u32 %s222, 1
          %s456 = scalar_lea.sflag [#allocation8], %s455
          %s457 = sand.u32 %s222, 1
          %s458 = smul.addr %s457, 32
          %s459 = scalar_lea.vmem [#allocation7], %s458
          %s461 = ssub.s32 512, 512
          %462 = vsyncadd %s456, %s461
          %s463 = smul.addr %s31, 4
          %s464 = smul.addr %s463, 128
          %s465 = scalar_lea.hbm %s7, %s464
          %s466 = sshll.u32 %s459, 4
          %s467 = int_to_ptr.vmem [resolvable:$true] %s466
          %472 = dma.hbm_to_vmem [thread:$0]  %s465, 512, %s467, %s456, 128, 128, 8
        $region56: #{tpu_custom_call.1} parent=39 // pred_fallthru
          _
        // Predicated region
        $region57: #{tpu_custom_call.1} parent=39 // pred_check
          %p473 = pneg %p258
        $region58: #{tpu_custom_call.1} parent=39 // pred_check_branch
          %475 = sbr.rel (%p473) target = $region60
        $region59: #{tpu_custom_call.1} parent=39 // pred_region
          %p476 = scmp.lt.s32.totalorder %s31, 1
          %s477 = scalar_select %p476, %s31, 1
          %s478 = smul.addr %s477, 4
          %s479 = scalar_lea.vmem %s8, %s478
        $region60: #{tpu_custom_call.1} parent=39 // pred_fallthru
          _
        // Predicated region
        $region61: #{tpu_custom_call.1} parent=39 // pred_check
          %p480 = pneg %p284
        $region62: #{tpu_custom_call.1} parent=39 // pred_check_branch
          %482 = sbr.rel (%p480) target = $region64
        $region63: #{tpu_custom_call.1} parent=39 // pred_region
          %p483 = scmp.lt.s32.totalorder %s31, 1
          %s484 = scalar_select %p483, %s31, 1
          %s485 = smul.addr %s484, 16
          %s486 = smul.addr %s485, 8
          %s487 = scalar_lea.vmem %s9, %s486
        $region64: #{tpu_custom_call.1} parent=39 // pred_fallthru
          _
        // Predicated region
        $region65: #{tpu_custom_call.1} parent=39 // pred_check
          %p488 = pneg %p310
        $region66: #{tpu_custom_call.1} parent=39 // pred_check_branch
          %490 = sbr.rel (%p488) target = $region68
        $region67: #{tpu_custom_call.1} parent=39 // pred_region
          %p491 = scmp.lt.s32.totalorder %s31, 1
          %s492 = scalar_select %p491, %s31, 1
          %s493 = scalar_lea.vmem %s10, %s492
        $region68: #{tpu_custom_call.1} parent=39 // pred_fallthru
          _
      $region40: #{tpu_custom_call.1} parent=5 // pred_fallthru
        _
      %p494 = scmp.le.s32.totalorder 1, %s23
      %p495 = scmp.lt.s32.totalorder %s23, 3
      %p496 = pnand %p494, %p495
      %p497 = pneg %p496
      // Predicated region
      $region69: #{tpu_custom_call.1} parent=5 // pred_check
        _
      $region70: #{tpu_custom_call.1} parent=5 // pred_check_branch
        %499 = sbr.rel (%p496) target = $region72
      $region71: #{tpu_custom_call.1} parent=5 // pred_region
        %s500 = ssub.s32 %s23, 1
        %s501 = sand.u32 %s225, 1
        %s502 = scalar_lea.sflag [#allocation8], %s501
        %s503 = sand.u32 %s225, 1
        %s504 = smul.addr %s503, 32
        %s505 = scalar_lea.vmem [#allocation7], %s504
        // Predicated region
        $region73: #{tpu_custom_call.1} parent=71 // pred_check
          %p506 = pneg %p238
        $region74: #{tpu_custom_call.1} parent=71 // pred_check_branch
          %508 = sbr.rel (%p506) target = $region76
        $region75: #{tpu_custom_call.1} parent=71 // pred_region
          %509 = dma.done %s502, 512
        $region76: #{tpu_custom_call.1} parent=71 // pred_fallthru
          _
        %p510 = scmp.lt.s32.totalorder %s32, 0
        %s511 = scalar_select %p510, %s32, 0
        %s512 = smul.addr %s511, 8
        %s513 = scalar_lea.vmem %s0, %s512
        %p514 = pneg %p61
        %p515 = pneg %p58
        %p516 = scmp.lt.s32.totalorder %s32, 0
        %s517 = scalar_select %p516, %s32, 0
        %s518 = smul.addr %s517, 8
        %s519 = scalar_lea.vmem %s1, %s518
        %p520 = pneg %p87
        %p521 = pneg %p84
        %p522 = scmp.lt.s32.totalorder %s32, 0
        %s523 = scalar_select %p522, %s32, 0
        %s524 = smul.addr %s523, 8
        %s525 = scalar_lea.vmem %s2, %s524
        %p526 = pneg %p113
        %p527 = pneg %p110
        %p528 = pneg %p134
        %p529 = pneg %p131
        %p530 = scmp.lt.s32.totalorder %s33, 1
        %s531 = scalar_select %p530, %s33, 1
        %s532 = smul.addr %s531, 8
        %s533 = scalar_lea.vmem %s4, %s532
        %p534 = pneg %p160
        %p535 = pneg %p157
        %p536 = scmp.lt.s32.totalorder %s33, 1
        %s537 = scalar_select %p536, %s33, 1
        %s538 = scalar_lea.vmem %s5, %s537
        %p539 = pneg %p186
        %p540 = pneg %p183
        %p541 = scmp.lt.s32.totalorder %s33, 1
        %s542 = scalar_select %p541, %s33, 1
        %s543 = scalar_lea.vmem %s6, %s542
        %p544 = pneg %p212
        %p545 = pneg %p209
        %s546 = sand.u32 %s225, 1
        %s547 = scalar_lea.sflag [#allocation8], %s546
        %s548 = sand.u32 %s225, 1
        %s549 = smul.addr %s548, 32
        %s550 = scalar_lea.vmem [#allocation7], %s549
        %p551 = pneg %p238
        %p552 = pneg %p235
        %p553 = scmp.lt.s32.totalorder %s33, 1
        %s554 = scalar_select %p553, %s33, 1
        %s555 = smul.addr %s554, 4
        %s556 = scalar_lea.vmem %s8, %s555
        %p557 = pneg %p264
        %p558 = pneg %p261
        %p559 = scmp.lt.s32.totalorder %s33, 1
        %s560 = scalar_select %p559, %s33, 1
        %s561 = smul.addr %s560, 16
        %s562 = smul.addr %s561, 8
        %s563 = scalar_lea.vmem %s9, %s562
        %p564 = pneg %p290
        %p565 = pneg %p287
        %p566 = scmp.lt.s32.totalorder %s33, 1
        %s567 = scalar_select %p566, %s33, 1
        %s568 = scalar_lea.vmem %s10, %s567
        %p569 = pneg %p316
        %p570 = pneg %p313
        %p571 = pneg %p337
        %p572 = pneg %p334
        %p573 = pneg %p358
        %p574 = pneg %p355
        %p575 = pneg %p384
        %p576 = pneg %p381
        %p577 = scmp.lt.s32.totalorder %s32, 0
        %s578 = scalar_select %p577, %s32, 0
        %s579 = smul.addr %s578, 8
        %s580 = scalar_lea.vmem %s0, %s579
        %p581 = scmp.lt.s32.totalorder %s32, 0
        %s582 = scalar_select %p581, %s32, 0
        %s583 = smul.addr %s582, 8
        %s584 = scalar_lea.vmem %s1, %s583
        %p585 = scmp.lt.s32.totalorder %s32, 0
        %s586 = scalar_select %p585, %s32, 0
        %s587 = smul.addr %s586, 8
        %s588 = scalar_lea.vmem %s2, %s587
        %p589 = scmp.lt.s32.totalorder %s33, 1
        %s590 = scalar_select %p589, %s33, 1
        %s591 = smul.addr %s590, 8
        %s592 = scalar_lea.vmem %s4, %s591
        %p593 = scmp.lt.s32.totalorder %s33, 1
        %s594 = scalar_select %p593, %s33, 1
        %s595 = scalar_lea.vmem %s5, %s594
        %p596 = scmp.lt.s32.totalorder %s33, 1
        %s597 = scalar_select %p596, %s33, 1
        %s598 = scalar_lea.vmem %s6, %s597
        %p599 = scmp.lt.s32.totalorder %s33, 1
        %s600 = scalar_select %p599, %s33, 1
        %s601 = smul.addr %s600, 4
        %s602 = scalar_lea.vmem %s8, %s601
        %p603 = scmp.lt.s32.totalorder %s33, 1
        %s604 = scalar_select %p603, %s33, 1
        %s605 = smul.addr %s604, 16
        %s606 = smul.addr %s605, 8
        %s607 = scalar_lea.vmem %s9, %s606
        %p608 = scmp.lt.s32.totalorder %s33, 1
        %s609 = scalar_select %p608, %s33, 1
        %s610 = scalar_lea.vmem %s10, %s609
        %p611 = scmp.eq.s32.totalorder %s33, 0
        // Predicated region
        $region77: #{tpu_custom_call.1} parent=71 // pred_check
          %p612 = pneg %p611
        $region78: #{tpu_custom_call.1} parent=71 // pred_check_branch
          %614 = sbr.rel (%p612) target = $region80
        $region79: #{tpu_custom_call.1} parent=71 // pred_region
          %v615 = vld [vmem:[%s580] sm:$0xff]
          %vm616 = vcmask 326656
          %v617 = vsel %vm616, %v615, 0.0
          %618 = vadd.xlane.f32.xlu0 %v617
          %v619 = vpop.xlane.xlu0 %618
          %v620 = vrcp.pop 40.0
          %v621 = vmul.f32 %v619, %v620
          %v622 = vsub.f32 %v615, %v621
          %v623 = vmul.f32 %v622, %v622
          %v624 = vsel %vm616, %v623, 0.0
          %625 = vadd.xlane.f32.xlu0 %v624
          %v626 = vpop.xlane.xlu0 %625
          %v627 = vmul.f32 %v626, %v620
          %v628 = vadd.f32 %v627, 1e-05
          %v629 = vrsqrt.pop %v628
          %v630 = vmul.f32 %v628, %v629
          %vm631 = vcmp.eq.f32.partialorder %v628, inf
          %v632 = vsel %vm631, %v628, %v630
          %vm633 = vcmp.eq.f32.partialorder %v628, 0.0
          %v634 = vand.u32 %v628, 2147483648
          %v635 = vsel %vm633, %v634, %v632
          %vm636 = vcmask 7168
          %637 = vst.msk [vmem:[#allocation4] sm:$0xff] %vm636, %v621
          %638 = vst.msk [vmem:[#allocation5] sm:$0xff] %vm636, %v635
          %v639 = vrcp.pop %v635
          %v640 = vmul.f32 %v622, %v639
          %v641 = vld [vmem:[%s584] sm:$0xff]
          %643 = vset.pattern.permute.xlu0 0
          %644 = vperm.xlu0 %643, %v641
          %v645 = vpop.permute.xlu0 %644
          %v647 = vmul.f32 %v640, %v645
          %v648 = vld [vmem:[%s588] sm:$0xff]
          %650 = vset.pattern.permute.xlu0 0
          %651 = vperm.xlu0 %650, %v648
          %v652 = vpop.permute.xlu0 %651
          %v654 = vadd.f32 %v647, %v652
          %656 = vrot.lane.b32.xlu0 %v654, 1
          %v657 = vpop.permute.xlu0 %656
          %659 = vrot.lane.b32.xlu0 %v654, 2
          %v660 = vpop.permute.xlu0 %659
          %662 = vrot.lane.b32.xlu0 %v654, 3
          %v663 = vpop.permute.xlu0 %662
          %665 = vrot.lane.b32.xlu0 %v654, 4
          %v666 = vpop.permute.xlu0 %665
          %v668 = vsel %vm616, %v654, %v657
          %vm669 = vcmask 334848
          %v670 = vsel %vm669, %v668, %v660
          %vm671 = vcmask 343040
          %v672 = vsel %vm671, %v670, %v663
          %vm673 = vcmask 351232
          %v674 = vsel %vm673, %v672, %v666
          %v675 = vld [vmem:[%s3] sm:$0xff]
          %v676 = vld [vmem:[%s3 + $0x8] sm:$0x3]
          %vm677 = vcmask 64512
          %678 = vst.msk [vmem:[#allocation2] sm:$0xff] %vm677, %v674
          %v679 = vlaneseq
          %v680 = vshrl.u32 %v679, 7
          %v681 = vsub.s32 0, %v680
          %v682 = vrot.slane %v675, %v681
          %vm683 = vcmask 261120
          %684 = vst.msk [vmem:[#allocation3] sm:$0xff] %vm683, %v682
          %686 = vrot.lane.b32.xlu0 %v674, 124
          %v687 = vpop.permute.xlu0 %686
          %689 = vst.msk [vmem:[#allocation2 + $0x8] sm:$0xff] %vm677, %v687
          %v690 = vlaneseq
          %v691 = vshrl.u32 %v690, 7
          %v692 = vsub.s32 1, %v691
          %v693 = vrot.slane %v675, %v692
          %694 = vst.msk [vmem:[#allocation3 + $0x8] sm:$0xff] %vm683, %v693
          %695 = vrot.lane.b32.xlu0 %v674, 120
          %v696 = vpop.permute.xlu0 %695
          %698 = vst.msk [vmem:[#allocation2 + $0x10] sm:$0xff] %vm677, %v696
          %v699 = vlaneseq
          %v700 = vshrl.u32 %v699, 7
          %v701 = vsub.s32 2, %v700
          %v702 = vrot.slane %v675, %v701
          %703 = vst.msk [vmem:[#allocation3 + $0x10] sm:$0xff] %vm683, %v702
          %704 = vrot.lane.b32.xlu0 %v674, 116
          %v705 = vpop.permute.xlu0 %704
          %707 = vst.msk [vmem:[#allocation2 + $0x18] sm:$0xff] %vm677, %v705
          %v708 = vlaneseq
          %v709 = vshrl.u32 %v708, 7
          %v710 = vsub.s32 3, %v709
          %v711 = vrot.slane %v675, %v710
          %712 = vst.msk [vmem:[#allocation3 + $0x18] sm:$0xff] %vm683, %v711
          %713 = vrot.lane.b32.xlu0 %v674, 112
          %v714 = vpop.permute.xlu0 %713
          %716 = vst.msk [vmem:[#allocation2 + $0x20] sm:$0xff] %vm677, %v714
          %v717 = vlaneseq
          %v718 = vshrl.u32 %v717, 7
          %v719 = vsub.s32 4, %v718
          %v720 = vrot.slane %v675, %v719
          %721 = vst.msk [vmem:[#allocation3 + $0x20] sm:$0xff] %vm683, %v720
          %722 = vrot.lane.b32.xlu0 %v674, 108
          %v723 = vpop.permute.xlu0 %722
          %725 = vst.msk [vmem:[#allocation2 + $0x28] sm:$0xff] %vm677, %v723
          %v726 = vlaneseq
          %v727 = vshrl.u32 %v726, 7
          %v728 = vsub.s32 5, %v727
          %v729 = vrot.slane %v675, %v728
          %730 = vst.msk [vmem:[#allocation3 + $0x28] sm:$0xff] %vm683, %v729
          %731 = vrot.lane.b32.xlu0 %v674, 104
          %v732 = vpop.permute.xlu0 %731
          %734 = vst.msk [vmem:[#allocation2 + $0x30] sm:$0xff] %vm677, %v732
          %v735 = vlaneseq
          %v736 = vshrl.u32 %v735, 7
          %v737 = vsub.s32 6, %v736
          %v738 = vrot.slane %v675, %v737
          %739 = vst.msk [vmem:[#allocation3 + $0x30] sm:$0xff] %vm683, %v738
          %740 = vrot.lane.b32.xlu0 %v674, 100
          %v741 = vpop.permute.xlu0 %740
          %743 = vst.msk [vmem:[#allocation2 + $0x38] sm:$0xff] %vm677, %v741
          %v744 = vlaneseq
          %v745 = vshrl.u32 %v744, 7
          %v746 = vsub.s32 7, %v745
          %v747 = vrot.slane %v675, %v746
          %748 = vst.msk [vmem:[#allocation3 + $0x38] sm:$0xff] %vm683, %v747
          %749 = vrot.lane.b32.xlu0 %v674, 96
          %v750 = vpop.permute.xlu0 %749
          %752 = vst.msk [vmem:[#allocation2 + $0x40] sm:$0xff] %vm677, %v750
          %v753 = vlaneseq
          %v754 = vshrl.u32 %v753, 7
          %v755 = vsub.s32 0, %v754
          %v756 = vrot.slane %v676, %v755
          %757 = vst.msk [vmem:[#allocation3 + $0x40] sm:$0xff] %vm683, %v756
          %758 = vrot.lane.b32.xlu0 %v674, 92
          %v759 = vpop.permute.xlu0 %758
          %761 = vst.msk [vmem:[#allocation2 + $0x48] sm:$0xff] %vm677, %v759
          %v762 = vlaneseq
          %v763 = vshrl.u32 %v762, 7
          %v764 = vsub.s32 1, %v763
          %v765 = vrot.slane %v676, %v764
          %766 = vst.msk [vmem:[#allocation3 + $0x48] sm:$0xff] %vm683, %v765
          %767 = vst.msk [vmem:[#allocation6] sm:$0xff] %vm683, 0.0
          %768 = vst.msk [vmem:[#allocation6 + $0x8] sm:$0xff] %vm683, 0.0
          %769 = vst.msk [vmem:[#allocation6 + $0x10] sm:$0xff] %vm683, 0.0
          %770 = vst.msk [vmem:[#allocation6 + $0x18] sm:$0xff] %vm683, 0.0
          %771 = vst.msk [vmem:[#allocation6 + $0x20] sm:$0xff] %vm683, 0.0
          %772 = vst.msk [vmem:[#allocation6 + $0x28] sm:$0xff] %vm683, 0.0
          %773 = vst.msk [vmem:[#allocation6 + $0x30] sm:$0xff] %vm683, 0.0
          %774 = vst.msk [vmem:[#allocation6 + $0x38] sm:$0xff] %vm683, 0.0
          %775 = vst.msk [vmem:[#allocation6 + $0x40] sm:$0xff] %vm683, 0.0
          %776 = vst.msk [vmem:[#allocation6 + $0x48] sm:$0xff] %vm683, 0.0
        $region80: #{tpu_custom_call.1} parent=71 // pred_fallthru
          _
        %v777 = vld [vmem:[#allocation2] sm:$0xff]
        %v778 = vld [vmem:[#allocation2 + $0x8] sm:$0xff]
        %v779 = vld [vmem:[#allocation2 + $0x10] sm:$0xff]
        %v780 = vld [vmem:[#allocation2 + $0x18] sm:$0xff]
        %v781 = vld [vmem:[#allocation2 + $0x20] sm:$0xff]
        %v782 = vld [vmem:[#allocation2 + $0x28] sm:$0xff]
        %v783 = vld [vmem:[#allocation2 + $0x30] sm:$0xff]
        %v784 = vld [vmem:[#allocation2 + $0x38] sm:$0xff]
        %v785 = vld [vmem:[#allocation2 + $0x40] sm:$0xff]
        %v786 = vld [vmem:[#allocation2 + $0x48] sm:$0xff]
        %v787 = vld [vmem:[%s592] sm:$0xff]
        %v788 = vld [vmem:[#allocation3] sm:$0xff]
        %v789 = vld [vmem:[#allocation3 + $0x8] sm:$0xff]
        %v790 = vld [vmem:[#allocation3 + $0x10] sm:$0xff]
        %v791 = vld [vmem:[#allocation3 + $0x18] sm:$0xff]
        %v792 = vld [vmem:[#allocation3 + $0x20] sm:$0xff]
        %v793 = vld [vmem:[#allocation3 + $0x28] sm:$0xff]
        %v794 = vld [vmem:[#allocation3 + $0x30] sm:$0xff]
        %v795 = vld [vmem:[#allocation3 + $0x38] sm:$0xff]
        %v796 = vld [vmem:[#allocation3 + $0x40] sm:$0xff]
        %v797 = vld [vmem:[#allocation3 + $0x48] sm:$0xff]
        %vm798 = vcmask 64512
        %v800 = vsel %vm798, %v777, 0
        %v803 = vsel %vm798, %v778, 0
        %v806 = vsel %vm798, %v779, 0
        %v809 = vsel %vm798, %v780, 0
        %v812 = vsel %vm798, %v781, 0
        %v815 = vsel %vm798, %v782, 0
        %v818 = vsel %vm798, %v783, 0
        %v821 = vsel %vm798, %v784, 0
        %v824 = vsel %vm798, %v785, 0
        %v827 = vsel %vm798, %v786, 0
        %829 = vmatprep.subr.mxu0 0.0
        %830 = vmatpush1.msra.mxu0 %v787
        %831 = vmatprep.subr.mxu0 0.0
        %832 = vmatpush1.msra.mxu0 0.0
        %833 = vmatprep.subr.mxu0 0.0
        %834 = vmatpush1.msra.mxu0 0.0
        %835 = vmatprep.subr.mxu0 0.0
        %836 = vmatpush1.msra.mxu0 0.0
        %837 = vmatprep.subr.mxu0 0.0
        %838 = vmatpush1.msra.mxu0 0.0
        %839 = vmatprep.subr.mxu0 0.0
        %840 = vmatpush1.msra.mxu0 0.0
        %841 = vmatprep.subr.mxu0 0.0
        %842 = vmatpush1.msra.mxu0 0.0
        %843 = vmatprep.subr.mxu0 0.0
        %844 = vmatpush1.msra.mxu0 0.0
        %845 = vmatprep.subr.mxu0 0.0
        %846 = vmatpush1.msra.mxu0 0.0
        %847 = vmatprep.subr.mxu0 0.0
        %848 = vmatpush1.msra.mxu0 0.0
        %849 = vmatprep.subr.mxu0 0.0
        %850 = vmatpush1.msra.mxu0 0.0
        %851 = vmatprep.subr.mxu0 0.0
        %852 = vmatpush1.msra.mxu0 0.0
        %853 = vmatprep.subr.mxu0 0.0
        %854 = vmatpush1.msra.mxu0 0.0
        %855 = vmatprep.subr.mxu0 0.0
        %856 = vmatpush1.msra.mxu0 0.0
        %857 = vmatprep.subr.mxu0 0.0
        %858 = vmatpush1.msra.mxu0 0.0
        %859 = vmatprep.subr.mxu0 0.0
        %860 = vmatpush1.msra.mxu0 0.0
        %861 = vmatprep.subr.mxu0 0.0
        %862 = vmatpush1.msra.mxu0 0.0
        %863 = vmatprep.subr.mxu0 0.0
        %864 = vmatpush1.msra.mxu0 0.0
        %865 = vmatprep.subr.mxu0 0.0
        %866 = vmatpush1.msra.mxu0 0.0
        %867 = vmatprep.subr.mxu0 0.0
        %868 = vmatpush1.msra.mxu0 0.0
        %869 = vmatprep.subr.mxu0 0.0
        %870 = vmatpush1.msra.mxu0 0.0
        %871 = vmatprep.subr.mxu0 0.0
        %872 = vmatpush1.msra.mxu0 0.0
        %873 = vmatprep.subr.mxu0 0.0
        %874 = vmatpush1.msra.mxu0 0.0
        %875 = vmatprep.subr.mxu0 0.0
        %876 = vmatpush1.msra.mxu0 0.0
        %877 = vmatprep.subr.mxu0 0.0
        %878 = vmatpush1.msra.mxu0 0.0
        %879 = vmatprep.subr.mxu0 0.0
        %880 = vmatpush1.msra.mxu0 0.0
        %881 = vmatprep.subr.mxu0 0.0
        %882 = vmatpush1.msra.mxu0 0.0
        %883 = vmatprep.subr.mxu0 0.0
        %884 = vmatpush1.msra.mxu0 0.0
        %885 = vmatprep.subr.mxu0 0.0
        %886 = vmatpush1.msra.mxu0 0.0
        %887 = vmatprep.subr.mxu0 0.0
        %888 = vmatpush1.msra.mxu0 0.0
        %889 = vmatprep.subr.mxu0 0.0
        %890 = vmatpush1.msra.mxu0 0.0
        %891 = vmatprep.subr.mxu0 0.0
        %892 = vmatpush1.msra.mxu0 0.0
        %893 = vmatprep.mubr.f32.mxu0 0.0
        %894 = vmatmul.mubr.f32.gmra.mrb[0].mxu0 %v800
        %v895 = vpop.f32.mrb[0].mxu0
        %v896 = vadd.f32 %v788, %v895
        %v897 = vpop.f32.mrb[0].mxu0
        %898 = vmatprep.mubr.f32.mxu0 0.0
        %899 = vmatmul.mubr.f32.gmra.mrb[0].mxu0 %v803
        %v900 = vpop.f32.mrb[0].mxu0
        %v901 = vadd.f32 %v789, %v900
        %v902 = vpop.f32.mrb[0].mxu0
        %903 = vmatprep.mubr.f32.mxu0 0.0
        %904 = vmatmul.mubr.f32.gmra.mrb[0].mxu0 %v806
        %v905 = vpop.f32.mrb[0].mxu0
        %v906 = vadd.f32 %v790, %v905
        %v907 = vpop.f32.mrb[0].mxu0
        %908 = vmatprep.mubr.f32.mxu0 0.0
        %909 = vmatmul.mubr.f32.gmra.mrb[0].mxu0 %v809
        %v910 = vpop.f32.mrb[0].mxu0
        %v911 = vadd.f32 %v791, %v910
        %v912 = vpop.f32.mrb[0].mxu0
        %913 = vmatprep.mubr.f32.mxu0 0.0
        %914 = vmatmul.mubr.f32.gmra.mrb[0].mxu0 %v812
        %v915 = vpop.f32.mrb[0].mxu0
        %v916 = vadd.f32 %v792, %v915
        %v917 = vpop.f32.mrb[0].mxu0
        %918 = vmatprep.mubr.f32.mxu0 0.0
        %919 = vmatmul.mubr.f32.gmra.mrb[0].mxu0 %v815
        %v920 = vpop.f32.mrb[0].mxu0
        %v921 = vadd.f32 %v793, %v920
        %v922 = vpop.f32.mrb[0].mxu0
        %923 = vmatprep.mubr.f32.mxu0 0.0
        %924 = vmatmul.mubr.f32.gmra.mrb[0].mxu0 %v818
        %v925 = vpop.f32.mrb[0].mxu0
        %v926 = vadd.f32 %v794, %v925
        %v927 = vpop.f32.mrb[0].mxu0
        %928 = vmatprep.mubr.f32.mxu0 0.0
        %929 = vmatmul.mubr.f32.gmra.mrb[0].mxu0 %v821
        %v930 = vpop.f32.mrb[0].mxu0
        %v931 = vadd.f32 %v795, %v930
        %v932 = vpop.f32.mrb[0].mxu0
        %933 = vmatprep.mubr.f32.mxu0 0.0
        %934 = vmatmul.mubr.f32.gmra.mrb[0].mxu0 %v824
        %v935 = vpop.f32.mrb[0].mxu0
        %v936 = vadd.f32 %v796, %v935
        %v937 = vpop.f32.mrb[0].mxu0
        %938 = vmatprep.mubr.f32.mxu0 0.0
        %939 = vmatmul.mubr.f32.gmra.mrb[0].mxu0 %v827
        %v940 = vpop.f32.mrb[0].mxu0
        %v941 = vadd.f32 %v797, %v940
        %v942 = vpop.f32.mrb[0].mxu0
        %943 = vdwg.mxu0
        %vm944 = vcmask 261120
        %v945 = vsel %vm944, %v896, 0.0
        %946 = vadd.xlane.f32.xlu0 %v945
        %v947 = vpop.xlane.xlu0 %946
        %v948 = vsel %vm944, %v901, 0.0
        %949 = vadd.xlane.f32.xlu0 %v948
        %v950 = vpop.xlane.xlu0 %949
        %v951 = vsel %vm944, %v906, 0.0
        %952 = vadd.xlane.f32.xlu0 %v951
        %v953 = vpop.xlane.xlu0 %952
        %v954 = vsel %vm944, %v911, 0.0
        %955 = vadd.xlane.f32.xlu0 %v954
        %v956 = vpop.xlane.xlu0 %955
        %v957 = vsel %vm944, %v916, 0.0
        %958 = vadd.xlane.f32.xlu0 %v957
        %v959 = vpop.xlane.xlu0 %958
        %v960 = vsel %vm944, %v921, 0.0
        %961 = vadd.xlane.f32.xlu0 %v960
        %v962 = vpop.xlane.xlu0 %961
        %v963 = vsel %vm944, %v926, 0.0
        %964 = vadd.xlane.f32.xlu0 %v963
        %v965 = vpop.xlane.xlu0 %964
        %v966 = vsel %vm944, %v931, 0.0
        %967 = vadd.xlane.f32.xlu0 %v966
        %v968 = vpop.xlane.xlu0 %967
        %v969 = vsel %vm944, %v936, 0.0
        %970 = vadd.xlane.f32.xlu0 %v969
        %v971 = vpop.xlane.xlu0 %970
        %v972 = vsel %vm944, %v941, 0.0
        %973 = vadd.xlane.f32.xlu0 %v972
        %v974 = vpop.xlane.xlu0 %973
        %v975 = vrcp.pop 32.0
        %v976 = vmul.f32 %v947, %v975
        %v977 = vmul.f32 %v950, %v975
        %v978 = vmul.f32 %v953, %v975
        %v979 = vmul.f32 %v956, %v975
        %v980 = vmul.f32 %v959, %v975
        %v981 = vmul.f32 %v962, %v975
        %v982 = vmul.f32 %v965, %v975
        %v983 = vmul.f32 %v968, %v975
        %v984 = vmul.f32 %v971, %v975
        %v985 = vmul.f32 %v974, %v975
        %v986 = vsub.f32 %v896, %v976
        %v987 = vsub.f32 %v901, %v977
        %v988 = vsub.f32 %v906, %v978
        %v989 = vsub.f32 %v911, %v979
        %v990 = vsub.f32 %v916, %v980
        %v991 = vsub.f32 %v921, %v981
        %v992 = vsub.f32 %v926, %v982
        %v993 = vsub.f32 %v931, %v983
        %v994 = vsub.f32 %v936, %v984
        %v995 = vsub.f32 %v941, %v985
        %v996 = vmul.f32 %v986, %v986
        %v997 = vmul.f32 %v987, %v987
        %v998 = vmul.f32 %v988, %v988
        %v999 = vmul.f32 %v989, %v989
        %v1000 = vmul.f32 %v990, %v990
        %v1001 = vmul.f32 %v991, %v991
        %v1002 = vmul.f32 %v992, %v992
        %v1003 = vmul.f32 %v993, %v993
        %v1004 = vmul.f32 %v994, %v994
        %v1005 = vmul.f32 %v995, %v995
        %v1006 = vsel %vm944, %v996, 0.0
        %1007 = vadd.xlane.f32.xlu0 %v1006
        %v1008 = vpop.xlane.xlu0 %1007
        %v1009 = vsel %vm944, %v997, 0.0
        %1010 = vadd.xlane.f32.xlu0 %v1009
        %v1011 = vpop.xlane.xlu0 %1010
        %v1012 = vsel %vm944, %v998, 0.0
        %1013 = vadd.xlane.f32.xlu0 %v1012
        %v1014 = vpop.xlane.xlu0 %1013
        %v1015 = vsel %vm944, %v999, 0.0
        %1016 = vadd.xlane.f32.xlu0 %v1015
        %v1017 = vpop.xlane.xlu0 %1016
        %v1018 = vsel %vm944, %v1000, 0.0
        %1019 = vadd.xlane.f32.xlu0 %v1018
        %v1020 = vpop.xlane.xlu0 %1019
        %v1021 = vsel %vm944, %v1001, 0.0
        %1022 = vadd.xlane.f32.xlu0 %v1021
        %v1023 = vpop.xlane.xlu0 %1022
        %v1024 = vsel %vm944, %v1002, 0.0
        %1025 = vadd.xlane.f32.xlu0 %v1024
        %v1026 = vpop.xlane.xlu0 %1025
        %v1027 = vsel %vm944, %v1003, 0.0
        %1028 = vadd.xlane.f32.xlu0 %v1027
        %v1029 = vpop.xlane.xlu0 %1028
        %v1030 = vsel %vm944, %v1004, 0.0
        %1031 = vadd.xlane.f32.xlu0 %v1030
        %v1032 = vpop.xlane.xlu0 %1031
        %v1033 = vsel %vm944, %v1005, 0.0
        %1034 = vadd.xlane.f32.xlu0 %v1033
        %v1035 = vpop.xlane.xlu0 %1034
        %v1036 = vmul.f32 %v1008, %v975
        %v1037 = vmul.f32 %v1011, %v975
        %v1038 = vmul.f32 %v1014, %v975
        %v1039 = vmul.f32 %v1017, %v975
        %v1040 = vmul.f32 %v1020, %v975
        %v1041 = vmul.f32 %v1023, %v975
        %v1042 = vmul.f32 %v1026, %v975
        %v1043 = vmul.f32 %v1029, %v975
        %v1044 = vmul.f32 %v1032, %v975
        %v1045 = vmul.f32 %v1035, %v975
        %v1046 = vadd.f32 %v1036, 1e-05
        %v1047 = vadd.f32 %v1037, 1e-05
        %v1048 = vadd.f32 %v1038, 1e-05
        %v1049 = vadd.f32 %v1039, 1e-05
        %v1050 = vadd.f32 %v1040, 1e-05
        %v1051 = vadd.f32 %v1041, 1e-05
        %v1052 = vadd.f32 %v1042, 1e-05
        %v1053 = vadd.f32 %v1043, 1e-05
        %v1054 = vadd.f32 %v1044, 1e-05
        %v1055 = vadd.f32 %v1045, 1e-05
        %v1056 = vrsqrt.pop %v1046
        %v1057 = vrsqrt.pop %v1047
        %v1058 = vrsqrt.pop %v1048
        %v1059 = vrsqrt.pop %v1049
        %v1060 = vrsqrt.pop %v1050
        %v1061 = vrsqrt.pop %v1051
        %v1062 = vrsqrt.pop %v1052
        %v1063 = vrsqrt.pop %v1053
        %v1064 = vrsqrt.pop %v1054
        %v1065 = vrsqrt.pop %v1055
        %v1066 = vmul.f32 %v986, %v1056
        %v1067 = vmul.f32 %v987, %v1057
        %v1068 = vmul.f32 %v988, %v1058
        %v1069 = vmul.f32 %v989, %v1059
        %v1070 = vmul.f32 %v990, %v1060
        %v1071 = vmul.f32 %v991, %v1061
        %v1072 = vmul.f32 %v992, %v1062
        %v1073 = vmul.f32 %v993, %v1063
        %v1074 = vmul.f32 %v994, %v1064
        %v1075 = vmul.f32 %v995, %v1065
        %v1076 = vld [vmem:[%s595] sm:$0x1]
        %v1078 = vlaneseq
        %v1079 = vshrl.u32 %v1078, 7
        %v1080 = vsub.s32 0, %v1079
        %v1081 = vrot.slane %v1076, %v1080
        %v1083 = vmul.f32 %v1066, %v1081
        %v1084 = vmul.f32 %v1067, %v1081
        %v1085 = vmul.f32 %v1068, %v1081
        %v1086 = vmul.f32 %v1069, %v1081
        %v1087 = vmul.f32 %v1070, %v1081
        %v1088 = vmul.f32 %v1071, %v1081
        %v1089 = vmul.f32 %v1072, %v1081
        %v1090 = vmul.f32 %v1073, %v1081
        %v1091 = vmul.f32 %v1074, %v1081
        %v1092 = vmul.f32 %v1075, %v1081
        %v1093 = vld [vmem:[%s598] sm:$0x1]
        %v1095 = vlaneseq
        %v1096 = vshrl.u32 %v1095, 7
        %v1097 = vsub.s32 0, %v1096
        %v1098 = vrot.slane %v1093, %v1097
        %v1100 = vadd.f32 %v1083, %v1098
        %v1101 = vadd.f32 %v1084, %v1098
        %v1102 = vadd.f32 %v1085, %v1098
        %v1103 = vadd.f32 %v1086, %v1098
        %v1104 = vadd.f32 %v1087, %v1098
        %v1105 = vadd.f32 %v1088, %v1098
        %v1106 = vadd.f32 %v1089, %v1098
        %v1107 = vadd.f32 %v1090, %v1098
        %v1108 = vadd.f32 %v1091, %v1098
        %v1109 = vadd.f32 %v1092, %v1098
        %v1110 = vld [vmem:[%s505] sm:$0xff]
        %v1111 = vld [vmem:[%s602] sm:$0x1]
        %v1113 = vlaneseq
        %v1114 = vshrl.u32 %v1113, 7
        %v1115 = vsub.s32 0, %v1114
        %v1116 = vrot.slane %v1111, %v1115
        %v1119 = vsel %vm798, %v1100, 0
        %v1122 = vsel %vm798, %v1101, 0
        %v1125 = vsel %vm798, %v1102, 0
        %v1128 = vsel %vm798, %v1103, 0
        %v1131 = vsel %vm798, %v1104, 0
        %v1134 = vsel %vm798, %v1105, 0
        %v1137 = vsel %vm798, %v1106, 0
        %v1140 = vsel %vm798, %v1107, 0
        %v1143 = vsel %vm798, %v1108, 0
        %v1146 = vsel %vm798, %v1109, 0
        %1148 = vmatprep.subr.mxu0 0.0
        %1149 = vmatpush1.msra.mxu0 %v1110
        %1150 = vmatprep.subr.mxu0 0.0
        %1151 = vmatpush1.msra.mxu0 0.0
        %1152 = vmatprep.subr.mxu0 0.0
        %1153 = vmatpush1.msra.mxu0 0.0
        %1154 = vmatprep.subr.mxu0 0.0
        %1155 = vmatpush1.msra.mxu0 0.0
        %1156 = vmatprep.subr.mxu0 0.0
        %1157 = vmatpush1.msra.mxu0 0.0
        %1158 = vmatprep.subr.mxu0 0.0
        %1159 = vmatpush1.msra.mxu0 0.0
        %1160 = vmatprep.subr.mxu0 0.0
        %1161 = vmatpush1.msra.mxu0 0.0
        %1162 = vmatprep.subr.mxu0 0.0
        %1163 = vmatpush1.msra.mxu0 0.0
        %1164 = vmatprep.subr.mxu0 0.0
        %1165 = vmatpush1.msra.mxu0 0.0
        %1166 = vmatprep.subr.mxu0 0.0
        %1167 = vmatpush1.msra.mxu0 0.0
        %1168 = vmatprep.subr.mxu0 0.0
        %1169 = vmatpush1.msra.mxu0 0.0
        %1170 = vmatprep.subr.mxu0 0.0
        %1171 = vmatpush1.msra.mxu0 0.0
        %1172 = vmatprep.subr.mxu0 0.0
        %1173 = vmatpush1.msra.mxu0 0.0
        %1174 = vmatprep.subr.mxu0 0.0
        %1175 = vmatpush1.msra.mxu0 0.0
        %1176 = vmatprep.subr.mxu0 0.0
        %1177 = vmatpush1.msra.mxu0 0.0
        %1178 = vmatprep.subr.mxu0 0.0
        %1179 = vmatpush1.msra.mxu0 0.0
        %1180 = vmatprep.subr.mxu0 0.0
        %1181 = vmatpush1.msra.mxu0 0.0
        %1182 = vmatprep.subr.mxu0 0.0
        %1183 = vmatpush1.msra.mxu0 0.0
        %1184 = vmatprep.subr.mxu0 0.0
        %1185 = vmatpush1.msra.mxu0 0.0
        %1186 = vmatprep.subr.mxu0 0.0
        %1187 = vmatpush1.msra.mxu0 0.0
        %1188 = vmatprep.subr.mxu0 0.0
        %1189 = vmatpush1.msra.mxu0 0.0
        %1190 = vmatprep.subr.mxu0 0.0
        %1191 = vmatpush1.msra.mxu0 0.0
        %1192 = vmatprep.subr.mxu0 0.0
        %1193 = vmatpush1.msra.mxu0 0.0
        %1194 = vmatprep.subr.mxu0 0.0
        %1195 = vmatpush1.msra.mxu0 0.0
        %1196 = vmatprep.subr.mxu0 0.0
        %1197 = vmatpush1.msra.mxu0 0.0
        %1198 = vmatprep.subr.mxu0 0.0
        %1199 = vmatpush1.msra.mxu0 0.0
        %1200 = vmatprep.subr.mxu0 0.0
        %1201 = vmatpush1.msra.mxu0 0.0
        %1202 = vmatprep.subr.mxu0 0.0
        %1203 = vmatpush1.msra.mxu0 0.0
        %1204 = vmatprep.subr.mxu0 0.0
        %1205 = vmatpush1.msra.mxu0 0.0
        %1206 = vmatprep.subr.mxu0 0.0
        %1207 = vmatpush1.msra.mxu0 0.0
        %1208 = vmatprep.subr.mxu0 0.0
        %1209 = vmatpush1.msra.mxu0 0.0
        %1210 = vmatprep.subr.mxu0 0.0
        %1211 = vmatpush1.msra.mxu0 0.0
        %1212 = vmatprep.mubr.f32.mxu0 0.0
        %1213 = vmatmul.mubr.f32.gmra.mrb[0].mxu0 %v1119
        %v1214 = vpop.f32.mrb[0].mxu0
        %v1215 = vadd.f32 %v1116, %v1214
        %v1216 = vpop.f32.mrb[0].mxu0
        %1217 = vmatprep.mubr.f32.mxu0 0.0
        %1218 = vmatmul.mubr.f32.gmra.mrb[0].mxu0 %v1122
        %v1219 = vpop.f32.mrb[0].mxu0
        %v1220 = vadd.f32 %v1116, %v1219
        %v1221 = vpop.f32.mrb[0].mxu0
        %1222 = vmatprep.mubr.f32.mxu0 0.0
        %1223 = vmatmul.mubr.f32.gmra.mrb[0].mxu0 %v1125
        %v1224 = vpop.f32.mrb[0].mxu0
        %v1225 = vadd.f32 %v1116, %v1224
        %v1226 = vpop.f32.mrb[0].mxu0
        %1227 = vmatprep.mubr.f32.mxu0 0.0
        %1228 = vmatmul.mubr.f32.gmra.mrb[0].mxu0 %v1128
        %v1229 = vpop.f32.mrb[0].mxu0
        %v1230 = vadd.f32 %v1116, %v1229
        %v1231 = vpop.f32.mrb[0].mxu0
        %1232 = vmatprep.mubr.f32.mxu0 0.0
        %1233 = vmatmul.mubr.f32.gmra.mrb[0].mxu0 %v1131
        %v1234 = vpop.f32.mrb[0].mxu0
        %v1235 = vadd.f32 %v1116, %v1234
        %v1236 = vpop.f32.mrb[0].mxu0
        %1237 = vmatprep.mubr.f32.mxu0 0.0
        %1238 = vmatmul.mubr.f32.gmra.mrb[0].mxu0 %v1134
        %v1239 = vpop.f32.mrb[0].mxu0
        %v1240 = vadd.f32 %v1116, %v1239
        %v1241 = vpop.f32.mrb[0].mxu0
        %1242 = vmatprep.mubr.f32.mxu0 0.0
        %1243 = vmatmul.mubr.f32.gmra.mrb[0].mxu0 %v1137
        %v1244 = vpop.f32.mrb[0].mxu0
        %v1245 = vadd.f32 %v1116, %v1244
        %v1246 = vpop.f32.mrb[0].mxu0
        %1247 = vmatprep.mubr.f32.mxu0 0.0
        %1248 = vmatmul.mubr.f32.gmra.mrb[0].mxu0 %v1140
        %v1249 = vpop.f32.mrb[0].mxu0
        %v1250 = vadd.f32 %v1116, %v1249
        %v1251 = vpop.f32.mrb[0].mxu0
        %1252 = vmatprep.mubr.f32.mxu0 0.0
        %1253 = vmatmul.mubr.f32.gmra.mrb[0].mxu0 %v1143
        %v1254 = vpop.f32.mrb[0].mxu0
        %v1255 = vadd.f32 %v1116, %v1254
        %v1256 = vpop.f32.mrb[0].mxu0
        %1257 = vmatprep.mubr.f32.mxu0 0.0
        %1258 = vmatmul.mubr.f32.gmra.mrb[0].mxu0 %v1146
        %v1259 = vpop.f32.mrb[0].mxu0
        %v1260 = vadd.f32 %v1116, %v1259
        %v1261 = vpop.f32.mrb[0].mxu0
        %1262 = vdwg.mxu0
        %v1263 = vmul.f32 %v1215, 0.5
        %v1264 = vmul.f32 %v1220, 0.5
        %v1265 = vmul.f32 %v1225, 0.5
        %v1266 = vmul.f32 %v1230, 0.5
        %v1267 = vmul.f32 %v1235, 0.5
        %v1268 = vmul.f32 %v1240, 0.5
        %v1269 = vmul.f32 %v1245, 0.5
        %v1270 = vmul.f32 %v1250, 0.5
        %v1271 = vmul.f32 %v1255, 0.5
        %v1272 = vmul.f32 %v1260, 0.5
        %v1273 = vmul.f32 %v1215, 0.70710677
        %v1274 = vmul.f32 %v1220, 0.70710677
        %v1275 = vmul.f32 %v1225, 0.70710677
        %v1276 = vmul.f32 %v1230, 0.70710677
        %v1277 = vmul.f32 %v1235, 0.70710677
        %v1278 = vmul.f32 %v1240, 0.70710677
        %v1279 = vmul.f32 %v1245, 0.70710677
        %v1280 = vmul.f32 %v1250, 0.70710677
        %v1281 = vmul.f32 %v1255, 0.70710677
        %v1282 = vmul.f32 %v1260, 0.70710677
        %v1283 = verf.f32.pop %v1273
        %v1284 = verf.f32.pop %v1274
        %v1285 = verf.f32.pop %v1275
        %v1286 = verf.f32.pop %v1276
        %v1287 = verf.f32.pop %v1277
        %v1288 = verf.f32.pop %v1278
        %v1289 = verf.f32.pop %v1279
        %v1290 = verf.f32.pop %v1280
        %v1291 = verf.f32.pop %v1281
        %v1292 = verf.f32.pop %v1282
        %v1293 = vadd.f32 %v1283, 1.0
        %v1294 = vadd.f32 %v1284, 1.0
        %v1295 = vadd.f32 %v1285, 1.0
        %v1296 = vadd.f32 %v1286, 1.0
        %v1297 = vadd.f32 %v1287, 1.0
        %v1298 = vadd.f32 %v1288, 1.0
        %v1299 = vadd.f32 %v1289, 1.0
        %v1300 = vadd.f32 %v1290, 1.0
        %v1301 = vadd.f32 %v1291, 1.0
        %v1302 = vadd.f32 %v1292, 1.0
        %v1303 = vmul.f32 %v1263, %v1293
        %v1304 = vmul.f32 %v1264, %v1294
        %v1305 = vmul.f32 %v1265, %v1295
        %v1306 = vmul.f32 %v1266, %v1296
        %v1307 = vmul.f32 %v1267, %v1297
        %v1308 = vmul.f32 %v1268, %v1298
        %v1309 = vmul.f32 %v1269, %v1299
        %v1310 = vmul.f32 %v1270, %v1300
        %v1311 = vmul.f32 %v1271, %v1301
        %v1312 = vmul.f32 %v1272, %v1302
        %v1313 = vld [vmem:[%s607] sm:$0xff]
        %v1314 = vld [vmem:[%s607 + $0x8] sm:$0xff]
        %v1315 = vld [vmem:[%s607 + $0x10] sm:$0xff]
        %v1316 = vld [vmem:[%s607 + $0x18] sm:$0xff]
        %v1318 = vsel %vm944, %v1303, 0
        %v1321 = vsel %vm944, %v1304, 0
        %v1324 = vsel %vm944, %v1305, 0
        %v1327 = vsel %vm944, %v1306, 0
        %v1330 = vsel %vm944, %v1307, 0
        %v1333 = vsel %vm944, %v1308, 0
        %v1336 = vsel %vm944, %v1309, 0
        %v1339 = vsel %vm944, %v1310, 0
        %v1342 = vsel %vm944, %v1311, 0
        %v1345 = vsel %vm944, %v1312, 0
        %1347 = vmatprep.subr.mxu0 0.0
        %1348 = vmatpush1.msra.mxu0 %v1313
        %1349 = vmatprep.subr.mxu0 0.0
        %1350 = vmatpush1.msra.mxu0 %v1314
        %1351 = vmatprep.subr.mxu0 0.0
        %1352 = vmatpush1.msra.mxu0 %v1315
        %1353 = vmatprep.subr.mxu0 0.0
        %1354 = vmatpush1.msra.mxu0 %v1316
        %1355 = vmatprep.subr.mxu0 0.0
        %1356 = vmatpush1.msra.mxu0 0.0
        %1357 = vmatprep.subr.mxu0 0.0
        %1358 = vmatpush1.msra.mxu0 0.0
        %1359 = vmatprep.subr.mxu0 0.0
        %1360 = vmatpush1.msra.mxu0 0.0
        %1361 = vmatprep.subr.mxu0 0.0
        %1362 = vmatpush1.msra.mxu0 0.0
        %1363 = vmatprep.subr.mxu0 0.0
        %1364 = vmatpush1.msra.mxu0 0.0
        %1365 = vmatprep.subr.mxu0 0.0
        %1366 = vmatpush1.msra.mxu0 0.0
        %1367 = vmatprep.subr.mxu0 0.0
        %1368 = vmatpush1.msra.mxu0 0.0
        %1369 = vmatprep.subr.mxu0 0.0
        %1370 = vmatpush1.msra.mxu0 0.0
        %1371 = vmatprep.subr.mxu0 0.0
        %1372 = vmatpush1.msra.mxu0 0.0
        %1373 = vmatprep.subr.mxu0 0.0
        %1374 = vmatpush1.msra.mxu0 0.0
        %1375 = vmatprep.subr.mxu0 0.0
        %1376 = vmatpush1.msra.mxu0 0.0
        %1377 = vmatprep.subr.mxu0 0.0
        %1378 = vmatpush1.msra.mxu0 0.0
        %1379 = vmatprep.subr.mxu0 0.0
        %1380 = vmatpush1.msra.mxu0 0.0
        %1381 = vmatprep.subr.mxu0 0.0
        %1382 = vmatpush1.msra.mxu0 0.0
        %1383 = vmatprep.subr.mxu0 0.0
        %1384 = vmatpush1.msra.mxu0 0.0
        %1385 = vmatprep.subr.mxu0 0.0
        %1386 = vmatpush1.msra.mxu0 0.0
        %1387 = vmatprep.subr.mxu0 0.0
        %1388 = vmatpush1.msra.mxu0 0.0
        %1389 = vmatprep.subr.mxu0 0.0
        %1390 = vmatpush1.msra.mxu0 0.0
        %1391 = vmatprep.subr.mxu0 0.0
        %1392 = vmatpush1.msra.mxu0 0.0
        %1393 = vmatprep.subr.mxu0 0.0
        %1394 = vmatpush1.msra.mxu0 0.0
        %1395 = vmatprep.subr.mxu0 0.0
        %1396 = vmatpush1.msra.mxu0 0.0
        %1397 = vmatprep.subr.mxu0 0.0
        %1398 = vmatpush1.msra.mxu0 0.0
        %1399 = vmatprep.subr.mxu0 0.0
        %1400 = vmatpush1.msra.mxu0 0.0
        %1401 = vmatprep.subr.mxu0 0.0
        %1402 = vmatpush1.msra.mxu0 0.0
        %1403 = vmatprep.subr.mxu0 0.0
        %1404 = vmatpush1.msra.mxu0 0.0
        %1405 = vmatprep.subr.mxu0 0.0
        %1406 = vmatpush1.msra.mxu0 0.0
        %1407 = vmatprep.subr.mxu0 0.0
        %1408 = vmatpush1.msra.mxu0 0.0
        %1409 = vmatprep.subr.mxu0 0.0
        %1410 = vmatpush1.msra.mxu0 0.0
        %1411 = vmatprep.mubr.f32.mxu0 0.0
        %1412 = vmatmul.mubr.f32.gmra.mrb[0].mxu0 %v1318
        %v1413 = vpop.f32.mrb[0].mxu0
        %v1414 = vadd.f32 0.0, %v1413
        %v1415 = vpop.f32.mrb[0].mxu0
        %1416 = vmatprep.mubr.f32.mxu0 0.0
        %1417 = vmatmul.mubr.f32.gmra.mrb[0].mxu0 %v1321
        %v1418 = vpop.f32.mrb[0].mxu0
        %v1419 = vadd.f32 0.0, %v1418
        %v1420 = vpop.f32.mrb[0].mxu0
        %1421 = vmatprep.mubr.f32.mxu0 0.0
        %1422 = vmatmul.mubr.f32.gmra.mrb[0].mxu0 %v1324
        %v1423 = vpop.f32.mrb[0].mxu0
        %v1424 = vadd.f32 0.0, %v1423
        %v1425 = vpop.f32.mrb[0].mxu0
        %1426 = vmatprep.mubr.f32.mxu0 0.0
        %1427 = vmatmul.mubr.f32.gmra.mrb[0].mxu0 %v1327
        %v1428 = vpop.f32.mrb[0].mxu0
        %v1429 = vadd.f32 0.0, %v1428
        %v1430 = vpop.f32.mrb[0].mxu0
        %1431 = vmatprep.mubr.f32.mxu0 0.0
        %1432 = vmatmul.mubr.f32.gmra.mrb[0].mxu0 %v1330
        %v1433 = vpop.f32.mrb[0].mxu0
        %v1434 = vadd.f32 0.0, %v1433
        %v1435 = vpop.f32.mrb[0].mxu0
        %1436 = vmatprep.mubr.f32.mxu0 0.0
        %1437 = vmatmul.mubr.f32.gmra.mrb[0].mxu0 %v1333
        %v1438 = vpop.f32.mrb[0].mxu0
        %v1439 = vadd.f32 0.0, %v1438
        %v1440 = vpop.f32.mrb[0].mxu0
        %1441 = vmatprep.mubr.f32.mxu0 0.0
        %1442 = vmatmul.mubr.f32.gmra.mrb[0].mxu0 %v1336
        %v1443 = vpop.f32.mrb[0].mxu0
        %v1444 = vadd.f32 0.0, %v1443
        %v1445 = vpop.f32.mrb[0].mxu0
        %1446 = vmatprep.mubr.f32.mxu0 0.0
        %1447 = vmatmul.mubr.f32.gmra.mrb[0].mxu0 %v1339
        %v1448 = vpop.f32.mrb[0].mxu0
        %v1449 = vadd.f32 0.0, %v1448
        %v1450 = vpop.f32.mrb[0].mxu0
        %1451 = vmatprep.mubr.f32.mxu0 0.0
        %1452 = vmatmul.mubr.f32.gmra.mrb[0].mxu0 %v1342
        %v1453 = vpop.f32.mrb[0].mxu0
        %v1454 = vadd.f32 0.0, %v1453
        %v1455 = vpop.f32.mrb[0].mxu0
        %1456 = vmatprep.mubr.f32.mxu0 0.0
        %1457 = vmatmul.mubr.f32.gmra.mrb[0].mxu0 %v1345
        %v1458 = vpop.f32.mrb[0].mxu0
        %v1459 = vadd.f32 0.0, %v1458
        %v1460 = vpop.f32.mrb[0].mxu0
        %1461 = vdwg.mxu0
        %s1462 = scalar_lea.vmem %s505, 8 [#allocation7]
        %v1463 = vld [vmem:[%s1462] sm:$0xff]
        %s1464 = scalar_lea.vmem %s602, 1
        %v1465 = vld [vmem:[%s1464] sm:$0x1]
        %v1467 = vlaneseq
        %v1468 = vshrl.u32 %v1467, 7
        %v1469 = vsub.s32 0, %v1468
        %v1470 = vrot.slane %v1465, %v1469
        %1472 = vrot.lane.b32.xlu0 %v1100, 120
        %v1473 = vpop.permute.xlu0 %1472
        %1474 = vrot.lane.b32.xlu0 %v1101, 120
        %v1475 = vpop.permute.xlu0 %1474
        %1476 = vrot.lane.b32.xlu0 %v1102, 120
        %v1477 = vpop.permute.xlu0 %1476
        %1478 = vrot.lane.b32.xlu0 %v1103, 120
        %v1479 = vpop.permute.xlu0 %1478
        %1480 = vrot.lane.b32.xlu0 %v1104, 120
        %v1481 = vpop.permute.xlu0 %1480
        %1482 = vrot.lane.b32.xlu0 %v1105, 120
        %v1483 = vpop.permute.xlu0 %1482
        %1484 = vrot.lane.b32.xlu0 %v1106, 120
        %v1485 = vpop.permute.xlu0 %1484
        %1486 = vrot.lane.b32.xlu0 %v1107, 120
        %v1487 = vpop.permute.xlu0 %1486
        %1488 = vrot.lane.b32.xlu0 %v1108, 120
        %v1489 = vpop.permute.xlu0 %1488
        %1490 = vrot.lane.b32.xlu0 %v1109, 120
        %v1491 = vpop.permute.xlu0 %1490
        %v1492 = vsel %vm798, %v1473, 0
        %v1494 = vsel %vm798, %v1475, 0
        %v1496 = vsel %vm798, %v1477, 0
        %v1498 = vsel %vm798, %v1479, 0
        %v1500 = vsel %vm798, %v1481, 0
        %v1502 = vsel %vm798, %v1483, 0
        %v1504 = vsel %vm798, %v1485, 0
        %v1506 = vsel %vm798, %v1487, 0
        %v1508 = vsel %vm798, %v1489, 0
        %v1510 = vsel %vm798, %v1491, 0
        %1512 = vmatprep.subr.mxu0 0.0
        %1513 = vmatpush1.msra.mxu0 %v1463
        %1514 = vmatprep.subr.mxu0 0.0
        %1515 = vmatpush1.msra.mxu0 0.0
        %1516 = vmatprep.subr.mxu0 0.0
        %1517 = vmatpush1.msra.mxu0 0.0
        %1518 = vmatprep.subr.mxu0 0.0
        %1519 = vmatpush1.msra.mxu0 0.0
        %1520 = vmatprep.subr.mxu0 0.0
        %1521 = vmatpush1.msra.mxu0 0.0
        %1522 = vmatprep.subr.mxu0 0.0
        %1523 = vmatpush1.msra.mxu0 0.0
        %1524 = vmatprep.subr.mxu0 0.0
        %1525 = vmatpush1.msra.mxu0 0.0
        %1526 = vmatprep.subr.mxu0 0.0
        %1527 = vmatpush1.msra.mxu0 0.0
        %1528 = vmatprep.subr.mxu0 0.0
        %1529 = vmatpush1.msra.mxu0 0.0
        %1530 = vmatprep.subr.mxu0 0.0
        %1531 = vmatpush1.msra.mxu0 0.0
        %1532 = vmatprep.subr.mxu0 0.0
        %1533 = vmatpush1.msra.mxu0 0.0
        %1534 = vmatprep.subr.mxu0 0.0
        %1535 = vmatpush1.msra.mxu0 0.0
        %1536 = vmatprep.subr.mxu0 0.0
        %1537 = vmatpush1.msra.mxu0 0.0
        %1538 = vmatprep.subr.mxu0 0.0
        %1539 = vmatpush1.msra.mxu0 0.0
        %1540 = vmatprep.subr.mxu0 0.0
        %1541 = vmatpush1.msra.mxu0 0.0
        %1542 = vmatprep.subr.mxu0 0.0
        %1543 = vmatpush1.msra.mxu0 0.0
        %1544 = vmatprep.subr.mxu0 0.0
        %1545 = vmatpush1.msra.mxu0 0.0
        %1546 = vmatprep.subr.mxu0 0.0
        %1547 = vmatpush1.msra.mxu0 0.0
        %1548 = vmatprep.subr.mxu0 0.0
        %1549 = vmatpush1.msra.mxu0 0.0
        %1550 = vmatprep.subr.mxu0 0.0
        %1551 = vmatpush1.msra.mxu0 0.0
        %1552 = vmatprep.subr.mxu0 0.0
        %1553 = vmatpush1.msra.mxu0 0.0
        %1554 = vmatprep.subr.mxu0 0.0
        %1555 = vmatpush1.msra.mxu0 0.0
        %1556 = vmatprep.subr.mxu0 0.0
        %1557 = vmatpush1.msra.mxu0 0.0
        %1558 = vmatprep.subr.mxu0 0.0
        %1559 = vmatpush1.msra.mxu0 0.0
        %1560 = vmatprep.subr.mxu0 0.0
        %1561 = vmatpush1.msra.mxu0 0.0
        %1562 = vmatprep.subr.mxu0 0.0
        %1563 = vmatpush1.msra.mxu0 0.0
        %1564 = vmatprep.subr.mxu0 0.0
        %1565 = vmatpush1.msra.mxu0 0.0
        %1566 = vmatprep.subr.mxu0 0.0
        %1567 = vmatpush1.msra.mxu0 0.0
        %1568 = vmatprep.subr.mxu0 0.0
        %1569 = vmatpush1.msra.mxu0 0.0
        %1570 = vmatprep.subr.mxu0 0.0
        %1571 = vmatpush1.msra.mxu0 0.0
        %1572 = vmatprep.subr.mxu0 0.0
        %1573 = vmatpush1.msra.mxu0 0.0
        %1574 = vmatprep.subr.mxu0 0.0
        %1575 = vmatpush1.msra.mxu0 0.0
        %1576 = vmatprep.mubr.f32.mxu0 0.0
        %1577 = vmatmul.mubr.f32.gmra.mrb[0].mxu0 %v1492
        %v1578 = vpop.f32.mrb[0].mxu0
        %v1579 = vadd.f32 %v1470, %v1578
        %v1580 = vpop.f32.mrb[0].mxu0
        %1581 = vmatprep.mubr.f32.mxu0 0.0
        %1582 = vmatmul.mubr.f32.gmra.mrb[0].mxu0 %v1494
        %v1583 = vpop.f32.mrb[0].mxu0
        %v1584 = vadd.f32 %v1470, %v1583
        %v1585 = vpop.f32.mrb[0].mxu0
        %1586 = vmatprep.mubr.f32.mxu0 0.0
        %1587 = vmatmul.mubr.f32.gmra.mrb[0].mxu0 %v1496
        %v1588 = vpop.f32.mrb[0].mxu0
        %v1589 = vadd.f32 %v1470, %v1588
        %v1590 = vpop.f32.mrb[0].mxu0
        %1591 = vmatprep.mubr.f32.mxu0 0.0
        %1592 = vmatmul.mubr.f32.gmra.mrb[0].mxu0 %v1498
        %v1593 = vpop.f32.mrb[0].mxu0
        %v1594 = vadd.f32 %v1470, %v1593
        %v1595 = vpop.f32.mrb[0].mxu0
        %1596 = vmatprep.mubr.f32.mxu0 0.0
        %1597 = vmatmul.mubr.f32.gmra.mrb[0].mxu0 %v1500
        %v1598 = vpop.f32.mrb[0].mxu0
        %v1599 = vadd.f32 %v1470, %v1598
        %v1600 = vpop.f32.mrb[0].mxu0
        %1601 = vmatprep.mubr.f32.mxu0 0.0
        %1602 = vmatmul.mubr.f32.gmra.mrb[0].mxu0 %v1502
        %v1603 = vpop.f32.mrb[0].mxu0
        %v1604 = vadd.f32 %v1470, %v1603
        %v1605 = vpop.f32.mrb[0].mxu0
        %1606 = vmatprep.mubr.f32.mxu0 0.0
        %1607 = vmatmul.mubr.f32.gmra.mrb[0].mxu0 %v1504
        %v1608 = vpop.f32.mrb[0].mxu0
        %v1609 = vadd.f32 %v1470, %v1608
        %v1610 = vpop.f32.mrb[0].mxu0
        %1611 = vmatprep.mubr.f32.mxu0 0.0
        %1612 = vmatmul.mubr.f32.gmra.mrb[0].mxu0 %v1506
        %v1613 = vpop.f32.mrb[0].mxu0
        %v1614 = vadd.f32 %v1470, %v1613
        %v1615 = vpop.f32.mrb[0].mxu0
        %1616 = vmatprep.mubr.f32.mxu0 0.0
        %1617 = vmatmul.mubr.f32.gmra.mrb[0].mxu0 %v1508
        %v1618 = vpop.f32.mrb[0].mxu0
        %v1619 = vadd.f32 %v1470, %v1618
        %v1620 = vpop.f32.mrb[0].mxu0
        %1621 = vmatprep.mubr.f32.mxu0 0.0
        %1622 = vmatmul.mubr.f32.gmra.mrb[0].mxu0 %v1510
        %v1623 = vpop.f32.mrb[0].mxu0
        %v1624 = vadd.f32 %v1470, %v1623
        %v1625 = vpop.f32.mrb[0].mxu0
        %1626 = vdwg.mxu0
        %v1627 = vmul.f32 %v1579, 0.5
        %v1628 = vmul.f32 %v1584, 0.5
        %v1629 = vmul.f32 %v1589, 0.5
        %v1630 = vmul.f32 %v1594, 0.5
        %v1631 = vmul.f32 %v1599, 0.5
        %v1632 = vmul.f32 %v1604, 0.5
        %v1633 = vmul.f32 %v1609, 0.5
        %v1634 = vmul.f32 %v1614, 0.5
        %v1635 = vmul.f32 %v1619, 0.5
        %v1636 = vmul.f32 %v1624, 0.5
        %v1637 = vmul.f32 %v1579, 0.70710677
        %v1638 = vmul.f32 %v1584, 0.70710677
        %v1639 = vmul.f32 %v1589, 0.70710677
        %v1640 = vmul.f32 %v1594, 0.70710677
        %v1641 = vmul.f32 %v1599, 0.70710677
        %v1642 = vmul.f32 %v1604, 0.70710677
        %v1643 = vmul.f32 %v1609, 0.70710677
        %v1644 = vmul.f32 %v1614, 0.70710677
        %v1645 = vmul.f32 %v1619, 0.70710677
        %v1646 = vmul.f32 %v1624, 0.70710677
        %v1647 = verf.f32.pop %v1637
        %v1648 = verf.f32.pop %v1638
        %v1649 = verf.f32.pop %v1639
        %v1650 = verf.f32.pop %v1640
        %v1651 = verf.f32.pop %v1641
        %v1652 = verf.f32.pop %v1642
        %v1653 = verf.f32.pop %v1643
        %v1654 = verf.f32.pop %v1644
        %v1655 = verf.f32.pop %v1645
        %v1656 = verf.f32.pop %v1646
        %v1657 = vadd.f32 %v1647, 1.0
        %v1658 = vadd.f32 %v1648, 1.0
        %v1659 = vadd.f32 %v1649, 1.0
        %v1660 = vadd.f32 %v1650, 1.0
        %v1661 = vadd.f32 %v1651, 1.0
        %v1662 = vadd.f32 %v1652, 1.0
        %v1663 = vadd.f32 %v1653, 1.0
        %v1664 = vadd.f32 %v1654, 1.0
        %v1665 = vadd.f32 %v1655, 1.0
        %v1666 = vadd.f32 %v1656, 1.0
        %v1667 = vmul.f32 %v1627, %v1657
        %v1668 = vmul.f32 %v1628, %v1658
        %v1669 = vmul.f32 %v1629, %v1659
        %v1670 = vmul.f32 %v1630, %v1660
        %v1671 = vmul.f32 %v1631, %v1661
        %v1672 = vmul.f32 %v1632, %v1662
        %v1673 = vmul.f32 %v1633, %v1663
        %v1674 = vmul.f32 %v1634, %v1664
        %v1675 = vmul.f32 %v1635, %v1665
        %v1676 = vmul.f32 %v1636, %v1666
        %s1677 = scalar_lea.vmem %s607, 32
        %v1678 = vld [vmem:[%s1677] sm:$0xff]
        %v1679 = vld [vmem:[%s1677 + $0x8] sm:$0xff]
        %v1680 = vld [vmem:[%s1677 + $0x10] sm:$0xff]
        %v1681 = vld [vmem:[%s1677 + $0x18] sm:$0xff]
        %v1683 = vsel %vm944, %v1667, 0
        %v1686 = vsel %vm944, %v1668, 0
        %v1689 = vsel %vm944, %v1669, 0
        %v1692 = vsel %vm944, %v1670, 0
        %v1695 = vsel %vm944, %v1671, 0
        %v1698 = vsel %vm944, %v1672, 0
        %v1701 = vsel %vm944, %v1673, 0
        %v1704 = vsel %vm944, %v1674, 0
        %v1707 = vsel %vm944, %v1675, 0
        %v1710 = vsel %vm944, %v1676, 0
        %1712 = vmatprep.subr.mxu0 0.0
        %1713 = vmatpush1.msra.mxu0 %v1678
        %1714 = vmatprep.subr.mxu0 0.0
        %1715 = vmatpush1.msra.mxu0 %v1679
        %1716 = vmatprep.subr.mxu0 0.0
        %1717 = vmatpush1.msra.mxu0 %v1680
        %1718 = vmatprep.subr.mxu0 0.0
        %1719 = vmatpush1.msra.mxu0 %v1681
        %1720 = vmatprep.subr.mxu0 0.0
        %1721 = vmatpush1.msra.mxu0 0.0
        %1722 = vmatprep.subr.mxu0 0.0
        %1723 = vmatpush1.msra.mxu0 0.0
        %1724 = vmatprep.subr.mxu0 0.0
        %1725 = vmatpush1.msra.mxu0 0.0
        %1726 = vmatprep.subr.mxu0 0.0
        %1727 = vmatpush1.msra.mxu0 0.0
        %1728 = vmatprep.subr.mxu0 0.0
        %1729 = vmatpush1.msra.mxu0 0.0
        %1730 = vmatprep.subr.mxu0 0.0
        %1731 = vmatpush1.msra.mxu0 0.0
        %1732 = vmatprep.subr.mxu0 0.0
        %1733 = vmatpush1.msra.mxu0 0.0
        %1734 = vmatprep.subr.mxu0 0.0
        %1735 = vmatpush1.msra.mxu0 0.0
        %1736 = vmatprep.subr.mxu0 0.0
        %1737 = vmatpush1.msra.mxu0 0.0
        %1738 = vmatprep.subr.mxu0 0.0
        %1739 = vmatpush1.msra.mxu0 0.0
        %1740 = vmatprep.subr.mxu0 0.0
        %1741 = vmatpush1.msra.mxu0 0.0
        %1742 = vmatprep.subr.mxu0 0.0
        %1743 = vmatpush1.msra.mxu0 0.0
        %1744 = vmatprep.subr.mxu0 0.0
        %1745 = vmatpush1.msra.mxu0 0.0
        %1746 = vmatprep.subr.mxu0 0.0
        %1747 = vmatpush1.msra.mxu0 0.0
        %1748 = vmatprep.subr.mxu0 0.0
        %1749 = vmatpush1.msra.mxu0 0.0
        %1750 = vmatprep.subr.mxu0 0.0
        %1751 = vmatpush1.msra.mxu0 0.0
        %1752 = vmatprep.subr.mxu0 0.0
        %1753 = vmatpush1.msra.mxu0 0.0
        %1754 = vmatprep.subr.mxu0 0.0
        %1755 = vmatpush1.msra.mxu0 0.0
        %1756 = vmatprep.subr.mxu0 0.0
        %1757 = vmatpush1.msra.mxu0 0.0
        %1758 = vmatprep.subr.mxu0 0.0
        %1759 = vmatpush1.msra.mxu0 0.0
        %1760 = vmatprep.subr.mxu0 0.0
        %1761 = vmatpush1.msra.mxu0 0.0
        %1762 = vmatprep.subr.mxu0 0.0
        %1763 = vmatpush1.msra.mxu0 0.0
        %1764 = vmatprep.subr.mxu0 0.0
        %1765 = vmatpush1.msra.mxu0 0.0
        %1766 = vmatprep.subr.mxu0 0.0
        %1767 = vmatpush1.msra.mxu0 0.0
        %1768 = vmatprep.subr.mxu0 0.0
        %1769 = vmatpush1.msra.mxu0 0.0
        %1770 = vmatprep.subr.mxu0 0.0
        %1771 = vmatpush1.msra.mxu0 0.0
        %1772 = vmatprep.subr.mxu0 0.0
        %1773 = vmatpush1.msra.mxu0 0.0
        %1774 = vmatprep.subr.mxu0 0.0
        %1775 = vmatpush1.msra.mxu0 0.0
        %1776 = vmatprep.mubr.f32.mxu0 0.0
        %1777 = vmatmul.mubr.f32.gmra.mrb[0].mxu0 %v1683
        %v1778 = vpop.f32.mrb[0].mxu0
        %v1779 = vadd.f32 0.0, %v1778
        %v1780 = vpop.f32.mrb[0].mxu0
        %1781 = vmatprep.mubr.f32.mxu0 0.0
        %1782 = vmatmul.mubr.f32.gmra.mrb[0].mxu0 %v1686
        %v1783 = vpop.f32.mrb[0].mxu0
        %v1784 = vadd.f32 0.0, %v1783
        %v1785 = vpop.f32.mrb[0].mxu0
        %1786 = vmatprep.mubr.f32.mxu0 0.0
        %1787 = vmatmul.mubr.f32.gmra.mrb[0].mxu0 %v1689
        %v1788 = vpop.f32.mrb[0].mxu0
        %v1789 = vadd.f32 0.0, %v1788
        %v1790 = vpop.f32.mrb[0].mxu0
        %1791 = vmatprep.mubr.f32.mxu0 0.0
        %1792 = vmatmul.mubr.f32.gmra.mrb[0].mxu0 %v1692
        %v1793 = vpop.f32.mrb[0].mxu0
        %v1794 = vadd.f32 0.0, %v1793
        %v1795 = vpop.f32.mrb[0].mxu0
        %1796 = vmatprep.mubr.f32.mxu0 0.0
        %1797 = vmatmul.mubr.f32.gmra.mrb[0].mxu0 %v1695
        %v1798 = vpop.f32.mrb[0].mxu0
        %v1799 = vadd.f32 0.0, %v1798
        %v1800 = vpop.f32.mrb[0].mxu0
        %1801 = vmatprep.mubr.f32.mxu0 0.0
        %1802 = vmatmul.mubr.f32.gmra.mrb[0].mxu0 %v1698
        %v1803 = vpop.f32.mrb[0].mxu0
        %v1804 = vadd.f32 0.0, %v1803
        %v1805 = vpop.f32.mrb[0].mxu0
        %1806 = vmatprep.mubr.f32.mxu0 0.0
        %1807 = vmatmul.mubr.f32.gmra.mrb[0].mxu0 %v1701
        %v1808 = vpop.f32.mrb[0].mxu0
        %v1809 = vadd.f32 0.0, %v1808
        %v1810 = vpop.f32.mrb[0].mxu0
        %1811 = vmatprep.mubr.f32.mxu0 0.0
        %1812 = vmatmul.mubr.f32.gmra.mrb[0].mxu0 %v1704
        %v1813 = vpop.f32.mrb[0].mxu0
        %v1814 = vadd.f32 0.0, %v1813
        %v1815 = vpop.f32.mrb[0].mxu0
        %1816 = vmatprep.mubr.f32.mxu0 0.0
        %1817 = vmatmul.mubr.f32.gmra.mrb[0].mxu0 %v1707
        %v1818 = vpop.f32.mrb[0].mxu0
        %v1819 = vadd.f32 0.0, %v1818
        %v1820 = vpop.f32.mrb[0].mxu0
        %1821 = vmatprep.mubr.f32.mxu0 0.0
        %1822 = vmatmul.mubr.f32.gmra.mrb[0].mxu0 %v1710
        %v1823 = vpop.f32.mrb[0].mxu0
        %v1824 = vadd.f32 0.0, %v1823
        %v1825 = vpop.f32.mrb[0].mxu0
        %1826 = vdwg.mxu0
        %s1827 = scalar_lea.vmem %s505, 16 [#allocation7]
        %v1828 = vld [vmem:[%s1827] sm:$0xff]
        %s1829 = scalar_lea.vmem %s602, 2
        %v1830 = vld [vmem:[%s1829] sm:$0x1]
        %v1832 = vlaneseq
        %v1833 = vshrl.u32 %v1832, 7
        %v1834 = vsub.s32 0, %v1833
        %v1835 = vrot.slane %v1830, %v1834
        %1837 = vrot.lane.b32.xlu0 %v1100, 112
        %v1838 = vpop.permute.xlu0 %1837
        %1839 = vrot.lane.b32.xlu0 %v1101, 112
        %v1840 = vpop.permute.xlu0 %1839
        %1841 = vrot.lane.b32.xlu0 %v1102, 112
        %v1842 = vpop.permute.xlu0 %1841
        %1843 = vrot.lane.b32.xlu0 %v1103, 112
        %v1844 = vpop.permute.xlu0 %1843
        %1845 = vrot.lane.b32.xlu0 %v1104, 112
        %v1846 = vpop.permute.xlu0 %1845
        %1847 = vrot.lane.b32.xlu0 %v1105, 112
        %v1848 = vpop.permute.xlu0 %1847
        %1849 = vrot.lane.b32.xlu0 %v1106, 112
        %v1850 = vpop.permute.xlu0 %1849
        %1851 = vrot.lane.b32.xlu0 %v1107, 112
        %v1852 = vpop.permute.xlu0 %1851
        %1853 = vrot.lane.b32.xlu0 %v1108, 112
        %v1854 = vpop.permute.xlu0 %1853
        %1855 = vrot.lane.b32.xlu0 %v1109, 112
        %v1856 = vpop.permute.xlu0 %1855
        %v1857 = vsel %vm798, %v1838, 0
        %v1859 = vsel %vm798, %v1840, 0
        %v1861 = vsel %vm798, %v1842, 0
        %v1863 = vsel %vm798, %v1844, 0
        %v1865 = vsel %vm798, %v1846, 0
        %v1867 = vsel %vm798, %v1848, 0
        %v1869 = vsel %vm798, %v1850, 0
        %v1871 = vsel %vm798, %v1852, 0
        %v1873 = vsel %vm798, %v1854, 0
        %v1875 = vsel %vm798, %v1856, 0
        %1877 = vmatprep.subr.mxu0 0.0
        %1878 = vmatpush1.msra.mxu0 %v1828
        %1879 = vmatprep.subr.mxu0 0.0
        %1880 = vmatpush1.msra.mxu0 0.0
        %1881 = vmatprep.subr.mxu0 0.0
        %1882 = vmatpush1.msra.mxu0 0.0
        %1883 = vmatprep.subr.mxu0 0.0
        %1884 = vmatpush1.msra.mxu0 0.0
        %1885 = vmatprep.subr.mxu0 0.0
        %1886 = vmatpush1.msra.mxu0 0.0
        %1887 = vmatprep.subr.mxu0 0.0
        %1888 = vmatpush1.msra.mxu0 0.0
        %1889 = vmatprep.subr.mxu0 0.0
        %1890 = vmatpush1.msra.mxu0 0.0
        %1891 = vmatprep.subr.mxu0 0.0
        %1892 = vmatpush1.msra.mxu0 0.0
        %1893 = vmatprep.subr.mxu0 0.0
        %1894 = vmatpush1.msra.mxu0 0.0
        %1895 = vmatprep.subr.mxu0 0.0
        %1896 = vmatpush1.msra.mxu0 0.0
        %1897 = vmatprep.subr.mxu0 0.0
        %1898 = vmatpush1.msra.mxu0 0.0
        %1899 = vmatprep.subr.mxu0 0.0
        %1900 = vmatpush1.msra.mxu0 0.0
        %1901 = vmatprep.subr.mxu0 0.0
        %1902 = vmatpush1.msra.mxu0 0.0
        %1903 = vmatprep.subr.mxu0 0.0
        %1904 = vmatpush1.msra.mxu0 0.0
        %1905 = vmatprep.subr.mxu0 0.0
        %1906 = vmatpush1.msra.mxu0 0.0
        %1907 = vmatprep.subr.mxu0 0.0
        %1908 = vmatpush1.msra.mxu0 0.0
        %1909 = vmatprep.subr.mxu0 0.0
        %1910 = vmatpush1.msra.mxu0 0.0
        %1911 = vmatprep.subr.mxu0 0.0
        %1912 = vmatpush1.msra.mxu0 0.0
        %1913 = vmatprep.subr.mxu0 0.0
        %1914 = vmatpush1.msra.mxu0 0.0
        %1915 = vmatprep.subr.mxu0 0.0
        %1916 = vmatpush1.msra.mxu0 0.0
        %1917 = vmatprep.subr.mxu0 0.0
        %1918 = vmatpush1.msra.mxu0 0.0
        %1919 = vmatprep.subr.mxu0 0.0
        %1920 = vmatpush1.msra.mxu0 0.0
        %1921 = vmatprep.subr.mxu0 0.0
        %1922 = vmatpush1.msra.mxu0 0.0
        %1923 = vmatprep.subr.mxu0 0.0
        %1924 = vmatpush1.msra.mxu0 0.0
        %1925 = vmatprep.subr.mxu0 0.0
        %1926 = vmatpush1.msra.mxu0 0.0
        %1927 = vmatprep.subr.mxu0 0.0
        %1928 = vmatpush1.msra.mxu0 0.0
        %1929 = vmatprep.subr.mxu0 0.0
        %1930 = vmatpush1.msra.mxu0 0.0
        %1931 = vmatprep.subr.mxu0 0.0
        %1932 = vmatpush1.msra.mxu0 0.0
        %1933 = vmatprep.subr.mxu0 0.0
        %1934 = vmatpush1.msra.mxu0 0.0
        %1935 = vmatprep.subr.mxu0 0.0
        %1936 = vmatpush1.msra.mxu0 0.0
        %1937 = vmatprep.subr.mxu0 0.0
        %1938 = vmatpush1.msra.mxu0 0.0
        %1939 = vmatprep.subr.mxu0 0.0
        %1940 = vmatpush1.msra.mxu0 0.0
        %1941 = vmatprep.mubr.f32.mxu0 0.0
        %1942 = vmatmul.mubr.f32.gmra.mrb[0].mxu0 %v1857
        %v1943 = vpop.f32.mrb[0].mxu0
        %v1944 = vadd.f32 %v1835, %v1943
        %v1945 = vpop.f32.mrb[0].mxu0
        %1946 = vmatprep.mubr.f32.mxu0 0.0
        %1947 = vmatmul.mubr.f32.gmra.mrb[0].mxu0 %v1859
        %v1948 = vpop.f32.mrb[0].mxu0
        %v1949 = vadd.f32 %v1835, %v1948
        %v1950 = vpop.f32.mrb[0].mxu0
        %1951 = vmatprep.mubr.f32.mxu0 0.0
        %1952 = vmatmul.mubr.f32.gmra.mrb[0].mxu0 %v1861
        %v1953 = vpop.f32.mrb[0].mxu0
        %v1954 = vadd.f32 %v1835, %v1953
        %v1955 = vpop.f32.mrb[0].mxu0
        %1956 = vmatprep.mubr.f32.mxu0 0.0
        %1957 = vmatmul.mubr.f32.gmra.mrb[0].mxu0 %v1863
        %v1958 = vpop.f32.mrb[0].mxu0
        %v1959 = vadd.f32 %v1835, %v1958
        %v1960 = vpop.f32.mrb[0].mxu0
        %1961 = vmatprep.mubr.f32.mxu0 0.0
        %1962 = vmatmul.mubr.f32.gmra.mrb[0].mxu0 %v1865
        %v1963 = vpop.f32.mrb[0].mxu0
        %v1964 = vadd.f32 %v1835, %v1963
        %v1965 = vpop.f32.mrb[0].mxu0
        %1966 = vmatprep.mubr.f32.mxu0 0.0
        %1967 = vmatmul.mubr.f32.gmra.mrb[0].mxu0 %v1867
        %v1968 = vpop.f32.mrb[0].mxu0
        %v1969 = vadd.f32 %v1835, %v1968
        %v1970 = vpop.f32.mrb[0].mxu0
        %1971 = vmatprep.mubr.f32.mxu0 0.0
        %1972 = vmatmul.mubr.f32.gmra.mrb[0].mxu0 %v1869
        %v1973 = vpop.f32.mrb[0].mxu0
        %v1974 = vadd.f32 %v1835, %v1973
        %v1975 = vpop.f32.mrb[0].mxu0
        %1976 = vmatprep.mubr.f32.mxu0 0.0
        %1977 = vmatmul.mubr.f32.gmra.mrb[0].mxu0 %v1871
        %v1978 = vpop.f32.mrb[0].mxu0
        %v1979 = vadd.f32 %v1835, %v1978
        %v1980 = vpop.f32.mrb[0].mxu0
        %1981 = vmatprep.mubr.f32.mxu0 0.0
        %1982 = vmatmul.mubr.f32.gmra.mrb[0].mxu0 %v1873
        %v1983 = vpop.f32.mrb[0].mxu0
        %v1984 = vadd.f32 %v1835, %v1983
        %v1985 = vpop.f32.mrb[0].mxu0
        %1986 = vmatprep.mubr.f32.mxu0 0.0
        %1987 = vmatmul.mubr.f32.gmra.mrb[0].mxu0 %v1875
        %v1988 = vpop.f32.mrb[0].mxu0
        %v1989 = vadd.f32 %v1835, %v1988
        %v1990 = vpop.f32.mrb[0].mxu0
        %1991 = vdwg.mxu0
        %v1992 = vmul.f32 %v1944, 0.5
        %v1993 = vmul.f32 %v1949, 0.5
        %v1994 = vmul.f32 %v1954, 0.5
        %v1995 = vmul.f32 %v1959, 0.5
        %v1996 = vmul.f32 %v1964, 0.5
        %v1997 = vmul.f32 %v1969, 0.5
        %v1998 = vmul.f32 %v1974, 0.5
        %v1999 = vmul.f32 %v1979, 0.5
        %v2000 = vmul.f32 %v1984, 0.5
        %v2001 = vmul.f32 %v1989, 0.5
        %v2002 = vmul.f32 %v1944, 0.70710677
        %v2003 = vmul.f32 %v1949, 0.70710677
        %v2004 = vmul.f32 %v1954, 0.70710677
        %v2005 = vmul.f32 %v1959, 0.70710677
        %v2006 = vmul.f32 %v1964, 0.70710677
        %v2007 = vmul.f32 %v1969, 0.70710677
        %v2008 = vmul.f32 %v1974, 0.70710677
        %v2009 = vmul.f32 %v1979, 0.70710677
        %v2010 = vmul.f32 %v1984, 0.70710677
        %v2011 = vmul.f32 %v1989, 0.70710677
        %v2012 = verf.f32.pop %v2002
        %v2013 = verf.f32.pop %v2003
        %v2014 = verf.f32.pop %v2004
        %v2015 = verf.f32.pop %v2005
        %v2016 = verf.f32.pop %v2006
        %v2017 = verf.f32.pop %v2007
        %v2018 = verf.f32.pop %v2008
        %v2019 = verf.f32.pop %v2009
        %v2020 = verf.f32.pop %v2010
        %v2021 = verf.f32.pop %v2011
        %v2022 = vadd.f32 %v2012, 1.0
        %v2023 = vadd.f32 %v2013, 1.0
        %v2024 = vadd.f32 %v2014, 1.0
        %v2025 = vadd.f32 %v2015, 1.0
        %v2026 = vadd.f32 %v2016, 1.0
        %v2027 = vadd.f32 %v2017, 1.0
        %v2028 = vadd.f32 %v2018, 1.0
        %v2029 = vadd.f32 %v2019, 1.0
        %v2030 = vadd.f32 %v2020, 1.0
        %v2031 = vadd.f32 %v2021, 1.0
        %v2032 = vmul.f32 %v1992, %v2022
        %v2033 = vmul.f32 %v1993, %v2023
        %v2034 = vmul.f32 %v1994, %v2024
        %v2035 = vmul.f32 %v1995, %v2025
        %v2036 = vmul.f32 %v1996, %v2026
        %v2037 = vmul.f32 %v1997, %v2027
        %v2038 = vmul.f32 %v1998, %v2028
        %v2039 = vmul.f32 %v1999, %v2029
        %v2040 = vmul.f32 %v2000, %v2030
        %v2041 = vmul.f32 %v2001, %v2031
        %s2042 = scalar_lea.vmem %s607, 64
        %v2043 = vld [vmem:[%s2042] sm:$0xff]
        %v2044 = vld [vmem:[%s2042 + $0x8] sm:$0xff]
        %v2045 = vld [vmem:[%s2042 + $0x10] sm:$0xff]
        %v2046 = vld [vmem:[%s2042 + $0x18] sm:$0xff]
        %v2048 = vsel %vm944, %v2032, 0
        %v2051 = vsel %vm944, %v2033, 0
        %v2054 = vsel %vm944, %v2034, 0
        %v2057 = vsel %vm944, %v2035, 0
        %v2060 = vsel %vm944, %v2036, 0
        %v2063 = vsel %vm944, %v2037, 0
        %v2066 = vsel %vm944, %v2038, 0
        %v2069 = vsel %vm944, %v2039, 0
        %v2072 = vsel %vm944, %v2040, 0
        %v2075 = vsel %vm944, %v2041, 0
        %2077 = vmatprep.subr.mxu0 0.0
        %2078 = vmatpush1.msra.mxu0 %v2043
        %2079 = vmatprep.subr.mxu0 0.0
        %2080 = vmatpush1.msra.mxu0 %v2044
        %2081 = vmatprep.subr.mxu0 0.0
        %2082 = vmatpush1.msra.mxu0 %v2045
        %2083 = vmatprep.subr.mxu0 0.0
        %2084 = vmatpush1.msra.mxu0 %v2046
        %2085 = vmatprep.subr.mxu0 0.0
        %2086 = vmatpush1.msra.mxu0 0.0
        %2087 = vmatprep.subr.mxu0 0.0
        %2088 = vmatpush1.msra.mxu0 0.0
        %2089 = vmatprep.subr.mxu0 0.0
        %2090 = vmatpush1.msra.mxu0 0.0
        %2091 = vmatprep.subr.mxu0 0.0
        %2092 = vmatpush1.msra.mxu0 0.0
        %2093 = vmatprep.subr.mxu0 0.0
        %2094 = vmatpush1.msra.mxu0 0.0
        %2095 = vmatprep.subr.mxu0 0.0
        %2096 = vmatpush1.msra.mxu0 0.0
        %2097 = vmatprep.subr.mxu0 0.0
        %2098 = vmatpush1.msra.mxu0 0.0
        %2099 = vmatprep.subr.mxu0 0.0
        %2100 = vmatpush1.msra.mxu0 0.0
        %2101 = vmatprep.subr.mxu0 0.0
        %2102 = vmatpush1.msra.mxu0 0.0
        %2103 = vmatprep.subr.mxu0 0.0
        %2104 = vmatpush1.msra.mxu0 0.0
        %2105 = vmatprep.subr.mxu0 0.0
        %2106 = vmatpush1.msra.mxu0 0.0
        %2107 = vmatprep.subr.mxu0 0.0
        %2108 = vmatpush1.msra.mxu0 0.0
        %2109 = vmatprep.subr.mxu0 0.0
        %2110 = vmatpush1.msra.mxu0 0.0
        %2111 = vmatprep.subr.mxu0 0.0
        %2112 = vmatpush1.msra.mxu0 0.0
        %2113 = vmatprep.subr.mxu0 0.0
        %2114 = vmatpush1.msra.mxu0 0.0
        %2115 = vmatprep.subr.mxu0 0.0
        %2116 = vmatpush1.msra.mxu0 0.0
        %2117 = vmatprep.subr.mxu0 0.0
        %2118 = vmatpush1.msra.mxu0 0.0
        %2119 = vmatprep.subr.mxu0 0.0
        %2120 = vmatpush1.msra.mxu0 0.0
        %2121 = vmatprep.subr.mxu0 0.0
        %2122 = vmatpush1.msra.mxu0 0.0
        %2123 = vmatprep.subr.mxu0 0.0
        %2124 = vmatpush1.msra.mxu0 0.0
        %2125 = vmatprep.subr.mxu0 0.0
        %2126 = vmatpush1.msra.mxu0 0.0
        %2127 = vmatprep.subr.mxu0 0.0
        %2128 = vmatpush1.msra.mxu0 0.0
        %2129 = vmatprep.subr.mxu0 0.0
        %2130 = vmatpush1.msra.mxu0 0.0
        %2131 = vmatprep.subr.mxu0 0.0
        %2132 = vmatpush1.msra.mxu0 0.0
        %2133 = vmatprep.subr.mxu0 0.0
        %2134 = vmatpush1.msra.mxu0 0.0
        %2135 = vmatprep.subr.mxu0 0.0
        %2136 = vmatpush1.msra.mxu0 0.0
        %2137 = vmatprep.subr.mxu0 0.0
        %2138 = vmatpush1.msra.mxu0 0.0
        %2139 = vmatprep.subr.mxu0 0.0
        %2140 = vmatpush1.msra.mxu0 0.0
        %2141 = vmatprep.mubr.f32.mxu0 0.0
        %2142 = vmatmul.mubr.f32.gmra.mrb[0].mxu0 %v2048
        %v2143 = vpop.f32.mrb[0].mxu0
        %v2144 = vadd.f32 0.0, %v2143
        %v2145 = vpop.f32.mrb[0].mxu0
        %2146 = vmatprep.mubr.f32.mxu0 0.0
        %2147 = vmatmul.mubr.f32.gmra.mrb[0].mxu0 %v2051
        %v2148 = vpop.f32.mrb[0].mxu0
        %v2149 = vadd.f32 0.0, %v2148
        %v2150 = vpop.f32.mrb[0].mxu0
        %2151 = vmatprep.mubr.f32.mxu0 0.0
        %2152 = vmatmul.mubr.f32.gmra.mrb[0].mxu0 %v2054
        %v2153 = vpop.f32.mrb[0].mxu0
        %v2154 = vadd.f32 0.0, %v2153
        %v2155 = vpop.f32.mrb[0].mxu0
        %2156 = vmatprep.mubr.f32.mxu0 0.0
        %2157 = vmatmul.mubr.f32.gmra.mrb[0].mxu0 %v2057
        %v2158 = vpop.f32.mrb[0].mxu0
        %v2159 = vadd.f32 0.0, %v2158
        %v2160 = vpop.f32.mrb[0].mxu0
        %2161 = vmatprep.mubr.f32.mxu0 0.0
        %2162 = vmatmul.mubr.f32.gmra.mrb[0].mxu0 %v2060
        %v2163 = vpop.f32.mrb[0].mxu0
        %v2164 = vadd.f32 0.0, %v2163
        %v2165 = vpop.f32.mrb[0].mxu0
        %2166 = vmatprep.mubr.f32.mxu0 0.0
        %2167 = vmatmul.mubr.f32.gmra.mrb[0].mxu0 %v2063
        %v2168 = vpop.f32.mrb[0].mxu0
        %v2169 = vadd.f32 0.0, %v2168
        %v2170 = vpop.f32.mrb[0].mxu0
        %2171 = vmatprep.mubr.f32.mxu0 0.0
        %2172 = vmatmul.mubr.f32.gmra.mrb[0].mxu0 %v2066
        %v2173 = vpop.f32.mrb[0].mxu0
        %v2174 = vadd.f32 0.0, %v2173
        %v2175 = vpop.f32.mrb[0].mxu0
        %2176 = vmatprep.mubr.f32.mxu0 0.0
        %2177 = vmatmul.mubr.f32.gmra.mrb[0].mxu0 %v2069
        %v2178 = vpop.f32.mrb[0].mxu0
        %v2179 = vadd.f32 0.0, %v2178
        %v2180 = vpop.f32.mrb[0].mxu0
        %2181 = vmatprep.mubr.f32.mxu0 0.0
        %2182 = vmatmul.mubr.f32.gmra.mrb[0].mxu0 %v2072
        %v2183 = vpop.f32.mrb[0].mxu0
        %v2184 = vadd.f32 0.0, %v2183
        %v2185 = vpop.f32.mrb[0].mxu0
        %2186 = vmatprep.mubr.f32.mxu0 0.0
        %2187 = vmatmul.mubr.f32.gmra.mrb[0].mxu0 %v2075
        %v2188 = vpop.f32.mrb[0].mxu0
        %v2189 = vadd.f32 0.0, %v2188
        %v2190 = vpop.f32.mrb[0].mxu0
        %2191 = vdwg.mxu0
        %s2192 = scalar_lea.vmem %s505, 24 [#allocation7]
        %v2193 = vld [vmem:[%s2192] sm:$0xff]
        %s2194 = scalar_lea.vmem %s602, 3
        %v2195 = vld [vmem:[%s2194] sm:$0x1]
        %v2197 = vlaneseq
        %v2198 = vshrl.u32 %v2197, 7
        %v2199 = vsub.s32 0, %v2198
        %v2200 = vrot.slane %v2195, %v2199
        %2202 = vrot.lane.b32.xlu0 %v1100, 104
        %v2203 = vpop.permute.xlu0 %2202
        %2204 = vrot.lane.b32.xlu0 %v1101, 104
        %v2205 = vpop.permute.xlu0 %2204
        %2206 = vrot.lane.b32.xlu0 %v1102, 104
        %v2207 = vpop.permute.xlu0 %2206
        %2208 = vrot.lane.b32.xlu0 %v1103, 104
        %v2209 = vpop.permute.xlu0 %2208
        %2210 = vrot.lane.b32.xlu0 %v1104, 104
        %v2211 = vpop.permute.xlu0 %2210
        %2212 = vrot.lane.b32.xlu0 %v1105, 104
        %v2213 = vpop.permute.xlu0 %2212
        %2214 = vrot.lane.b32.xlu0 %v1106, 104
        %v2215 = vpop.permute.xlu0 %2214
        %2216 = vrot.lane.b32.xlu0 %v1107, 104
        %v2217 = vpop.permute.xlu0 %2216
        %2218 = vrot.lane.b32.xlu0 %v1108, 104
        %v2219 = vpop.permute.xlu0 %2218
        %2220 = vrot.lane.b32.xlu0 %v1109, 104
        %v2221 = vpop.permute.xlu0 %2220
        %v2222 = vsel %vm798, %v2203, 0
        %v2224 = vsel %vm798, %v2205, 0
        %v2226 = vsel %vm798, %v2207, 0
        %v2228 = vsel %vm798, %v2209, 0
        %v2230 = vsel %vm798, %v2211, 0
        %v2232 = vsel %vm798, %v2213, 0
        %v2234 = vsel %vm798, %v2215, 0
        %v2236 = vsel %vm798, %v2217, 0
        %v2238 = vsel %vm798, %v2219, 0
        %v2240 = vsel %vm798, %v2221, 0
        %2242 = vmatprep.subr.mxu0 0.0
        %2243 = vmatpush1.msra.mxu0 %v2193
        %2244 = vmatprep.subr.mxu0 0.0
        %2245 = vmatpush1.msra.mxu0 0.0
        %2246 = vmatprep.subr.mxu0 0.0
        %2247 = vmatpush1.msra.mxu0 0.0
        %2248 = vmatprep.subr.mxu0 0.0
        %2249 = vmatpush1.msra.mxu0 0.0
        %2250 = vmatprep.subr.mxu0 0.0
        %2251 = vmatpush1.msra.mxu0 0.0
        %2252 = vmatprep.subr.mxu0 0.0
        %2253 = vmatpush1.msra.mxu0 0.0
        %2254 = vmatprep.subr.mxu0 0.0
        %2255 = vmatpush1.msra.mxu0 0.0
        %2256 = vmatprep.subr.mxu0 0.0
        %2257 = vmatpush1.msra.mxu0 0.0
        %2258 = vmatprep.subr.mxu0 0.0
        %2259 = vmatpush1.msra.mxu0 0.0
        %2260 = vmatprep.subr.mxu0 0.0
        %2261 = vmatpush1.msra.mxu0 0.0
        %2262 = vmatprep.subr.mxu0 0.0
        %2263 = vmatpush1.msra.mxu0 0.0
        %2264 = vmatprep.subr.mxu0 0.0
        %2265 = vmatpush1.msra.mxu0 0.0
        %2266 = vmatprep.subr.mxu0 0.0
        %2267 = vmatpush1.msra.mxu0 0.0
        %2268 = vmatprep.subr.mxu0 0.0
        %2269 = vmatpush1.msra.mxu0 0.0
        %2270 = vmatprep.subr.mxu0 0.0
        %2271 = vmatpush1.msra.mxu0 0.0
        %2272 = vmatprep.subr.mxu0 0.0
        %2273 = vmatpush1.msra.mxu0 0.0
        %2274 = vmatprep.subr.mxu0 0.0
        %2275 = vmatpush1.msra.mxu0 0.0
        %2276 = vmatprep.subr.mxu0 0.0
        %2277 = vmatpush1.msra.mxu0 0.0
        %2278 = vmatprep.subr.mxu0 0.0
        %2279 = vmatpush1.msra.mxu0 0.0
        %2280 = vmatprep.subr.mxu0 0.0
        %2281 = vmatpush1.msra.mxu0 0.0
        %2282 = vmatprep.subr.mxu0 0.0
        %2283 = vmatpush1.msra.mxu0 0.0
        %2284 = vmatprep.subr.mxu0 0.0
        %2285 = vmatpush1.msra.mxu0 0.0
        %2286 = vmatprep.subr.mxu0 0.0
        %2287 = vmatpush1.msra.mxu0 0.0
        %2288 = vmatprep.subr.mxu0 0.0
        %2289 = vmatpush1.msra.mxu0 0.0
        %2290 = vmatprep.subr.mxu0 0.0
        %2291 = vmatpush1.msra.mxu0 0.0
        %2292 = vmatprep.subr.mxu0 0.0
        %2293 = vmatpush1.msra.mxu0 0.0
        %2294 = vmatprep.subr.mxu0 0.0
        %2295 = vmatpush1.msra.mxu0 0.0
        %2296 = vmatprep.subr.mxu0 0.0
        %2297 = vmatpush1.msra.mxu0 0.0
        %2298 = vmatprep.subr.mxu0 0.0
        %2299 = vmatpush1.msra.mxu0 0.0
        %2300 = vmatprep.subr.mxu0 0.0
        %2301 = vmatpush1.msra.mxu0 0.0
        %2302 = vmatprep.subr.mxu0 0.0
        %2303 = vmatpush1.msra.mxu0 0.0
        %2304 = vmatprep.subr.mxu0 0.0
        %2305 = vmatpush1.msra.mxu0 0.0
        %2306 = vmatprep.mubr.f32.mxu0 0.0
        %2307 = vmatmul.mubr.f32.gmra.mrb[0].mxu0 %v2222
        %v2308 = vpop.f32.mrb[0].mxu0
        %v2309 = vadd.f32 %v2200, %v2308
        %v2310 = vpop.f32.mrb[0].mxu0
        %2311 = vmatprep.mubr.f32.mxu0 0.0
        %2312 = vmatmul.mubr.f32.gmra.mrb[0].mxu0 %v2224
        %v2313 = vpop.f32.mrb[0].mxu0
        %v2314 = vadd.f32 %v2200, %v2313
        %v2315 = vpop.f32.mrb[0].mxu0
        %2316 = vmatprep.mubr.f32.mxu0 0.0
        %2317 = vmatmul.mubr.f32.gmra.mrb[0].mxu0 %v2226
        %v2318 = vpop.f32.mrb[0].mxu0
        %v2319 = vadd.f32 %v2200, %v2318
        %v2320 = vpop.f32.mrb[0].mxu0
        %2321 = vmatprep.mubr.f32.mxu0 0.0
        %2322 = vmatmul.mubr.f32.gmra.mrb[0].mxu0 %v2228
        %v2323 = vpop.f32.mrb[0].mxu0
        %v2324 = vadd.f32 %v2200, %v2323
        %v2325 = vpop.f32.mrb[0].mxu0
        %2326 = vmatprep.mubr.f32.mxu0 0.0
        %2327 = vmatmul.mubr.f32.gmra.mrb[0].mxu0 %v2230
        %v2328 = vpop.f32.mrb[0].mxu0
        %v2329 = vadd.f32 %v2200, %v2328
        %v2330 = vpop.f32.mrb[0].mxu0
        %2331 = vmatprep.mubr.f32.mxu0 0.0
        %2332 = vmatmul.mubr.f32.gmra.mrb[0].mxu0 %v2232
        %v2333 = vpop.f32.mrb[0].mxu0
        %v2334 = vadd.f32 %v2200, %v2333
        %v2335 = vpop.f32.mrb[0].mxu0
        %2336 = vmatprep.mubr.f32.mxu0 0.0
        %2337 = vmatmul.mubr.f32.gmra.mrb[0].mxu0 %v2234
        %v2338 = vpop.f32.mrb[0].mxu0
        %v2339 = vadd.f32 %v2200, %v2338
        %v2340 = vpop.f32.mrb[0].mxu0
        %2341 = vmatprep.mubr.f32.mxu0 0.0
        %2342 = vmatmul.mubr.f32.gmra.mrb[0].mxu0 %v2236
        %v2343 = vpop.f32.mrb[0].mxu0
        %v2344 = vadd.f32 %v2200, %v2343
        %v2345 = vpop.f32.mrb[0].mxu0
        %2346 = vmatprep.mubr.f32.mxu0 0.0
        %2347 = vmatmul.mubr.f32.gmra.mrb[0].mxu0 %v2238
        %v2348 = vpop.f32.mrb[0].mxu0
        %v2349 = vadd.f32 %v2200, %v2348
        %v2350 = vpop.f32.mrb[0].mxu0
        %2351 = vmatprep.mubr.f32.mxu0 0.0
        %2352 = vmatmul.mubr.f32.gmra.mrb[0].mxu0 %v2240
        %v2353 = vpop.f32.mrb[0].mxu0
        %v2354 = vadd.f32 %v2200, %v2353
        %v2355 = vpop.f32.mrb[0].mxu0
        %2356 = vdwg.mxu0
        %v2357 = vmul.f32 %v2309, 0.5
        %v2358 = vmul.f32 %v2314, 0.5
        %v2359 = vmul.f32 %v2319, 0.5
        %v2360 = vmul.f32 %v2324, 0.5
        %v2361 = vmul.f32 %v2329, 0.5
        %v2362 = vmul.f32 %v2334, 0.5
        %v2363 = vmul.f32 %v2339, 0.5
        %v2364 = vmul.f32 %v2344, 0.5
        %v2365 = vmul.f32 %v2349, 0.5
        %v2366 = vmul.f32 %v2354, 0.5
        %v2367 = vmul.f32 %v2309, 0.70710677
        %v2368 = vmul.f32 %v2314, 0.70710677
        %v2369 = vmul.f32 %v2319, 0.70710677
        %v2370 = vmul.f32 %v2324, 0.70710677
        %v2371 = vmul.f32 %v2329, 0.70710677
        %v2372 = vmul.f32 %v2334, 0.70710677
        %v2373 = vmul.f32 %v2339, 0.70710677
        %v2374 = vmul.f32 %v2344, 0.70710677
        %v2375 = vmul.f32 %v2349, 0.70710677
        %v2376 = vmul.f32 %v2354, 0.70710677
        %v2377 = verf.f32.pop %v2367
        %v2378 = verf.f32.pop %v2368
        %v2379 = verf.f32.pop %v2369
        %v2380 = verf.f32.pop %v2370
        %v2381 = verf.f32.pop %v2371
        %v2382 = verf.f32.pop %v2372
        %v2383 = verf.f32.pop %v2373
        %v2384 = verf.f32.pop %v2374
        %v2385 = verf.f32.pop %v2375
        %v2386 = verf.f32.pop %v2376
        %v2387 = vadd.f32 %v2377, 1.0
        %v2388 = vadd.f32 %v2378, 1.0
        %v2389 = vadd.f32 %v2379, 1.0
        %v2390 = vadd.f32 %v2380, 1.0
        %v2391 = vadd.f32 %v2381, 1.0
        %v2392 = vadd.f32 %v2382, 1.0
        %v2393 = vadd.f32 %v2383, 1.0
        %v2394 = vadd.f32 %v2384, 1.0
        %v2395 = vadd.f32 %v2385, 1.0
        %v2396 = vadd.f32 %v2386, 1.0
        %v2397 = vmul.f32 %v2357, %v2387
        %v2398 = vmul.f32 %v2358, %v2388
        %v2399 = vmul.f32 %v2359, %v2389
        %v2400 = vmul.f32 %v2360, %v2390
        %v2401 = vmul.f32 %v2361, %v2391
        %v2402 = vmul.f32 %v2362, %v2392
        %v2403 = vmul.f32 %v2363, %v2393
        %v2404 = vmul.f32 %v2364, %v2394
        %v2405 = vmul.f32 %v2365, %v2395
        %v2406 = vmul.f32 %v2366, %v2396
        %s2407 = scalar_lea.vmem %s607, 96
        %v2408 = vld [vmem:[%s2407] sm:$0xff]
        %v2409 = vld [vmem:[%s2407 + $0x8] sm:$0xff]
        %v2410 = vld [vmem:[%s2407 + $0x10] sm:$0xff]
        %v2411 = vld [vmem:[%s2407 + $0x18] sm:$0xff]
        %v2413 = vsel %vm944, %v2397, 0
        %v2416 = vsel %vm944, %v2398, 0
        %v2419 = vsel %vm944, %v2399, 0
        %v2422 = vsel %vm944, %v2400, 0
        %v2425 = vsel %vm944, %v2401, 0
        %v2428 = vsel %vm944, %v2402, 0
        %v2431 = vsel %vm944, %v2403, 0
        %v2434 = vsel %vm944, %v2404, 0
        %v2437 = vsel %vm944, %v2405, 0
        %v2440 = vsel %vm944, %v2406, 0
        %2442 = vmatprep.subr.mxu0 0.0
        %2443 = vmatpush1.msra.mxu0 %v2408
        %2444 = vmatprep.subr.mxu0 0.0
        %2445 = vmatpush1.msra.mxu0 %v2409
        %2446 = vmatprep.subr.mxu0 0.0
        %2447 = vmatpush1.msra.mxu0 %v2410
        %2448 = vmatprep.subr.mxu0 0.0
        %2449 = vmatpush1.msra.mxu0 %v2411
        %2450 = vmatprep.subr.mxu0 0.0
        %2451 = vmatpush1.msra.mxu0 0.0
        %2452 = vmatprep.subr.mxu0 0.0
        %2453 = vmatpush1.msra.mxu0 0.0
        %2454 = vmatprep.subr.mxu0 0.0
        %2455 = vmatpush1.msra.mxu0 0.0
        %2456 = vmatprep.subr.mxu0 0.0
        %2457 = vmatpush1.msra.mxu0 0.0
        %2458 = vmatprep.subr.mxu0 0.0
        %2459 = vmatpush1.msra.mxu0 0.0
        %2460 = vmatprep.subr.mxu0 0.0
        %2461 = vmatpush1.msra.mxu0 0.0
        %2462 = vmatprep.subr.mxu0 0.0
        %2463 = vmatpush1.msra.mxu0 0.0
        %2464 = vmatprep.subr.mxu0 0.0
        %2465 = vmatpush1.msra.mxu0 0.0
        %2466 = vmatprep.subr.mxu0 0.0
        %2467 = vmatpush1.msra.mxu0 0.0
        %2468 = vmatprep.subr.mxu0 0.0
        %2469 = vmatpush1.msra.mxu0 0.0
        %2470 = vmatprep.subr.mxu0 0.0
        %2471 = vmatpush1.msra.mxu0 0.0
        %2472 = vmatprep.subr.mxu0 0.0
        %2473 = vmatpush1.msra.mxu0 0.0
        %2474 = vmatprep.subr.mxu0 0.0
        %2475 = vmatpush1.msra.mxu0 0.0
        %2476 = vmatprep.subr.mxu0 0.0
        %2477 = vmatpush1.msra.mxu0 0.0
        %2478 = vmatprep.subr.mxu0 0.0
        %2479 = vmatpush1.msra.mxu0 0.0
        %2480 = vmatprep.subr.mxu0 0.0
        %2481 = vmatpush1.msra.mxu0 0.0
        %2482 = vmatprep.subr.mxu0 0.0
        %2483 = vmatpush1.msra.mxu0 0.0
        %2484 = vmatprep.subr.mxu0 0.0
        %2485 = vmatpush1.msra.mxu0 0.0
        %2486 = vmatprep.subr.mxu0 0.0
        %2487 = vmatpush1.msra.mxu0 0.0
        %2488 = vmatprep.subr.mxu0 0.0
        %2489 = vmatpush1.msra.mxu0 0.0
        %2490 = vmatprep.subr.mxu0 0.0
        %2491 = vmatpush1.msra.mxu0 0.0
        %2492 = vmatprep.subr.mxu0 0.0
        %2493 = vmatpush1.msra.mxu0 0.0
        %2494 = vmatprep.subr.mxu0 0.0
        %2495 = vmatpush1.msra.mxu0 0.0
        %2496 = vmatprep.subr.mxu0 0.0
        %2497 = vmatpush1.msra.mxu0 0.0
        %2498 = vmatprep.subr.mxu0 0.0
        %2499 = vmatpush1.msra.mxu0 0.0
        %2500 = vmatprep.subr.mxu0 0.0
        %2501 = vmatpush1.msra.mxu0 0.0
        %2502 = vmatprep.subr.mxu0 0.0
        %2503 = vmatpush1.msra.mxu0 0.0
        %2504 = vmatprep.subr.mxu0 0.0
        %2505 = vmatpush1.msra.mxu0 0.0
        %2506 = vmatprep.mubr.f32.mxu0 0.0
        %2507 = vmatmul.mubr.f32.gmra.mrb[0].mxu0 %v2413
        %v2508 = vpop.f32.mrb[0].mxu0
        %v2509 = vadd.f32 0.0, %v2508
        %v2510 = vpop.f32.mrb[0].mxu0
        %2511 = vmatprep.mubr.f32.mxu0 0.0
        %2512 = vmatmul.mubr.f32.gmra.mrb[0].mxu0 %v2416
        %v2513 = vpop.f32.mrb[0].mxu0
        %v2514 = vadd.f32 0.0, %v2513
        %v2515 = vpop.f32.mrb[0].mxu0
        %2516 = vmatprep.mubr.f32.mxu0 0.0
        %2517 = vmatmul.mubr.f32.gmra.mrb[0].mxu0 %v2419
        %v2518 = vpop.f32.mrb[0].mxu0
        %v2519 = vadd.f32 0.0, %v2518
        %v2520 = vpop.f32.mrb[0].mxu0
        %2521 = vmatprep.mubr.f32.mxu0 0.0
        %2522 = vmatmul.mubr.f32.gmra.mrb[0].mxu0 %v2422
        %v2523 = vpop.f32.mrb[0].mxu0
        %v2524 = vadd.f32 0.0, %v2523
        %v2525 = vpop.f32.mrb[0].mxu0
        %2526 = vmatprep.mubr.f32.mxu0 0.0
        %2527 = vmatmul.mubr.f32.gmra.mrb[0].mxu0 %v2425
        %v2528 = vpop.f32.mrb[0].mxu0
        %v2529 = vadd.f32 0.0, %v2528
        %v2530 = vpop.f32.mrb[0].mxu0
        %2531 = vmatprep.mubr.f32.mxu0 0.0
        %2532 = vmatmul.mubr.f32.gmra.mrb[0].mxu0 %v2428
        %v2533 = vpop.f32.mrb[0].mxu0
        %v2534 = vadd.f32 0.0, %v2533
        %v2535 = vpop.f32.mrb[0].mxu0
        %2536 = vmatprep.mubr.f32.mxu0 0.0
        %2537 = vmatmul.mubr.f32.gmra.mrb[0].mxu0 %v2431
        %v2538 = vpop.f32.mrb[0].mxu0
        %v2539 = vadd.f32 0.0, %v2538
        %v2540 = vpop.f32.mrb[0].mxu0
        %2541 = vmatprep.mubr.f32.mxu0 0.0
        %2542 = vmatmul.mubr.f32.gmra.mrb[0].mxu0 %v2434
        %v2543 = vpop.f32.mrb[0].mxu0
        %v2544 = vadd.f32 0.0, %v2543
        %v2545 = vpop.f32.mrb[0].mxu0
        %2546 = vmatprep.mubr.f32.mxu0 0.0
        %2547 = vmatmul.mubr.f32.gmra.mrb[0].mxu0 %v2437
        %v2548 = vpop.f32.mrb[0].mxu0
        %v2549 = vadd.f32 0.0, %v2548
        %v2550 = vpop.f32.mrb[0].mxu0
        %2551 = vmatprep.mubr.f32.mxu0 0.0
        %2552 = vmatmul.mubr.f32.gmra.mrb[0].mxu0 %v2440
        %v2553 = vpop.f32.mrb[0].mxu0
        %v2554 = vadd.f32 0.0, %v2553
        %v2555 = vpop.f32.mrb[0].mxu0
        %2556 = vdwg.mxu0
        %2567 = vrot.lane.b32.xlu0 %v1779, 8
        %v2568 = vpop.permute.xlu0 %2567
        %2569 = vrot.lane.b32.xlu0 %v1784, 8
        %v2570 = vpop.permute.xlu0 %2569
        %2571 = vrot.lane.b32.xlu0 %v1789, 8
        %v2572 = vpop.permute.xlu0 %2571
        %2573 = vrot.lane.b32.xlu0 %v1794, 8
        %v2574 = vpop.permute.xlu0 %2573
        %2575 = vrot.lane.b32.xlu0 %v1799, 8
        %v2576 = vpop.permute.xlu0 %2575
        %2577 = vrot.lane.b32.xlu0 %v1804, 8
        %v2578 = vpop.permute.xlu0 %2577
        %2579 = vrot.lane.b32.xlu0 %v1809, 8
        %v2580 = vpop.permute.xlu0 %2579
        %2581 = vrot.lane.b32.xlu0 %v1814, 8
        %v2582 = vpop.permute.xlu0 %2581
        %2583 = vrot.lane.b32.xlu0 %v1819, 8
        %v2584 = vpop.permute.xlu0 %2583
        %2585 = vrot.lane.b32.xlu0 %v1824, 8
        %v2586 = vpop.permute.xlu0 %2585
        %2607 = vrot.lane.b32.xlu0 %v2144, 16
        %v2608 = vpop.permute.xlu0 %2607
        %2609 = vrot.lane.b32.xlu0 %v2149, 16
        %v2610 = vpop.permute.xlu0 %2609
        %2611 = vrot.lane.b32.xlu0 %v2154, 16
        %v2612 = vpop.permute.xlu0 %2611
        %2613 = vrot.lane.b32.xlu0 %v2159, 16
        %v2614 = vpop.permute.xlu0 %2613
        %2615 = vrot.lane.b32.xlu0 %v2164, 16
        %v2616 = vpop.permute.xlu0 %2615
        %2617 = vrot.lane.b32.xlu0 %v2169, 16
        %v2618 = vpop.permute.xlu0 %2617
        %2619 = vrot.lane.b32.xlu0 %v2174, 16
        %v2620 = vpop.permute.xlu0 %2619
        %2621 = vrot.lane.b32.xlu0 %v2179, 16
        %v2622 = vpop.permute.xlu0 %2621
        %2623 = vrot.lane.b32.xlu0 %v2184, 16
        %v2624 = vpop.permute.xlu0 %2623
        %2625 = vrot.lane.b32.xlu0 %v2189, 16
        %v2626 = vpop.permute.xlu0 %2625
        %2647 = vrot.lane.b32.xlu0 %v2509, 24
        %v2648 = vpop.permute.xlu0 %2647
        %2649 = vrot.lane.b32.xlu0 %v2514, 24
        %v2650 = vpop.permute.xlu0 %2649
        %2651 = vrot.lane.b32.xlu0 %v2519, 24
        %v2652 = vpop.permute.xlu0 %2651
        %2653 = vrot.lane.b32.xlu0 %v2524, 24
        %v2654 = vpop.permute.xlu0 %2653
        %2655 = vrot.lane.b32.xlu0 %v2529, 24
        %v2656 = vpop.permute.xlu0 %2655
        %2657 = vrot.lane.b32.xlu0 %v2534, 24
        %v2658 = vpop.permute.xlu0 %2657
        %2659 = vrot.lane.b32.xlu0 %v2539, 24
        %v2660 = vpop.permute.xlu0 %2659
        %2661 = vrot.lane.b32.xlu0 %v2544, 24
        %v2662 = vpop.permute.xlu0 %2661
        %2663 = vrot.lane.b32.xlu0 %v2549, 24
        %v2664 = vpop.permute.xlu0 %2663
        %2665 = vrot.lane.b32.xlu0 %v2554, 24
        %v2666 = vpop.permute.xlu0 %2665
        %v2677 = vsel %vm798, %v1414, %v2568
        %v2678 = vsel %vm798, %v1419, %v2570
        %v2679 = vsel %vm798, %v1424, %v2572
        %v2680 = vsel %vm798, %v1429, %v2574
        %v2681 = vsel %vm798, %v1434, %v2576
        %v2682 = vsel %vm798, %v1439, %v2578
        %v2683 = vsel %vm798, %v1444, %v2580
        %v2684 = vsel %vm798, %v1449, %v2582
        %v2685 = vsel %vm798, %v1454, %v2584
        %v2686 = vsel %vm798, %v1459, %v2586
        %vm2687 = vcmask 130048
        %v2688 = vsel %vm2687, %v2677, %v2608
        %v2689 = vsel %vm2687, %v2678, %v2610
        %v2690 = vsel %vm2687, %v2679, %v2612
        %v2691 = vsel %vm2687, %v2680, %v2614
        %v2692 = vsel %vm2687, %v2681, %v2616
        %v2693 = vsel %vm2687, %v2682, %v2618
        %v2694 = vsel %vm2687, %v2683, %v2620
        %v2695 = vsel %vm2687, %v2684, %v2622
        %v2696 = vsel %vm2687, %v2685, %v2624
        %v2697 = vsel %vm2687, %v2686, %v2626
        %vm2698 = vcmask 195584
        %v2699 = vsel %vm2698, %v2688, %v2648
        %v2700 = vsel %vm2698, %v2689, %v2650
        %v2701 = vsel %vm2698, %v2690, %v2652
        %v2702 = vsel %vm2698, %v2691, %v2654
        %v2703 = vsel %vm2698, %v2692, %v2656
        %v2704 = vsel %vm2698, %v2693, %v2658
        %v2705 = vsel %vm2698, %v2694, %v2660
        %v2706 = vsel %vm2698, %v2695, %v2662
        %v2707 = vsel %vm2698, %v2696, %v2664
        %v2708 = vsel %vm2698, %v2697, %v2666
        %v2709 = vld [vmem:[%s610] sm:$0x1]
        %v2711 = vlaneseq
        %v2712 = vshrl.u32 %v2711, 7
        %v2713 = vsub.s32 0, %v2712
        %v2714 = vrot.slane %v2709, %v2713
        %v2716 = vadd.f32 %v2699, %v2714
        %v2717 = vadd.f32 %v2700, %v2714
        %v2718 = vadd.f32 %v2701, %v2714
        %v2719 = vadd.f32 %v2702, %v2714
        %v2720 = vadd.f32 %v2703, %v2714
        %v2721 = vadd.f32 %v2704, %v2714
        %v2722 = vadd.f32 %v2705, %v2714
        %v2723 = vadd.f32 %v2706, %v2714
        %v2724 = vadd.f32 %v2707, %v2714
        %v2725 = vadd.f32 %v2708, %v2714
        %v2726 = vld [vmem:[#allocation6] sm:$0xff]
        %v2727 = vld [vmem:[#allocation6 + $0x8] sm:$0xff]
        %v2728 = vld [vmem:[#allocation6 + $0x10] sm:$0xff]
        %v2729 = vld [vmem:[#allocation6 + $0x18] sm:$0xff]
        %v2730 = vld [vmem:[#allocation6 + $0x20] sm:$0xff]
        %v2731 = vld [vmem:[#allocation6 + $0x28] sm:$0xff]
        %v2732 = vld [vmem:[#allocation6 + $0x30] sm:$0xff]
        %v2733 = vld [vmem:[#allocation6 + $0x38] sm:$0xff]
        %v2734 = vld [vmem:[#allocation6 + $0x40] sm:$0xff]
        %v2735 = vld [vmem:[#allocation6 + $0x48] sm:$0xff]
        %v2736 = vadd.f32 %v2726, %v2716
        %v2737 = vadd.f32 %v2727, %v2717
        %v2738 = vadd.f32 %v2728, %v2718
        %v2739 = vadd.f32 %v2729, %v2719
        %v2740 = vadd.f32 %v2730, %v2720
        %v2741 = vadd.f32 %v2731, %v2721
        %v2742 = vadd.f32 %v2732, %v2722
        %v2743 = vadd.f32 %v2733, %v2723
        %v2744 = vadd.f32 %v2734, %v2724
        %v2745 = vadd.f32 %v2735, %v2725
        %2746 = vst.msk [vmem:[#allocation6] sm:$0xff] %vm944, %v2736
        %2747 = vst.msk [vmem:[#allocation6 + $0x8] sm:$0xff] %vm944, %v2737
        %2748 = vst.msk [vmem:[#allocation6 + $0x10] sm:$0xff] %vm944, %v2738
        %2749 = vst.msk [vmem:[#allocation6 + $0x18] sm:$0xff] %vm944, %v2739
        %2750 = vst.msk [vmem:[#allocation6 + $0x20] sm:$0xff] %vm944, %v2740
        %2751 = vst.msk [vmem:[#allocation6 + $0x28] sm:$0xff] %vm944, %v2741
        %2752 = vst.msk [vmem:[#allocation6 + $0x30] sm:$0xff] %vm944, %v2742
        %2753 = vst.msk [vmem:[#allocation6 + $0x38] sm:$0xff] %vm944, %v2743
        %2754 = vst.msk [vmem:[#allocation6 + $0x40] sm:$0xff] %vm944, %v2744
        %2755 = vst.msk [vmem:[#allocation6 + $0x48] sm:$0xff] %vm944, %v2745
        %p2756 = scmp.eq.s32.totalorder %s33, 1
        // Predicated region
        $region81: #{tpu_custom_call.1} parent=71 // pred_check
          %p2757 = pneg %p2756
        $region82: #{tpu_custom_call.1} parent=71 // pred_check_branch
          %2759 = sbr.rel (%p2757) target = $region84
        $region83: #{tpu_custom_call.1} parent=71 // pred_region
          %v2760 = vld [vmem:[%s12] sm:$0x1]
          %v2762 = vlaneseq
          %v2763 = vshrl.u32 %v2762, 7
          %v2764 = vsub.s32 0, %v2763
          %v2765 = vrot.slane %v2760, %v2764
          %v2767 = vadd.f32 %v2765, 0.0
          %2768 = vst [vmem:[#allocation10] sm:$0xff] %v2767
          %v2769 = vld [vmem:[#allocation10] sm:$0xff]
          %v2770 = vld [vmem:[#allocation6] sm:$0xff]
          %v2771 = vld [vmem:[%s11] sm:$0xff]
          %v2772 = vld [vmem:[%s11 + $0x8] sm:$0xff]
          %v2773 = vld [vmem:[%s11 + $0x10] sm:$0xff]
          %v2774 = vld [vmem:[%s11 + $0x18] sm:$0xff]
          %v2776 = vsel %vm944, %v2770, 0
          %2778 = vmatprep.subr.mxu0 0.0
          %2779 = vmatpush1.msra.mxu0 %v2771
          %2780 = vmatprep.subr.mxu0 0.0
          %2781 = vmatpush1.msra.mxu0 %v2772
          %2782 = vmatprep.subr.mxu0 0.0
          %2783 = vmatpush1.msra.mxu0 %v2773
          %2784 = vmatprep.subr.mxu0 0.0
          %2785 = vmatpush1.msra.mxu0 %v2774
          %2786 = vmatprep.subr.mxu0 0.0
          %2787 = vmatpush1.msra.mxu0 0.0
          %2788 = vmatprep.subr.mxu0 0.0
          %2789 = vmatpush1.msra.mxu0 0.0
          %2790 = vmatprep.subr.mxu0 0.0
          %2791 = vmatpush1.msra.mxu0 0.0
          %2792 = vmatprep.subr.mxu0 0.0
          %2793 = vmatpush1.msra.mxu0 0.0
          %2794 = vmatprep.subr.mxu0 0.0
          %2795 = vmatpush1.msra.mxu0 0.0
          %2796 = vmatprep.subr.mxu0 0.0
          %2797 = vmatpush1.msra.mxu0 0.0
          %2798 = vmatprep.subr.mxu0 0.0
          %2799 = vmatpush1.msra.mxu0 0.0
          %2800 = vmatprep.subr.mxu0 0.0
          %2801 = vmatpush1.msra.mxu0 0.0
          %2802 = vmatprep.subr.mxu0 0.0
          %2803 = vmatpush1.msra.mxu0 0.0
          %2804 = vmatprep.subr.mxu0 0.0
          %2805 = vmatpush1.msra.mxu0 0.0
          %2806 = vmatprep.subr.mxu0 0.0
          %2807 = vmatpush1.msra.mxu0 0.0
          %2808 = vmatprep.subr.mxu0 0.0
          %2809 = vmatpush1.msra.mxu0 0.0
          %2810 = vmatprep.subr.mxu0 0.0
          %2811 = vmatpush1.msra.mxu0 0.0
          %2812 = vmatprep.subr.mxu0 0.0
          %2813 = vmatpush1.msra.mxu0 0.0
          %2814 = vmatprep.subr.mxu0 0.0
          %2815 = vmatpush1.msra.mxu0 0.0
          %2816 = vmatprep.subr.mxu0 0.0
          %2817 = vmatpush1.msra.mxu0 0.0
          %2818 = vmatprep.subr.mxu0 0.0
          %2819 = vmatpush1.msra.mxu0 0.0
          %2820 = vmatprep.subr.mxu0 0.0
          %2821 = vmatpush1.msra.mxu0 0.0
          %2822 = vmatprep.subr.mxu0 0.0
          %2823 = vmatpush1.msra.mxu0 0.0
          %2824 = vmatprep.subr.mxu0 0.0
          %2825 = vmatpush1.msra.mxu0 0.0
          %2826 = vmatprep.subr.mxu0 0.0
          %2827 = vmatpush1.msra.mxu0 0.0
          %2828 = vmatprep.subr.mxu0 0.0
          %2829 = vmatpush1.msra.mxu0 0.0
          %2830 = vmatprep.subr.mxu0 0.0
          %2831 = vmatpush1.msra.mxu0 0.0
          %2832 = vmatprep.subr.mxu0 0.0
          %2833 = vmatpush1.msra.mxu0 0.0
          %2834 = vmatprep.subr.mxu0 0.0
          %2835 = vmatpush1.msra.mxu0 0.0
          %2836 = vmatprep.subr.mxu0 0.0
          %2837 = vmatpush1.msra.mxu0 0.0
          %2838 = vmatprep.subr.mxu0 0.0
          %2839 = vmatpush1.msra.mxu0 0.0
          %2840 = vmatprep.subr.mxu0 0.0
          %2841 = vmatpush1.msra.mxu0 0.0
          %2842 = vmatprep.mubr.f32.mxu0 0.0
          %2843 = vmatmul.mubr.f32.gmra.mrb[0].mxu0 %v2776
          %v2844 = vpop.f32.mrb[0].mxu0
          %v2845 = vadd.f32 0.0, %v2844
          %v2846 = vpop.f32.mrb[0].mxu0
          %2847 = vdwg.mxu0
          %v2848 = vadd.f32 %v2769, %v2845
          %2849 = vst [vmem:[#allocation10] sm:$0xff] %v2848
          %v2850 = vld [vmem:[#allocation10] sm:$0xff]
          %v2851 = vld [vmem:[#allocation6 + $0x8] sm:$0xff]
          %s2852 = scalar_lea.vmem %s11, 32
          %v2853 = vld [vmem:[%s2852] sm:$0xff]
          %v2854 = vld [vmem:[%s2852 + $0x8] sm:$0xff]
          %v2855 = vld [vmem:[%s2852 + $0x10] sm:$0xff]
          %v2856 = vld [vmem:[%s2852 + $0x18] sm:$0xff]
          %v2858 = vsel %vm944, %v2851, 0
          %2860 = vmatprep.subr.mxu0 0.0
          %2861 = vmatpush1.msra.mxu0 %v2853
          %2862 = vmatprep.subr.mxu0 0.0
          %2863 = vmatpush1.msra.mxu0 %v2854
          %2864 = vmatprep.subr.mxu0 0.0
          %2865 = vmatpush1.msra.mxu0 %v2855
          %2866 = vmatprep.subr.mxu0 0.0
          %2867 = vmatpush1.msra.mxu0 %v2856
          %2868 = vmatprep.subr.mxu0 0.0
          %2869 = vmatpush1.msra.mxu0 0.0
          %2870 = vmatprep.subr.mxu0 0.0
          %2871 = vmatpush1.msra.mxu0 0.0
          %2872 = vmatprep.subr.mxu0 0.0
          %2873 = vmatpush1.msra.mxu0 0.0
          %2874 = vmatprep.subr.mxu0 0.0
          %2875 = vmatpush1.msra.mxu0 0.0
          %2876 = vmatprep.subr.mxu0 0.0
          %2877 = vmatpush1.msra.mxu0 0.0
          %2878 = vmatprep.subr.mxu0 0.0
          %2879 = vmatpush1.msra.mxu0 0.0
          %2880 = vmatprep.subr.mxu0 0.0
          %2881 = vmatpush1.msra.mxu0 0.0
          %2882 = vmatprep.subr.mxu0 0.0
          %2883 = vmatpush1.msra.mxu0 0.0
          %2884 = vmatprep.subr.mxu0 0.0
          %2885 = vmatpush1.msra.mxu0 0.0
          %2886 = vmatprep.subr.mxu0 0.0
          %2887 = vmatpush1.msra.mxu0 0.0
          %2888 = vmatprep.subr.mxu0 0.0
          %2889 = vmatpush1.msra.mxu0 0.0
          %2890 = vmatprep.subr.mxu0 0.0
          %2891 = vmatpush1.msra.mxu0 0.0
          %2892 = vmatprep.subr.mxu0 0.0
          %2893 = vmatpush1.msra.mxu0 0.0
          %2894 = vmatprep.subr.mxu0 0.0
          %2895 = vmatpush1.msra.mxu0 0.0
          %2896 = vmatprep.subr.mxu0 0.0
          %2897 = vmatpush1.msra.mxu0 0.0
          %2898 = vmatprep.subr.mxu0 0.0
          %2899 = vmatpush1.msra.mxu0 0.0
          %2900 = vmatprep.subr.mxu0 0.0
          %2901 = vmatpush1.msra.mxu0 0.0
          %2902 = vmatprep.subr.mxu0 0.0
          %2903 = vmatpush1.msra.mxu0 0.0
          %2904 = vmatprep.subr.mxu0 0.0
          %2905 = vmatpush1.msra.mxu0 0.0
          %2906 = vmatprep.subr.mxu0 0.0
          %2907 = vmatpush1.msra.mxu0 0.0
          %2908 = vmatprep.subr.mxu0 0.0
          %2909 = vmatpush1.msra.mxu0 0.0
          %2910 = vmatprep.subr.mxu0 0.0
          %2911 = vmatpush1.msra.mxu0 0.0
          %2912 = vmatprep.subr.mxu0 0.0
          %2913 = vmatpush1.msra.mxu0 0.0
          %2914 = vmatprep.subr.mxu0 0.0
          %2915 = vmatpush1.msra.mxu0 0.0
          %2916 = vmatprep.subr.mxu0 0.0
          %2917 = vmatpush1.msra.mxu0 0.0
          %2918 = vmatprep.subr.mxu0 0.0
          %2919 = vmatpush1.msra.mxu0 0.0
          %2920 = vmatprep.subr.mxu0 0.0
          %2921 = vmatpush1.msra.mxu0 0.0
          %2922 = vmatprep.subr.mxu0 0.0
          %2923 = vmatpush1.msra.mxu0 0.0
          %2924 = vmatprep.mubr.f32.mxu0 0.0
          %2925 = vmatmul.mubr.f32.gmra.mrb[0].mxu0 %v2858
          %v2926 = vpop.f32.mrb[0].mxu0
          %v2927 = vadd.f32 0.0, %v2926
          %v2928 = vpop.f32.mrb[0].mxu0
          %2929 = vdwg.mxu0
          %v2930 = vadd.f32 %v2850, %v2927
          %2931 = vst [vmem:[#allocation10] sm:$0xff] %v2930
          %v2932 = vld [vmem:[#allocation10] sm:$0xff]
          %v2933 = vld [vmem:[#allocation6 + $0x10] sm:$0xff]
          %s2934 = scalar_lea.vmem %s11, 64
          %v2935 = vld [vmem:[%s2934] sm:$0xff]
          %v2936 = vld [vmem:[%s2934 + $0x8] sm:$0xff]
          %v2937 = vld [vmem:[%s2934 + $0x10] sm:$0xff]
          %v2938 = vld [vmem:[%s2934 + $0x18] sm:$0xff]
          %v2940 = vsel %vm944, %v2933, 0
          %2942 = vmatprep.subr.mxu0 0.0
          %2943 = vmatpush1.msra.mxu0 %v2935
          %2944 = vmatprep.subr.mxu0 0.0
          %2945 = vmatpush1.msra.mxu0 %v2936
          %2946 = vmatprep.subr.mxu0 0.0
          %2947 = vmatpush1.msra.mxu0 %v2937
          %2948 = vmatprep.subr.mxu0 0.0
          %2949 = vmatpush1.msra.mxu0 %v2938
          %2950 = vmatprep.subr.mxu0 0.0
          %2951 = vmatpush1.msra.mxu0 0.0
          %2952 = vmatprep.subr.mxu0 0.0
          %2953 = vmatpush1.msra.mxu0 0.0
          %2954 = vmatprep.subr.mxu0 0.0
          %2955 = vmatpush1.msra.mxu0 0.0
          %2956 = vmatprep.subr.mxu0 0.0
          %2957 = vmatpush1.msra.mxu0 0.0
          %2958 = vmatprep.subr.mxu0 0.0
          %2959 = vmatpush1.msra.mxu0 0.0
          %2960 = vmatprep.subr.mxu0 0.0
          %2961 = vmatpush1.msra.mxu0 0.0
          %2962 = vmatprep.subr.mxu0 0.0
          %2963 = vmatpush1.msra.mxu0 0.0
          %2964 = vmatprep.subr.mxu0 0.0
          %2965 = vmatpush1.msra.mxu0 0.0
          %2966 = vmatprep.subr.mxu0 0.0
          %2967 = vmatpush1.msra.mxu0 0.0
          %2968 = vmatprep.subr.mxu0 0.0
          %2969 = vmatpush1.msra.mxu0 0.0
          %2970 = vmatprep.subr.mxu0 0.0
          %2971 = vmatpush1.msra.mxu0 0.0
          %2972 = vmatprep.subr.mxu0 0.0
          %2973 = vmatpush1.msra.mxu0 0.0
          %2974 = vmatprep.subr.mxu0 0.0
          %2975 = vmatpush1.msra.mxu0 0.0
          %2976 = vmatprep.subr.mxu0 0.0
          %2977 = vmatpush1.msra.mxu0 0.0
          %2978 = vmatprep.subr.mxu0 0.0
          %2979 = vmatpush1.msra.mxu0 0.0
          %2980 = vmatprep.subr.mxu0 0.0
          %2981 = vmatpush1.msra.mxu0 0.0
          %2982 = vmatprep.subr.mxu0 0.0
          %2983 = vmatpush1.msra.mxu0 0.0
          %2984 = vmatprep.subr.mxu0 0.0
          %2985 = vmatpush1.msra.mxu0 0.0
          %2986 = vmatprep.subr.mxu0 0.0
          %2987 = vmatpush1.msra.mxu0 0.0
          %2988 = vmatprep.subr.mxu0 0.0
          %2989 = vmatpush1.msra.mxu0 0.0
          %2990 = vmatprep.subr.mxu0 0.0
          %2991 = vmatpush1.msra.mxu0 0.0
          %2992 = vmatprep.subr.mxu0 0.0
          %2993 = vmatpush1.msra.mxu0 0.0
          %2994 = vmatprep.subr.mxu0 0.0
          %2995 = vmatpush1.msra.mxu0 0.0
          %2996 = vmatprep.subr.mxu0 0.0
          %2997 = vmatpush1.msra.mxu0 0.0
          %2998 = vmatprep.subr.mxu0 0.0
          %2999 = vmatpush1.msra.mxu0 0.0
          %3000 = vmatprep.subr.mxu0 0.0
          %3001 = vmatpush1.msra.mxu0 0.0
          %3002 = vmatprep.subr.mxu0 0.0
          %3003 = vmatpush1.msra.mxu0 0.0
          %3004 = vmatprep.subr.mxu0 0.0
          %3005 = vmatpush1.msra.mxu0 0.0
          %3006 = vmatprep.mubr.f32.mxu0 0.0
          %3007 = vmatmul.mubr.f32.gmra.mrb[0].mxu0 %v2940
          %v3008 = vpop.f32.mrb[0].mxu0
          %v3009 = vadd.f32 0.0, %v3008
          %v3010 = vpop.f32.mrb[0].mxu0
          %3011 = vdwg.mxu0
          %v3012 = vadd.f32 %v2932, %v3009
          %3013 = vst [vmem:[#allocation10] sm:$0xff] %v3012
          %v3014 = vld [vmem:[#allocation10] sm:$0xff]
          %v3015 = vld [vmem:[#allocation6 + $0x18] sm:$0xff]
          %s3016 = scalar_lea.vmem %s11, 96
          %v3017 = vld [vmem:[%s3016] sm:$0xff]
          %v3018 = vld [vmem:[%s3016 + $0x8] sm:$0xff]
          %v3019 = vld [vmem:[%s3016 + $0x10] sm:$0xff]
          %v3020 = vld [vmem:[%s3016 + $0x18] sm:$0xff]
          %v3022 = vsel %vm944, %v3015, 0
          %3024 = vmatprep.subr.mxu0 0.0
          %3025 = vmatpush1.msra.mxu0 %v3017
          %3026 = vmatprep.subr.mxu0 0.0
          %3027 = vmatpush1.msra.mxu0 %v3018
          %3028 = vmatprep.subr.mxu0 0.0
          %3029 = vmatpush1.msra.mxu0 %v3019
          %3030 = vmatprep.subr.mxu0 0.0
          %3031 = vmatpush1.msra.mxu0 %v3020
          %3032 = vmatprep.subr.mxu0 0.0
          %3033 = vmatpush1.msra.mxu0 0.0
          %3034 = vmatprep.subr.mxu0 0.0
          %3035 = vmatpush1.msra.mxu0 0.0
          %3036 = vmatprep.subr.mxu0 0.0
          %3037 = vmatpush1.msra.mxu0 0.0
          %3038 = vmatprep.subr.mxu0 0.0
          %3039 = vmatpush1.msra.mxu0 0.0
          %3040 = vmatprep.subr.mxu0 0.0
          %3041 = vmatpush1.msra.mxu0 0.0
          %3042 = vmatprep.subr.mxu0 0.0
          %3043 = vmatpush1.msra.mxu0 0.0
          %3044 = vmatprep.subr.mxu0 0.0
          %3045 = vmatpush1.msra.mxu0 0.0
          %3046 = vmatprep.subr.mxu0 0.0
          %3047 = vmatpush1.msra.mxu0 0.0
          %3048 = vmatprep.subr.mxu0 0.0
          %3049 = vmatpush1.msra.mxu0 0.0
          %3050 = vmatprep.subr.mxu0 0.0
          %3051 = vmatpush1.msra.mxu0 0.0
          %3052 = vmatprep.subr.mxu0 0.0
          %3053 = vmatpush1.msra.mxu0 0.0
          %3054 = vmatprep.subr.mxu0 0.0
          %3055 = vmatpush1.msra.mxu0 0.0
          %3056 = vmatprep.subr.mxu0 0.0
          %3057 = vmatpush1.msra.mxu0 0.0
          %3058 = vmatprep.subr.mxu0 0.0
          %3059 = vmatpush1.msra.mxu0 0.0
          %3060 = vmatprep.subr.mxu0 0.0
          %3061 = vmatpush1.msra.mxu0 0.0
          %3062 = vmatprep.subr.mxu0 0.0
          %3063 = vmatpush1.msra.mxu0 0.0
          %3064 = vmatprep.subr.mxu0 0.0
          %3065 = vmatpush1.msra.mxu0 0.0
          %3066 = vmatprep.subr.mxu0 0.0
          %3067 = vmatpush1.msra.mxu0 0.0
          %3068 = vmatprep.subr.mxu0 0.0
          %3069 = vmatpush1.msra.mxu0 0.0
          %3070 = vmatprep.subr.mxu0 0.0
          %3071 = vmatpush1.msra.mxu0 0.0
          %3072 = vmatprep.subr.mxu0 0.0
          %3073 = vmatpush1.msra.mxu0 0.0
          %3074 = vmatprep.subr.mxu0 0.0
          %3075 = vmatpush1.msra.mxu0 0.0
          %3076 = vmatprep.subr.mxu0 0.0
          %3077 = vmatpush1.msra.mxu0 0.0
          %3078 = vmatprep.subr.mxu0 0.0
          %3079 = vmatpush1.msra.mxu0 0.0
          %3080 = vmatprep.subr.mxu0 0.0
          %3081 = vmatpush1.msra.mxu0 0.0
          %3082 = vmatprep.subr.mxu0 0.0
          %3083 = vmatpush1.msra.mxu0 0.0
          %3084 = vmatprep.subr.mxu0 0.0
          %3085 = vmatpush1.msra.mxu0 0.0
          %3086 = vmatprep.subr.mxu0 0.0
          %3087 = vmatpush1.msra.mxu0 0.0
          %3088 = vmatprep.mubr.f32.mxu0 0.0
          %3089 = vmatmul.mubr.f32.gmra.mrb[0].mxu0 %v3022
          %v3090 = vpop.f32.mrb[0].mxu0
          %v3091 = vadd.f32 0.0, %v3090
          %v3092 = vpop.f32.mrb[0].mxu0
          %3093 = vdwg.mxu0
          %v3094 = vadd.f32 %v3014, %v3091
          %3095 = vst [vmem:[#allocation10] sm:$0xff] %v3094
          %v3096 = vld [vmem:[#allocation10] sm:$0xff]
          %v3097 = vld [vmem:[#allocation6 + $0x20] sm:$0xff]
          %s3098 = scalar_lea.vmem %s11, 128
          %v3099 = vld [vmem:[%s3098] sm:$0xff]
          %v3100 = vld [vmem:[%s3098 + $0x8] sm:$0xff]
          %v3101 = vld [vmem:[%s3098 + $0x10] sm:$0xff]
          %v3102 = vld [vmem:[%s3098 + $0x18] sm:$0xff]
          %v3104 = vsel %vm944, %v3097, 0
          %3106 = vmatprep.subr.mxu0 0.0
          %3107 = vmatpush1.msra.mxu0 %v3099
          %3108 = vmatprep.subr.mxu0 0.0
          %3109 = vmatpush1.msra.mxu0 %v3100
          %3110 = vmatprep.subr.mxu0 0.0
          %3111 = vmatpush1.msra.mxu0 %v3101
          %3112 = vmatprep.subr.mxu0 0.0
          %3113 = vmatpush1.msra.mxu0 %v3102
          %3114 = vmatprep.subr.mxu0 0.0
          %3115 = vmatpush1.msra.mxu0 0.0
          %3116 = vmatprep.subr.mxu0 0.0
          %3117 = vmatpush1.msra.mxu0 0.0
          %3118 = vmatprep.subr.mxu0 0.0
          %3119 = vmatpush1.msra.mxu0 0.0
          %3120 = vmatprep.subr.mxu0 0.0
          %3121 = vmatpush1.msra.mxu0 0.0
          %3122 = vmatprep.subr.mxu0 0.0
          %3123 = vmatpush1.msra.mxu0 0.0
          %3124 = vmatprep.subr.mxu0 0.0
          %3125 = vmatpush1.msra.mxu0 0.0
          %3126 = vmatprep.subr.mxu0 0.0
          %3127 = vmatpush1.msra.mxu0 0.0
          %3128 = vmatprep.subr.mxu0 0.0
          %3129 = vmatpush1.msra.mxu0 0.0
          %3130 = vmatprep.subr.mxu0 0.0
          %3131 = vmatpush1.msra.mxu0 0.0
          %3132 = vmatprep.subr.mxu0 0.0
          %3133 = vmatpush1.msra.mxu0 0.0
          %3134 = vmatprep.subr.mxu0 0.0
          %3135 = vmatpush1.msra.mxu0 0.0
          %3136 = vmatprep.subr.mxu0 0.0
          %3137 = vmatpush1.msra.mxu0 0.0
          %3138 = vmatprep.subr.mxu0 0.0
          %3139 = vmatpush1.msra.mxu0 0.0
          %3140 = vmatprep.subr.mxu0 0.0
          %3141 = vmatpush1.msra.mxu0 0.0
          %3142 = vmatprep.subr.mxu0 0.0
          %3143 = vmatpush1.msra.mxu0 0.0
          %3144 = vmatprep.subr.mxu0 0.0
          %3145 = vmatpush1.msra.mxu0 0.0
          %3146 = vmatprep.subr.mxu0 0.0
          %3147 = vmatpush1.msra.mxu0 0.0
          %3148 = vmatprep.subr.mxu0 0.0
          %3149 = vmatpush1.msra.mxu0 0.0
          %3150 = vmatprep.subr.mxu0 0.0
          %3151 = vmatpush1.msra.mxu0 0.0
          %3152 = vmatprep.subr.mxu0 0.0
          %3153 = vmatpush1.msra.mxu0 0.0
          %3154 = vmatprep.subr.mxu0 0.0
          %3155 = vmatpush1.msra.mxu0 0.0
          %3156 = vmatprep.subr.mxu0 0.0
          %3157 = vmatpush1.msra.mxu0 0.0
          %3158 = vmatprep.subr.mxu0 0.0
          %3159 = vmatpush1.msra.mxu0 0.0
          %3160 = vmatprep.subr.mxu0 0.0
          %3161 = vmatpush1.msra.mxu0 0.0
          %3162 = vmatprep.subr.mxu0 0.0
          %3163 = vmatpush1.msra.mxu0 0.0
          %3164 = vmatprep.subr.mxu0 0.0
          %3165 = vmatpush1.msra.mxu0 0.0
          %3166 = vmatprep.subr.mxu0 0.0
          %3167 = vmatpush1.msra.mxu0 0.0
          %3168 = vmatprep.subr.mxu0 0.0
          %3169 = vmatpush1.msra.mxu0 0.0
          %3170 = vmatprep.mubr.f32.mxu0 0.0
          %3171 = vmatmul.mubr.f32.gmra.mrb[0].mxu0 %v3104
          %v3172 = vpop.f32.mrb[0].mxu0
          %v3173 = vadd.f32 0.0, %v3172
          %v3174 = vpop.f32.mrb[0].mxu0
          %3175 = vdwg.mxu0
          %v3176 = vadd.f32 %v3096, %v3173
          %3177 = vst [vmem:[#allocation10] sm:$0xff] %v3176
          %v3178 = vld [vmem:[#allocation10] sm:$0xff]
          %v3179 = vld [vmem:[#allocation6 + $0x28] sm:$0xff]
          %s3180 = scalar_lea.vmem %s11, 160
          %v3181 = vld [vmem:[%s3180] sm:$0xff]
          %v3182 = vld [vmem:[%s3180 + $0x8] sm:$0xff]
          %v3183 = vld [vmem:[%s3180 + $0x10] sm:$0xff]
          %v3184 = vld [vmem:[%s3180 + $0x18] sm:$0xff]
          %v3186 = vsel %vm944, %v3179, 0
          %3188 = vmatprep.subr.mxu0 0.0
          %3189 = vmatpush1.msra.mxu0 %v3181
          %3190 = vmatprep.subr.mxu0 0.0
          %3191 = vmatpush1.msra.mxu0 %v3182
          %3192 = vmatprep.subr.mxu0 0.0
          %3193 = vmatpush1.msra.mxu0 %v3183
          %3194 = vmatprep.subr.mxu0 0.0
          %3195 = vmatpush1.msra.mxu0 %v3184
          %3196 = vmatprep.subr.mxu0 0.0
          %3197 = vmatpush1.msra.mxu0 0.0
          %3198 = vmatprep.subr.mxu0 0.0
          %3199 = vmatpush1.msra.mxu0 0.0
          %3200 = vmatprep.subr.mxu0 0.0
          %3201 = vmatpush1.msra.mxu0 0.0
          %3202 = vmatprep.subr.mxu0 0.0
          %3203 = vmatpush1.msra.mxu0 0.0
          %3204 = vmatprep.subr.mxu0 0.0
          %3205 = vmatpush1.msra.mxu0 0.0
          %3206 = vmatprep.subr.mxu0 0.0
          %3207 = vmatpush1.msra.mxu0 0.0
          %3208 = vmatprep.subr.mxu0 0.0
          %3209 = vmatpush1.msra.mxu0 0.0
          %3210 = vmatprep.subr.mxu0 0.0
          %3211 = vmatpush1.msra.mxu0 0.0
          %3212 = vmatprep.subr.mxu0 0.0
          %3213 = vmatpush1.msra.mxu0 0.0
          %3214 = vmatprep.subr.mxu0 0.0
          %3215 = vmatpush1.msra.mxu0 0.0
          %3216 = vmatprep.subr.mxu0 0.0
          %3217 = vmatpush1.msra.mxu0 0.0
          %3218 = vmatprep.subr.mxu0 0.0
          %3219 = vmatpush1.msra.mxu0 0.0
          %3220 = vmatprep.subr.mxu0 0.0
          %3221 = vmatpush1.msra.mxu0 0.0
          %3222 = vmatprep.subr.mxu0 0.0
          %3223 = vmatpush1.msra.mxu0 0.0
          %3224 = vmatprep.subr.mxu0 0.0
          %3225 = vmatpush1.msra.mxu0 0.0
          %3226 = vmatprep.subr.mxu0 0.0
          %3227 = vmatpush1.msra.mxu0 0.0
          %3228 = vmatprep.subr.mxu0 0.0
          %3229 = vmatpush1.msra.mxu0 0.0
          %3230 = vmatprep.subr.mxu0 0.0
          %3231 = vmatpush1.msra.mxu0 0.0
          %3232 = vmatprep.subr.mxu0 0.0
          %3233 = vmatpush1.msra.mxu0 0.0
          %3234 = vmatprep.subr.mxu0 0.0
          %3235 = vmatpush1.msra.mxu0 0.0
          %3236 = vmatprep.subr.mxu0 0.0
          %3237 = vmatpush1.msra.mxu0 0.0
          %3238 = vmatprep.subr.mxu0 0.0
          %3239 = vmatpush1.msra.mxu0 0.0
          %3240 = vmatprep.subr.mxu0 0.0
          %3241 = vmatpush1.msra.mxu0 0.0
          %3242 = vmatprep.subr.mxu0 0.0
          %3243 = vmatpush1.msra.mxu0 0.0
          %3244 = vmatprep.subr.mxu0 0.0
          %3245 = vmatpush1.msra.mxu0 0.0
          %3246 = vmatprep.subr.mxu0 0.0
          %3247 = vmatpush1.msra.mxu0 0.0
          %3248 = vmatprep.subr.mxu0 0.0
          %3249 = vmatpush1.msra.mxu0 0.0
          %3250 = vmatprep.subr.mxu0 0.0
          %3251 = vmatpush1.msra.mxu0 0.0
          %3252 = vmatprep.mubr.f32.mxu0 0.0
          %3253 = vmatmul.mubr.f32.gmra.mrb[0].mxu0 %v3186
          %v3254 = vpop.f32.mrb[0].mxu0
          %v3255 = vadd.f32 0.0, %v3254
          %v3256 = vpop.f32.mrb[0].mxu0
          %3257 = vdwg.mxu0
          %v3258 = vadd.f32 %v3178, %v3255
          %3259 = vst [vmem:[#allocation10] sm:$0xff] %v3258
          %v3260 = vld [vmem:[#allocation10] sm:$0xff]
          %v3261 = vld [vmem:[#allocation6 + $0x30] sm:$0xff]
          %s3262 = scalar_lea.vmem %s11, 192
          %v3263 = vld [vmem:[%s3262] sm:$0xff]
          %v3264 = vld [vmem:[%s3262 + $0x8] sm:$0xff]
          %v3265 = vld [vmem:[%s3262 + $0x10] sm:$0xff]
          %v3266 = vld [vmem:[%s3262 + $0x18] sm:$0xff]
          %v3268 = vsel %vm944, %v3261, 0
          %3270 = vmatprep.subr.mxu0 0.0
          %3271 = vmatpush1.msra.mxu0 %v3263
          %3272 = vmatprep.subr.mxu0 0.0
          %3273 = vmatpush1.msra.mxu0 %v3264
          %3274 = vmatprep.subr.mxu0 0.0
          %3275 = vmatpush1.msra.mxu0 %v3265
          %3276 = vmatprep.subr.mxu0 0.0
          %3277 = vmatpush1.msra.mxu0 %v3266
          %3278 = vmatprep.subr.mxu0 0.0
          %3279 = vmatpush1.msra.mxu0 0.0
          %3280 = vmatprep.subr.mxu0 0.0
          %3281 = vmatpush1.msra.mxu0 0.0
          %3282 = vmatprep.subr.mxu0 0.0
          %3283 = vmatpush1.msra.mxu0 0.0
          %3284 = vmatprep.subr.mxu0 0.0
          %3285 = vmatpush1.msra.mxu0 0.0
          %3286 = vmatprep.subr.mxu0 0.0
          %3287 = vmatpush1.msra.mxu0 0.0
          %3288 = vmatprep.subr.mxu0 0.0
          %3289 = vmatpush1.msra.mxu0 0.0
          %3290 = vmatprep.subr.mxu0 0.0
          %3291 = vmatpush1.msra.mxu0 0.0
          %3292 = vmatprep.subr.mxu0 0.0
          %3293 = vmatpush1.msra.mxu0 0.0
          %3294 = vmatprep.subr.mxu0 0.0
          %3295 = vmatpush1.msra.mxu0 0.0
          %3296 = vmatprep.subr.mxu0 0.0
          %3297 = vmatpush1.msra.mxu0 0.0
          %3298 = vmatprep.subr.mxu0 0.0
          %3299 = vmatpush1.msra.mxu0 0.0
          %3300 = vmatprep.subr.mxu0 0.0
          %3301 = vmatpush1.msra.mxu0 0.0
          %3302 = vmatprep.subr.mxu0 0.0
          %3303 = vmatpush1.msra.mxu0 0.0
          %3304 = vmatprep.subr.mxu0 0.0
          %3305 = vmatpush1.msra.mxu0 0.0
          %3306 = vmatprep.subr.mxu0 0.0
          %3307 = vmatpush1.msra.mxu0 0.0
          %3308 = vmatprep.subr.mxu0 0.0
          %3309 = vmatpush1.msra.mxu0 0.0
          %3310 = vmatprep.subr.mxu0 0.0
          %3311 = vmatpush1.msra.mxu0 0.0
          %3312 = vmatprep.subr.mxu0 0.0
          %3313 = vmatpush1.msra.mxu0 0.0
          %3314 = vmatprep.subr.mxu0 0.0
          %3315 = vmatpush1.msra.mxu0 0.0
          %3316 = vmatprep.subr.mxu0 0.0
          %3317 = vmatpush1.msra.mxu0 0.0
          %3318 = vmatprep.subr.mxu0 0.0
          %3319 = vmatpush1.msra.mxu0 0.0
          %3320 = vmatprep.subr.mxu0 0.0
          %3321 = vmatpush1.msra.mxu0 0.0
          %3322 = vmatprep.subr.mxu0 0.0
          %3323 = vmatpush1.msra.mxu0 0.0
          %3324 = vmatprep.subr.mxu0 0.0
          %3325 = vmatpush1.msra.mxu0 0.0
          %3326 = vmatprep.subr.mxu0 0.0
          %3327 = vmatpush1.msra.mxu0 0.0
          %3328 = vmatprep.subr.mxu0 0.0
          %3329 = vmatpush1.msra.mxu0 0.0
          %3330 = vmatprep.subr.mxu0 0.0
          %3331 = vmatpush1.msra.mxu0 0.0
          %3332 = vmatprep.subr.mxu0 0.0
          %3333 = vmatpush1.msra.mxu0 0.0
          %3334 = vmatprep.mubr.f32.mxu0 0.0
          %3335 = vmatmul.mubr.f32.gmra.mrb[0].mxu0 %v3268
          %v3336 = vpop.f32.mrb[0].mxu0
          %v3337 = vadd.f32 0.0, %v3336
          %v3338 = vpop.f32.mrb[0].mxu0
          %3339 = vdwg.mxu0
          %v3340 = vadd.f32 %v3260, %v3337
          %3341 = vst [vmem:[#allocation10] sm:$0xff] %v3340
          %v3342 = vld [vmem:[#allocation10] sm:$0xff]
          %v3343 = vld [vmem:[#allocation6 + $0x38] sm:$0xff]
          %s3344 = scalar_lea.vmem %s11, 224
          %v3345 = vld [vmem:[%s3344] sm:$0xff]
          %v3346 = vld [vmem:[%s3344 + $0x8] sm:$0xff]
          %v3347 = vld [vmem:[%s3344 + $0x10] sm:$0xff]
          %v3348 = vld [vmem:[%s3344 + $0x18] sm:$0xff]
          %v3350 = vsel %vm944, %v3343, 0
          %3352 = vmatprep.subr.mxu0 0.0
          %3353 = vmatpush1.msra.mxu0 %v3345
          %3354 = vmatprep.subr.mxu0 0.0
          %3355 = vmatpush1.msra.mxu0 %v3346
          %3356 = vmatprep.subr.mxu0 0.0
          %3357 = vmatpush1.msra.mxu0 %v3347
          %3358 = vmatprep.subr.mxu0 0.0
          %3359 = vmatpush1.msra.mxu0 %v3348
          %3360 = vmatprep.subr.mxu0 0.0
          %3361 = vmatpush1.msra.mxu0 0.0
          %3362 = vmatprep.subr.mxu0 0.0
          %3363 = vmatpush1.msra.mxu0 0.0
          %3364 = vmatprep.subr.mxu0 0.0
          %3365 = vmatpush1.msra.mxu0 0.0
          %3366 = vmatprep.subr.mxu0 0.0
          %3367 = vmatpush1.msra.mxu0 0.0
          %3368 = vmatprep.subr.mxu0 0.0
          %3369 = vmatpush1.msra.mxu0 0.0
          %3370 = vmatprep.subr.mxu0 0.0
          %3371 = vmatpush1.msra.mxu0 0.0
          %3372 = vmatprep.subr.mxu0 0.0
          %3373 = vmatpush1.msra.mxu0 0.0
          %3374 = vmatprep.subr.mxu0 0.0
          %3375 = vmatpush1.msra.mxu0 0.0
          %3376 = vmatprep.subr.mxu0 0.0
          %3377 = vmatpush1.msra.mxu0 0.0
          %3378 = vmatprep.subr.mxu0 0.0
          %3379 = vmatpush1.msra.mxu0 0.0
          %3380 = vmatprep.subr.mxu0 0.0
          %3381 = vmatpush1.msra.mxu0 0.0
          %3382 = vmatprep.subr.mxu0 0.0
          %3383 = vmatpush1.msra.mxu0 0.0
          %3384 = vmatprep.subr.mxu0 0.0
          %3385 = vmatpush1.msra.mxu0 0.0
          %3386 = vmatprep.subr.mxu0 0.0
          %3387 = vmatpush1.msra.mxu0 0.0
          %3388 = vmatprep.subr.mxu0 0.0
          %3389 = vmatpush1.msra.mxu0 0.0
          %3390 = vmatprep.subr.mxu0 0.0
          %3391 = vmatpush1.msra.mxu0 0.0
          %3392 = vmatprep.subr.mxu0 0.0
          %3393 = vmatpush1.msra.mxu0 0.0
          %3394 = vmatprep.subr.mxu0 0.0
          %3395 = vmatpush1.msra.mxu0 0.0
          %3396 = vmatprep.subr.mxu0 0.0
          %3397 = vmatpush1.msra.mxu0 0.0
          %3398 = vmatprep.subr.mxu0 0.0
          %3399 = vmatpush1.msra.mxu0 0.0
          %3400 = vmatprep.subr.mxu0 0.0
          %3401 = vmatpush1.msra.mxu0 0.0
          %3402 = vmatprep.subr.mxu0 0.0
          %3403 = vmatpush1.msra.mxu0 0.0
          %3404 = vmatprep.subr.mxu0 0.0
          %3405 = vmatpush1.msra.mxu0 0.0
          %3406 = vmatprep.subr.mxu0 0.0
          %3407 = vmatpush1.msra.mxu0 0.0
          %3408 = vmatprep.subr.mxu0 0.0
          %3409 = vmatpush1.msra.mxu0 0.0
          %3410 = vmatprep.subr.mxu0 0.0
          %3411 = vmatpush1.msra.mxu0 0.0
          %3412 = vmatprep.subr.mxu0 0.0
          %3413 = vmatpush1.msra.mxu0 0.0
          %3414 = vmatprep.subr.mxu0 0.0
          %3415 = vmatpush1.msra.mxu0 0.0
          %3416 = vmatprep.mubr.f32.mxu0 0.0
          %3417 = vmatmul.mubr.f32.gmra.mrb[0].mxu0 %v3350
          %v3418 = vpop.f32.mrb[0].mxu0
          %v3419 = vadd.f32 0.0, %v3418
          %v3420 = vpop.f32.mrb[0].mxu0
          %3421 = vdwg.mxu0
          %v3422 = vadd.f32 %v3342, %v3419
          %3423 = vst [vmem:[#allocation10] sm:$0xff] %v3422
          %v3424 = vld [vmem:[#allocation10] sm:$0xff]
          %v3425 = vld [vmem:[#allocation6 + $0x40] sm:$0xff]
          %s3426 = scalar_lea.vmem %s11, 256
          %v3427 = vld [vmem:[%s3426] sm:$0xff]
          %v3428 = vld [vmem:[%s3426 + $0x8] sm:$0xff]
          %v3429 = vld [vmem:[%s3426 + $0x10] sm:$0xff]
          %v3430 = vld [vmem:[%s3426 + $0x18] sm:$0xff]
          %v3432 = vsel %vm944, %v3425, 0
          %3434 = vmatprep.subr.mxu0 0.0
          %3435 = vmatpush1.msra.mxu0 %v3427
          %3436 = vmatprep.subr.mxu0 0.0
          %3437 = vmatpush1.msra.mxu0 %v3428
          %3438 = vmatprep.subr.mxu0 0.0
          %3439 = vmatpush1.msra.mxu0 %v3429
          %3440 = vmatprep.subr.mxu0 0.0
          %3441 = vmatpush1.msra.mxu0 %v3430
          %3442 = vmatprep.subr.mxu0 0.0
          %3443 = vmatpush1.msra.mxu0 0.0
          %3444 = vmatprep.subr.mxu0 0.0
          %3445 = vmatpush1.msra.mxu0 0.0
          %3446 = vmatprep.subr.mxu0 0.0
          %3447 = vmatpush1.msra.mxu0 0.0
          %3448 = vmatprep.subr.mxu0 0.0
          %3449 = vmatpush1.msra.mxu0 0.0
          %3450 = vmatprep.subr.mxu0 0.0
          %3451 = vmatpush1.msra.mxu0 0.0
          %3452 = vmatprep.subr.mxu0 0.0
          %3453 = vmatpush1.msra.mxu0 0.0
          %3454 = vmatprep.subr.mxu0 0.0
          %3455 = vmatpush1.msra.mxu0 0.0
          %3456 = vmatprep.subr.mxu0 0.0
          %3457 = vmatpush1.msra.mxu0 0.0
          %3458 = vmatprep.subr.mxu0 0.0
          %3459 = vmatpush1.msra.mxu0 0.0
          %3460 = vmatprep.subr.mxu0 0.0
          %3461 = vmatpush1.msra.mxu0 0.0
          %3462 = vmatprep.subr.mxu0 0.0
          %3463 = vmatpush1.msra.mxu0 0.0
          %3464 = vmatprep.subr.mxu0 0.0
          %3465 = vmatpush1.msra.mxu0 0.0
          %3466 = vmatprep.subr.mxu0 0.0
          %3467 = vmatpush1.msra.mxu0 0.0
          %3468 = vmatprep.subr.mxu0 0.0
          %3469 = vmatpush1.msra.mxu0 0.0
          %3470 = vmatprep.subr.mxu0 0.0
          %3471 = vmatpush1.msra.mxu0 0.0
          %3472 = vmatprep.subr.mxu0 0.0
          %3473 = vmatpush1.msra.mxu0 0.0
          %3474 = vmatprep.subr.mxu0 0.0
          %3475 = vmatpush1.msra.mxu0 0.0
          %3476 = vmatprep.subr.mxu0 0.0
          %3477 = vmatpush1.msra.mxu0 0.0
          %3478 = vmatprep.subr.mxu0 0.0
          %3479 = vmatpush1.msra.mxu0 0.0
          %3480 = vmatprep.subr.mxu0 0.0
          %3481 = vmatpush1.msra.mxu0 0.0
          %3482 = vmatprep.subr.mxu0 0.0
          %3483 = vmatpush1.msra.mxu0 0.0
          %3484 = vmatprep.subr.mxu0 0.0
          %3485 = vmatpush1.msra.mxu0 0.0
          %3486 = vmatprep.subr.mxu0 0.0
          %3487 = vmatpush1.msra.mxu0 0.0
          %3488 = vmatprep.subr.mxu0 0.0
          %3489 = vmatpush1.msra.mxu0 0.0
          %3490 = vmatprep.subr.mxu0 0.0
          %3491 = vmatpush1.msra.mxu0 0.0
          %3492 = vmatprep.subr.mxu0 0.0
          %3493 = vmatpush1.msra.mxu0 0.0
          %3494 = vmatprep.subr.mxu0 0.0
          %3495 = vmatpush1.msra.mxu0 0.0
          %3496 = vmatprep.subr.mxu0 0.0
          %3497 = vmatpush1.msra.mxu0 0.0
          %3498 = vmatprep.mubr.f32.mxu0 0.0
          %3499 = vmatmul.mubr.f32.gmra.mrb[0].mxu0 %v3432
          %v3500 = vpop.f32.mrb[0].mxu0
          %v3501 = vadd.f32 0.0, %v3500
          %v3502 = vpop.f32.mrb[0].mxu0
          %3503 = vdwg.mxu0
          %v3504 = vadd.f32 %v3424, %v3501
          %3505 = vst [vmem:[#allocation10] sm:$0xff] %v3504
          %v3506 = vld [vmem:[#allocation10] sm:$0xff]
          %v3507 = vld [vmem:[#allocation6 + $0x48] sm:$0xff]
          %s3508 = scalar_lea.vmem %s11, 288
          %v3509 = vld [vmem:[%s3508] sm:$0xff]
          %v3510 = vld [vmem:[%s3508 + $0x8] sm:$0xff]
          %v3511 = vld [vmem:[%s3508 + $0x10] sm:$0xff]
          %v3512 = vld [vmem:[%s3508 + $0x18] sm:$0xff]
          %v3514 = vsel %vm944, %v3507, 0
          %3516 = vmatprep.subr.mxu0 0.0
          %3517 = vmatpush1.msra.mxu0 %v3509
          %3518 = vmatprep.subr.mxu0 0.0
          %3519 = vmatpush1.msra.mxu0 %v3510
          %3520 = vmatprep.subr.mxu0 0.0
          %3521 = vmatpush1.msra.mxu0 %v3511
          %3522 = vmatprep.subr.mxu0 0.0
          %3523 = vmatpush1.msra.mxu0 %v3512
          %3524 = vmatprep.subr.mxu0 0.0
          %3525 = vmatpush1.msra.mxu0 0.0
          %3526 = vmatprep.subr.mxu0 0.0
          %3527 = vmatpush1.msra.mxu0 0.0
          %3528 = vmatprep.subr.mxu0 0.0
          %3529 = vmatpush1.msra.mxu0 0.0
          %3530 = vmatprep.subr.mxu0 0.0
          %3531 = vmatpush1.msra.mxu0 0.0
          %3532 = vmatprep.subr.mxu0 0.0
          %3533 = vmatpush1.msra.mxu0 0.0
          %3534 = vmatprep.subr.mxu0 0.0
          %3535 = vmatpush1.msra.mxu0 0.0
          %3536 = vmatprep.subr.mxu0 0.0
          %3537 = vmatpush1.msra.mxu0 0.0
          %3538 = vmatprep.subr.mxu0 0.0
          %3539 = vmatpush1.msra.mxu0 0.0
          %3540 = vmatprep.subr.mxu0 0.0
          %3541 = vmatpush1.msra.mxu0 0.0
          %3542 = vmatprep.subr.mxu0 0.0
          %3543 = vmatpush1.msra.mxu0 0.0
          %3544 = vmatprep.subr.mxu0 0.0
          %3545 = vmatpush1.msra.mxu0 0.0
          %3546 = vmatprep.subr.mxu0 0.0
          %3547 = vmatpush1.msra.mxu0 0.0
          %3548 = vmatprep.subr.mxu0 0.0
          %3549 = vmatpush1.msra.mxu0 0.0
          %3550 = vmatprep.subr.mxu0 0.0
          %3551 = vmatpush1.msra.mxu0 0.0
          %3552 = vmatprep.subr.mxu0 0.0
          %3553 = vmatpush1.msra.mxu0 0.0
          %3554 = vmatprep.subr.mxu0 0.0
          %3555 = vmatpush1.msra.mxu0 0.0
          %3556 = vmatprep.subr.mxu0 0.0
          %3557 = vmatpush1.msra.mxu0 0.0
          %3558 = vmatprep.subr.mxu0 0.0
          %3559 = vmatpush1.msra.mxu0 0.0
          %3560 = vmatprep.subr.mxu0 0.0
          %3561 = vmatpush1.msra.mxu0 0.0
          %3562 = vmatprep.subr.mxu0 0.0
          %3563 = vmatpush1.msra.mxu0 0.0
          %3564 = vmatprep.subr.mxu0 0.0
          %3565 = vmatpush1.msra.mxu0 0.0
          %3566 = vmatprep.subr.mxu0 0.0
          %3567 = vmatpush1.msra.mxu0 0.0
          %3568 = vmatprep.subr.mxu0 0.0
          %3569 = vmatpush1.msra.mxu0 0.0
          %3570 = vmatprep.subr.mxu0 0.0
          %3571 = vmatpush1.msra.mxu0 0.0
          %3572 = vmatprep.subr.mxu0 0.0
          %3573 = vmatpush1.msra.mxu0 0.0
          %3574 = vmatprep.subr.mxu0 0.0
          %3575 = vmatpush1.msra.mxu0 0.0
          %3576 = vmatprep.subr.mxu0 0.0
          %3577 = vmatpush1.msra.mxu0 0.0
          %3578 = vmatprep.subr.mxu0 0.0
          %3579 = vmatpush1.msra.mxu0 0.0
          %3580 = vmatprep.mubr.f32.mxu0 0.0
          %3581 = vmatmul.mubr.f32.gmra.mrb[0].mxu0 %v3514
          %v3582 = vpop.f32.mrb[0].mxu0
          %v3583 = vadd.f32 0.0, %v3582
          %v3584 = vpop.f32.mrb[0].mxu0
          %3585 = vdwg.mxu0
          %v3586 = vadd.f32 %v3506, %v3583
          %3587 = vst [vmem:[#allocation10] sm:$0xff] %v3586
          %v3588 = vld [vmem:[#allocation10] sm:$0xff]
          %v3589 = vld [vmem:[%s588] sm:$0xff]
          %3591 = vset.pattern.permute.xlu0 0
          %3592 = vperm.xlu0 %3591, %v3589
          %v3593 = vpop.permute.xlu0 %3592
          %v3595 = vsub.f32 %v3588, %v3593
          %v3596 = vld [vmem:[%s584] sm:$0xff]
          %v3597 = vadd.f32 %v3596, 1e-10
          %3599 = vset.pattern.permute.xlu0 0
          %3600 = vperm.xlu0 %3599, %v3597
          %v3601 = vpop.permute.xlu0 %3600
          %v3603 = vrcp.pop %v3601
          %v3604 = vmul.f32 %v3595, %v3603
          %v3605 = vld [vmem:[#allocation5] sm:$0xff]
          %3607 = vset.pattern.permute.xlu0 0
          %3608 = vperm.xlu0 %3607, %v3605
          %v3609 = vpop.permute.xlu0 %3608
          %v3611 = vmul.f32 %v3604, %v3609
          %v3612 = vld [vmem:[#allocation4] sm:$0xff]
          %3614 = vset.pattern.permute.xlu0 0
          %3615 = vperm.xlu0 %3614, %v3612
          %v3616 = vpop.permute.xlu0 %3615
          %v3618 = vadd.f32 %v3611, %v3616
          %3619 = vst [vmem:[#allocation10] sm:$0xff] %v3618
        $region84: #{tpu_custom_call.1} parent=71 // pred_fallthru
          _
        // Predicated region
        $region85: #{tpu_custom_call.1} parent=71 // pred_check
          %p3620 = pneg %p381
        $region86: #{tpu_custom_call.1} parent=71 // pred_check_branch
          %3622 = sbr.rel (%p3620) target = $region88
        $region87: #{tpu_custom_call.1} parent=71 // pred_region
          %s3624 = ssub.s32 128, 128
          %3625 = vsyncadd [#allocation9], %s3624
          %s3626 = smul.addr %s32, 128
          %s3627 = scalar_lea.hbm %s13, %s3626
          %s3629 = sshll.u32 [#allocation10], 4
          %s3630 = int_to_ptr.vmem [resolvable:$true] %s3629
          %3632 = dma.vmem_to_hbm [thread:$0]  %s3630, 128, %s3627, [#allocation9]
        $region88: #{tpu_custom_call.1} parent=71 // pred_fallthru
          _
        // Predicated region
        $region89: #{tpu_custom_call.1} parent=71 // pred_check
          %p3633 = pneg %p381
        $region90: #{tpu_custom_call.1} parent=71 // pred_check_branch
          %3635 = sbr.rel (%p3633) target = $region92
        $region91: #{tpu_custom_call.1} parent=71 // pred_region
          %3636 = dma.done [#allocation9], 128
        $region92: #{tpu_custom_call.1} parent=71 // pred_fallthru
          _
      $region72: #{tpu_custom_call.1} parent=5 // pred_fallthru
        _
      %p3637 = scmp.le.s32.totalorder 2, %s23
      // Predicated region
      $region93: #{tpu_custom_call.1} parent=5 // pred_check
        %p3638 = pneg %p3637
      $region94: #{tpu_custom_call.1} parent=5 // pred_check_branch
        %3640 = sbr.rel (%p3638) target = $region96
      $region95: #{tpu_custom_call.1} parent=5 // pred_region
        %s3641 = ssub.s32 %s23, 2
      $region96: #{tpu_custom_call.1} parent=5 // pred_fallthru
        _
    $region6: #{tpu_custom_call.1} parent=1 // loop_footer
      %s27 = sadd.s32 1, %s23
    $region7: #{tpu_custom_call.1} parent=1 // loop_footer_branch
      %22 = sbr.rel target = $region3
    $region8: #{tpu_custom_call.1} parent=1 // loop_exit
      _
    %3642 = vsyncpa [#allocation8], 1
    %s3643 = scalar_lea.sflag [#allocation8], 1
    %3644 = vsyncpa %s3643, 1
    %3645 = vsyncpa [#allocation9], 1
    %s3646 = scalar_lea.sflag [#allocation9], 1
    %3647 = vsyncpa %s3646, 1

</llo_original>
